<compile_context>
chip_gen: v6e
topology: v6e:2x2x1
jax: 0.10.0
libtpu: 0.0.40
codegen_flags: <defaults>
</compile_context>

<pallas_src>
import functools

import jax
import jax.numpy as jnp
from jax.experimental import pallas as pl
from jax.experimental.pallas import tpu as pltpu

# Small shapes consistent with the module (defaults d_model=512, d_ff=2048,
# n_heads=8, n_layers=6 — shrunk for a quick synthetic run).
D_MODEL = 128
N_HEADS = 8
D_K = D_MODEL // N_HEADS          # MultiHeadAttention sets d_k = d_v = d_model // 8
D_V = D_K
D_FF = 256
SEQ_LEN = 16
BATCH = 2
N_LAYERS = 2
LN_EPS = 1e-5                     # nn.LayerNorm default


def _layer_norm(x, gamma, beta, eps=LN_EPS):
    mu = jnp.mean(x, axis=-1, keepdims=True)
    var = jnp.mean((x - mu) ** 2, axis=-1, keepdims=True)
    return (x - mu) * jax.lax.rsqrt(var + eps) * gamma + beta


def _encoder_layer_kernel(x_ref, wq_ref, wk_ref, wv_ref, wo_ref,
                          g1_ref, b1_ref, w1_ref, bff1_ref,
                          w2_ref, bff2_ref, g2_ref, b2_ref,
                          out_ref, attn_ref, *, inv_temperature):
    # One grid step == one batch row.  Full (S, D) tile in, full tile out.
    x = x_ref[0]                                                          # (S, D)

    # --- multi-head self-attention (heads share W_Q/W_K/W_V -> identical) ---
    q = jnp.dot(x, wq_ref[...], preferred_element_type=jnp.float32)      # (S, d_k)
    k = jnp.dot(x, wk_ref[...], preferred_element_type=jnp.float32)      # (S, d_k)
    v = jnp.dot(x, wv_ref[...], preferred_element_type=jnp.float32)      # (S, d_v)

    s = jnp.dot(q, k.T, preferred_element_type=jnp.float32) * inv_temperature  # (S, S)
    m = jnp.max(s, axis=-1, keepdims=True)
    p = jnp.exp(s - m)
    attn_w = p / jnp.sum(p, axis=-1, keepdims=True)                       # softmax
    # TODO(synk): nn.Dropout(0.1) on attn_w treated as inference-mode identity.
    head = jnp.dot(attn_w, v, preferred_element_type=jnp.float32)         # (S, d_v)

    # concat of 8 identical heads followed by W_O == single matmul against the
    # head-block-summed W_O^T (precomputed in the wrapper).
    attn_out = jnp.dot(head, wo_ref[...], preferred_element_type=jnp.float32)  # (S, D)

    # --- residual + LayerNorm 1 ---
    x = _layer_norm(x + attn_out, g1_ref[...], b1_ref[...])

    # --- position-wise feed forward + residual + LayerNorm 2 ---
    h = jnp.dot(x, w1_ref[...], preferred_element_type=jnp.float32) + bff1_ref[...]
    h = jnp.maximum(h, 0.0)
    ff = jnp.dot(h, w2_ref[...], preferred_element_type=jnp.float32) + bff2_ref[...]
    x = _layer_norm(x + ff, g2_ref[...], b2_ref[...])
    # TODO(synk): trailing nn.Dropout(0.1) in Encoder treated as identity (eval mode).

    out_ref[0] = x                                                        # dense store
    attn_ref[0] = attn_w


def encoder_layer(x, params, *, temperature):
    B, S, D = x.shape
    d_k = params["wq"].shape[1]
    d_ff = params["w1"].shape[1]

    kernel = functools.partial(_encoder_layer_kernel,
                               inv_temperature=1.0 / temperature)
    full = lambda b: (0, 0)          # weights: constant block index (broadcast)
    per_batch = lambda b: (b, 0, 0)  # activations: one batch row per grid step

    return pl.pallas_call(
        kernel,
        out_shape=(jax.ShapeDtypeStruct((B, S, D), jnp.float32),
                   jax.ShapeDtypeStruct((B, S, S), jnp.float32)),
        grid=(B,),
        in_specs=[
            pl.BlockSpec((1, S, D), per_batch),     # x
            pl.BlockSpec((D, d_k), full),           # W_Q^T
            pl.BlockSpec((D, d_k), full),           # W_K^T
            pl.BlockSpec((D, d_k), full),           # W_V^T
            pl.BlockSpec((d_k, D), full),           # W_O (head-summed, transposed)
            pl.BlockSpec((1, D), full),             # ln1 gamma
            pl.BlockSpec((1, D), full),             # ln1 beta
            pl.BlockSpec((D, d_ff), full),          # FFN w1^T
            pl.BlockSpec((1, d_ff), full),          # FFN b1
            pl.BlockSpec((d_ff, D), full),          # FFN w2^T
            pl.BlockSpec((1, D), full),             # FFN b2
            pl.BlockSpec((1, D), full),             # ln2 gamma
            pl.BlockSpec((1, D), full),             # ln2 beta
        ],
        out_specs=(pl.BlockSpec((1, S, D), per_batch),
                   pl.BlockSpec((1, S, S), per_batch)),
        compiler_params=pltpu.CompilerParams(
            dimension_semantics=("parallel",)),     # batch rows are independent
    )(x, params["wq"], params["wk"], params["wv"], params["wo"],
      params["g1"], params["b1"], params["w1"], params["bff1"],
      params["w2"], params["bff2"], params["g2"], params["b2"])


@functools.partial(jax.jit, static_argnames=("n_layers", "temperature"))
def encoder_forward(x, params, *, n_layers, temperature):
    # The PyTorch Encoder reuses the SAME sub-modules (weights) every layer.
    attn = None
    for _ in range(n_layers):
        x, attn = encoder_layer(x, params, temperature=temperature)
    return x, attn


# ------------------------- pure-JAX reference ---------------------------------
def _reference(x, p, n_layers, n_heads, temperature):
    attn = None
    for _ in range(n_layers):
        q = x @ p["wq"]
        k = x @ p["wk"]
        v = x @ p["wv"]
        s = jnp.einsum("bqd,bkd->bqk", q, k) / temperature
        attn = jax.nn.softmax(s, axis=-1)
        head = jnp.einsum("bqk,bkd->bqd", attn, v)
        cat = jnp.concatenate([head] * n_heads, axis=-1)   # 8 identical heads
        x = _layer_norm(x + cat @ p["wo_full"], p["g1"], p["b1"])
        h = jax.nn.relu(x @ p["w1"] + p["bff1"])
        x = _layer_norm(x + (h @ p["w2"] + p["bff2"]), p["g2"], p["b2"])
    return x, attn


if __name__ == "__main__":
    key = jax.random.PRNGKey(0)
    ks = jax.random.split(key, 12)
    sc = 0.05

    wq = sc * jax.random.normal(ks[0], (D_MODEL, D_K), jnp.float32)
    wk = sc * jax.random.normal(ks[1], (D_MODEL, D_K), jnp.float32)
    wv = sc * jax.random.normal(ks[2], (D_MODEL, D_V), jnp.float32)
    wo_full = sc * jax.random.normal(ks[3], (N_HEADS * D_V, D_MODEL), jnp.float32)
    w1 = sc * jax.random.normal(ks[4], (D_MODEL, D_FF), jnp.float32)
    bff1 = sc * jax.random.normal(ks[5], (1, D_FF), jnp.float32)
    w2 = sc * jax.random.normal(ks[6], (D_FF, D_MODEL), jnp.float32)
    bff2 = sc * jax.random.normal(ks[7], (1, D_MODEL), jnp.float32)
    g1 = 1.0 + 0.1 * jax.random.normal(ks[8], (1, D_MODEL), jnp.float32)
    b1 = 0.1 * jax.random.normal(ks[9], (1, D_MODEL), jnp.float32)
    g2 = 1.0 + 0.1 * jax.random.normal(ks[10], (1, D_MODEL), jnp.float32)
    b2 = 0.1 * jax.random.normal(ks[11], (1, D_MODEL), jnp.float32)

    # Fold the concat-of-identical-heads + W_O into one (d_v, d_model) matmul.
    wo_eff = wo_full.reshape(N_HEADS, D_V, D_MODEL).sum(axis=0)

    params = dict(wq=wq, wk=wk, wv=wv, wo=wo_eff, g1=g1, b1=b1,
                  w1=w1, bff1=bff1, w2=w2, bff2=bff2, g2=g2, b2=b2)
    ref_params = dict(wq=wq, wk=wk, wv=wv, wo_full=wo_full, g1=g1, b1=b1,
                      w1=w1, bff1=bff1, w2=w2, bff2=bff2, g2=g2, b2=b2)

    x = jax.random.normal(jax.random.PRNGKey(42), (BATCH, SEQ_LEN, D_MODEL),
                          jnp.float32)
    temperature = float(D_K) ** 0.5   # ScaledDotProductAttention temperature

    out, attn = encoder_forward(x, params, n_layers=N_LAYERS,
                                temperature=temperature)
    out = jax.block_until_ready(out)
    attn = jax.block_until_ready(attn)

    ref_out, ref_attn = _reference(x, ref_params, N_LAYERS, N_HEADS, temperature)

    assert out.shape == (BATCH, SEQ_LEN, D_MODEL)
    assert attn.shape == (BATCH, SEQ_LEN, SEQ_LEN)
    assert jnp.allclose(out, ref_out, atol=2e-3, rtol=2e-3), "encoder output mismatch"
    assert jnp.allclose(attn, ref_attn, atol=2e-3, rtol=2e-3), "attention weights mismatch"

    print("KERNEL_OK")
</pallas_src>

<mosaic_0001>
module attributes {stable_mosaic.version = 11 : i64} {
  func.func @_encoder_layer_kernel(%arg0: i32, %arg1: memref<1x16x128xf32, #tpu.memory_space<vmem>>, %arg2: memref<128x16xf32, #tpu.memory_space<vmem>>, %arg3: memref<128x16xf32, #tpu.memory_space<vmem>>, %arg4: memref<128x16xf32, #tpu.memory_space<vmem>>, %arg5: memref<16x128xf32, #tpu.memory_space<vmem>>, %arg6: memref<1x128xf32, #tpu.memory_space<vmem>>, %arg7: memref<1x128xf32, #tpu.memory_space<vmem>>, %arg8: memref<128x256xf32, #tpu.memory_space<vmem>>, %arg9: memref<1x256xf32, #tpu.memory_space<vmem>>, %arg10: memref<256x128xf32, #tpu.memory_space<vmem>>, %arg11: memref<1x128xf32, #tpu.memory_space<vmem>>, %arg12: memref<1x128xf32, #tpu.memory_space<vmem>>, %arg13: memref<1x128xf32, #tpu.memory_space<vmem>>, %arg14: memref<1x16x128xf32, #tpu.memory_space<vmem>>, %arg15: memref<1x16x16xf32, #tpu.memory_space<vmem>>) attributes {dimension_semantics = [#tpu.dimension_semantics<parallel>], iteration_bounds = array<i64: 2>, scalar_prefetch = 0 : i64, scratch_operands = 0 : i64, tpu.core_type = #tpu.core_type<tc>, window_params = [{transform_indices = @transform_0, window_bounds = array<i64: 1, 16, 128>}, {pipeline_mode = #tpu.pipeline_mode<synchronous>, transform_indices = @transform_1, window_bounds = array<i64: 128, 16>}, {pipeline_mode = #tpu.pipeline_mode<synchronous>, transform_indices = @transform_2, window_bounds = array<i64: 128, 16>}, {pipeline_mode = #tpu.pipeline_mode<synchronous>, transform_indices = @transform_3, window_bounds = array<i64: 128, 16>}, {pipeline_mode = #tpu.pipeline_mode<synchronous>, transform_indices = @transform_4, window_bounds = array<i64: 16, 128>}, {pipeline_mode = #tpu.pipeline_mode<synchronous>, transform_indices = @transform_5, window_bounds = array<i64: 1, 128>}, {pipeline_mode = #tpu.pipeline_mode<synchronous>, transform_indices = @transform_6, window_bounds = array<i64: 1, 128>}, {pipeline_mode = #tpu.pipeline_mode<synchronous>, transform_indices = @transform_7, window_bounds = array<i64: 128, 256>}, {pipeline_mode = #tpu.pipeline_mode<synchronous>, transform_indices = @transform_8, window_bounds = array<i64: 1, 256>}, {pipeline_mode = #tpu.pipeline_mode<synchronous>, transform_indices = @transform_9, window_bounds = array<i64: 256, 128>}, {pipeline_mode = #tpu.pipeline_mode<synchronous>, transform_indices = @transform_10, window_bounds = array<i64: 1, 128>}, {pipeline_mode = #tpu.pipeline_mode<synchronous>, transform_indices = @transform_11, window_bounds = array<i64: 1, 128>}, {pipeline_mode = #tpu.pipeline_mode<synchronous>, transform_indices = @transform_12, window_bounds = array<i64: 1, 128>}, {transform_indices = @transform_13, window_bounds = array<i64: 1, 16, 128>}, {transform_indices = @transform_14, window_bounds = array<i64: 1, 16, 16>}]} {
    %c0 = arith.constant 0 : index
    %c0_0 = arith.constant 0 : index
    %c0_1 = arith.constant 0 : index
    %0 = vector.load %arg1[%c0, %c0_0, %c0_1] : memref<1x16x128xf32, #tpu.memory_space<vmem>>, vector<1x16x128xf32>
    %1 = vector.shape_cast %0 : vector<1x16x128xf32> to vector<16x128xf32>
    %c0_2 = arith.constant 0 : index
    %c0_3 = arith.constant 0 : index
    %2 = vector.load %arg2[%c0_2, %c0_3] : memref<128x16xf32, #tpu.memory_space<vmem>>, vector<128x16xf32>
    %cst = arith.constant dense<0.000000e+00> : vector<16x16xf32>
    %3 = tpu.matmul %1, %2, %cst {dimension_numbers = #tpu.dot_dimension_numbers<[1], [0], [0], [1], [0, 0, 1, 1], [], []>} : vector<16x128xf32>, vector<128x16xf32>, vector<16x16xf32> -> vector<16x16xf32>
    %c0_4 = arith.constant 0 : index
    %c0_5 = arith.constant 0 : index
    %4 = vector.load %arg3[%c0_4, %c0_5] : memref<128x16xf32, #tpu.memory_space<vmem>>, vector<128x16xf32>
    %cst_6 = arith.constant dense<0.000000e+00> : vector<16x16xf32>
    %5 = tpu.matmul %1, %4, %cst_6 {dimension_numbers = #tpu.dot_dimension_numbers<[1], [0], [0], [1], [0, 0, 1, 1], [], []>} : vector<16x128xf32>, vector<128x16xf32>, vector<16x16xf32> -> vector<16x16xf32>
    %c0_7 = arith.constant 0 : index
    %c0_8 = arith.constant 0 : index
    %6 = vector.load %arg4[%c0_7, %c0_8] : memref<128x16xf32, #tpu.memory_space<vmem>>, vector<128x16xf32>
    %cst_9 = arith.constant dense<0.000000e+00> : vector<16x16xf32>
    %7 = tpu.matmul %1, %6, %cst_9 {dimension_numbers = #tpu.dot_dimension_numbers<[1], [0], [0], [1], [0, 0, 1, 1], [], []>} : vector<16x128xf32>, vector<128x16xf32>, vector<16x16xf32> -> vector<16x16xf32>
    %8 = tpu.transpose %5, [1, 0] : vector<16x16xf32> -> vector<16x16xf32>
    %cst_10 = arith.constant dense<0.000000e+00> : vector<16x16xf32>
    %9 = tpu.matmul %3, %8, %cst_10 {dimension_numbers = #tpu.dot_dimension_numbers<[1], [0], [0], [1], [0, 0, 1, 1], [], []>} : vector<16x16xf32>, vector<16x16xf32>, vector<16x16xf32> -> vector<16x16xf32>
    %cst_11 = arith.constant 2.500000e-01 : f32
    %10 = vector.broadcast %cst_11 : f32 to vector<16x16xf32>
    %11 = arith.mulf %9, %10 : vector<16x16xf32>
    %cst_12 = arith.constant dense<0xFF800000> : vector<16xf32>
    %12 = vector.multi_reduction <maximumf>, %11, %cst_12 [1] : vector<16x16xf32> to vector<16xf32>
    %13 = vector.shape_cast %12 : vector<16xf32> to vector<16x1xf32>
    %14 = vector.broadcast %13 : vector<16x1xf32> to vector<16x16xf32>
    %15 = arith.subf %11, %14 : vector<16x16xf32>
    %16 = math.exp %15 : vector<16x16xf32>
    %cst_13 = arith.constant dense<0.000000e+00> : vector<16xf32>
    %17 = vector.multi_reduction <add>, %16, %cst_13 [1] : vector<16x16xf32> to vector<16xf32>
    %18 = vector.shape_cast %17 : vector<16xf32> to vector<16x1xf32>
    %19 = vector.broadcast %18 : vector<16x1xf32> to vector<16x16xf32>
    %20 = arith.divf %16, %19 : vector<16x16xf32>
    %cst_14 = arith.constant dense<0.000000e+00> : vector<16x16xf32>
    %21 = tpu.matmul %20, %7, %cst_14 {dimension_numbers = #tpu.dot_dimension_numbers<[1], [0], [0], [1], [0, 0, 1, 1], [], []>} : vector<16x16xf32>, vector<16x16xf32>, vector<16x16xf32> -> vector<16x16xf32>
    %c0_15 = arith.constant 0 : index
    %c0_16 = arith.constant 0 : index
    %22 = vector.load %arg5[%c0_15, %c0_16] : memref<16x128xf32, #tpu.memory_space<vmem>>, vector<16x128xf32>
    %cst_17 = arith.constant dense<0.000000e+00> : vector<16x128xf32>
    %23 = tpu.matmul %21, %22, %cst_17 {dimension_numbers = #tpu.dot_dimension_numbers<[1], [0], [0], [1], [0, 0, 1, 1], [], []>} : vector<16x16xf32>, vector<16x128xf32>, vector<16x128xf32> -> vector<16x128xf32>
    %24 = arith.addf %1, %23 : vector<16x128xf32>
    %c0_18 = arith.constant 0 : index
    %c0_19 = arith.constant 0 : index
    %25 = vector.load %arg6[%c0_18, %c0_19] : memref<1x128xf32, #tpu.memory_space<vmem>>, vector<1x128xf32>
    %c0_20 = arith.constant 0 : index
    %c0_21 = arith.constant 0 : index
    %26 = vector.load %arg7[%c0_20, %c0_21] : memref<1x128xf32, #tpu.memory_space<vmem>>, vector<1x128xf32>
    %cst_22 = arith.constant dense<0.000000e+00> : vector<16xf32>
    %27 = vector.multi_reduction <add>, %24, %cst_22 [1] : vector<16x128xf32> to vector<16xf32>
    %28 = vector.shape_cast %27 : vector<16xf32> to vector<16x1xf32>
    %cst_23 = arith.constant 1.280000e+02 : f32
    %29 = vector.broadcast %cst_23 : f32 to vector<16x1xf32>
    %30 = arith.divf %28, %29 : vector<16x1xf32>
    %31 = vector.broadcast %30 : vector<16x1xf32> to vector<16x128xf32>
    %32 = arith.subf %24, %31 : vector<16x128xf32>
    %33 = arith.mulf %32, %32 : vector<16x128xf32>
    %cst_24 = arith.constant dense<0.000000e+00> : vector<16xf32>
    %34 = vector.multi_reduction <add>, %33, %cst_24 [1] : vector<16x128xf32> to vector<16xf32>
    %35 = vector.shape_cast %34 : vector<16xf32> to vector<16x1xf32>
    %cst_25 = arith.constant 1.280000e+02 : f32
    %36 = vector.broadcast %cst_25 : f32 to vector<16x1xf32>
    %37 = arith.divf %35, %36 : vector<16x1xf32>
    %38 = vector.broadcast %30 : vector<16x1xf32> to vector<16x128xf32>
    %39 = arith.subf %24, %38 : vector<16x128xf32>
    %cst_26 = arith.constant 9.99999974E-6 : f32
    %40 = vector.broadcast %cst_26 : f32 to vector<16x1xf32>
    %41 = arith.addf %37, %40 : vector<16x1xf32>
    %42 = math.rsqrt %41 : vector<16x1xf32>
    %43 = vector.broadcast %42 : vector<16x1xf32> to vector<16x128xf32>
    %44 = arith.mulf %39, %43 : vector<16x128xf32>
    %45 = vector.broadcast %25 : vector<1x128xf32> to vector<16x128xf32>
    %46 = arith.mulf %44, %45 : vector<16x128xf32>
    %47 = vector.broadcast %26 : vector<1x128xf32> to vector<16x128xf32>
    %48 = arith.addf %46, %47 : vector<16x128xf32>
    %c0_27 = arith.constant 0 : index
    %c0_28 = arith.constant 0 : index
    %49 = vector.load %arg8[%c0_27, %c0_28] : memref<128x256xf32, #tpu.memory_space<vmem>>, vector<128x256xf32>
    %cst_29 = arith.constant dense<0.000000e+00> : vector<16x256xf32>
    %50 = tpu.matmul %48, %49, %cst_29 {dimension_numbers = #tpu.dot_dimension_numbers<[1], [0], [0], [1], [0, 0, 1, 1], [], []>} : vector<16x128xf32>, vector<128x256xf32>, vector<16x256xf32> -> vector<16x256xf32>
    %c0_30 = arith.constant 0 : index
    %c0_31 = arith.constant 0 : index
    %51 = vector.load %arg9[%c0_30, %c0_31] : memref<1x256xf32, #tpu.memory_space<vmem>>, vector<1x256xf32>
    %52 = vector.broadcast %51 : vector<1x256xf32> to vector<16x256xf32>
    %53 = arith.addf %50, %52 : vector<16x256xf32>
    %cst_32 = arith.constant 0.000000e+00 : f32
    %54 = vector.broadcast %cst_32 : f32 to vector<16x256xf32>
    %55 = arith.maximumf %53, %54 : vector<16x256xf32>
    %c0_33 = arith.constant 0 : index
    %c0_34 = arith.constant 0 : index
    %56 = vector.load %arg10[%c0_33, %c0_34] : memref<256x128xf32, #tpu.memory_space<vmem>>, vector<256x128xf32>
    %cst_35 = arith.constant dense<0.000000e+00> : vector<16x128xf32>
    %57 = tpu.matmul %55, %56, %cst_35 {dimension_numbers = #tpu.dot_dimension_numbers<[1], [0], [0], [1], [0, 0, 1, 1], [], []>} : vector<16x256xf32>, vector<256x128xf32>, vector<16x128xf32> -> vector<16x128xf32>
    %c0_36 = arith.constant 0 : index
    %c0_37 = arith.constant 0 : index
    %58 = vector.load %arg11[%c0_36, %c0_37] : memref<1x128xf32, #tpu.memory_space<vmem>>, vector<1x128xf32>
    %59 = vector.broadcast %58 : vector<1x128xf32> to vector<16x128xf32>
    %60 = arith.addf %57, %59 : vector<16x128xf32>
    %61 = arith.addf %48, %60 : vector<16x128xf32>
    %c0_38 = arith.constant 0 : index
    %c0_39 = arith.constant 0 : index
    %62 = vector.load %arg12[%c0_38, %c0_39] : memref<1x128xf32, #tpu.memory_space<vmem>>, vector<1x128xf32>
    %c0_40 = arith.constant 0 : index
    %c0_41 = arith.constant 0 : index
    %63 = vector.load %arg13[%c0_40, %c0_41] : memref<1x128xf32, #tpu.memory_space<vmem>>, vector<1x128xf32>
    %cst_42 = arith.constant dense<0.000000e+00> : vector<16xf32>
    %64 = vector.multi_reduction <add>, %61, %cst_42 [1] : vector<16x128xf32> to vector<16xf32>
    %65 = vector.shape_cast %64 : vector<16xf32> to vector<16x1xf32>
    %cst_43 = arith.constant 1.280000e+02 : f32
    %66 = vector.broadcast %cst_43 : f32 to vector<16x1xf32>
    %67 = arith.divf %65, %66 : vector<16x1xf32>
    %68 = vector.broadcast %67 : vector<16x1xf32> to vector<16x128xf32>
    %69 = arith.subf %61, %68 : vector<16x128xf32>
    %70 = arith.mulf %69, %69 : vector<16x128xf32>
    %cst_44 = arith.constant dense<0.000000e+00> : vector<16xf32>
    %71 = vector.multi_reduction <add>, %70, %cst_44 [1] : vector<16x128xf32> to vector<16xf32>
    %72 = vector.shape_cast %71 : vector<16xf32> to vector<16x1xf32>
    %cst_45 = arith.constant 1.280000e+02 : f32
    %73 = vector.broadcast %cst_45 : f32 to vector<16x1xf32>
    %74 = arith.divf %72, %73 : vector<16x1xf32>
    %75 = vector.broadcast %67 : vector<16x1xf32> to vector<16x128xf32>
    %76 = arith.subf %61, %75 : vector<16x128xf32>
    %cst_46 = arith.constant 9.99999974E-6 : f32
    %77 = vector.broadcast %cst_46 : f32 to vector<16x1xf32>
    %78 = arith.addf %74, %77 : vector<16x1xf32>
    %79 = math.rsqrt %78 : vector<16x1xf32>
    %80 = vector.broadcast %79 : vector<16x1xf32> to vector<16x128xf32>
    %81 = arith.mulf %76, %80 : vector<16x128xf32>
    %82 = vector.broadcast %62 : vector<1x128xf32> to vector<16x128xf32>
    %83 = arith.mulf %81, %82 : vector<16x128xf32>
    %84 = vector.broadcast %63 : vector<1x128xf32> to vector<16x128xf32>
    %85 = arith.addf %83, %84 : vector<16x128xf32>
    %c0_47 = arith.constant 0 : index
    %c0_48 = arith.constant 0 : index
    %c0_49 = arith.constant 0 : index
    %86 = vector.load %arg14[%c0_47, %c0_48, %c0_49] : memref<1x16x128xf32, #tpu.memory_space<vmem>>, vector<1x16x128xf32>
    %87 = vector.shape_cast %86 : vector<1x16x128xf32> to vector<16x128xf32>
    %88 = vector.shape_cast %85 : vector<16x128xf32> to vector<1x16x128xf32>
    tpu.vector_store %arg14[%c0_47, %c0_48, %c0_49], %88 {strides = array<i32>} : memref<1x16x128xf32, #tpu.memory_space<vmem>>, vector<1x16x128xf32>,
    %c0_50 = arith.constant 0 : index
    %c0_51 = arith.constant 0 : index
    %c0_52 = arith.constant 0 : index
    %89 = vector.load %arg15[%c0_50, %c0_51, %c0_52] : memref<1x16x16xf32, #tpu.memory_space<vmem>>, vector<1x16x16xf32>
    %90 = vector.shape_cast %89 : vector<1x16x16xf32> to vector<16x16xf32>
    %91 = vector.shape_cast %20 : vector<16x16xf32> to vector<1x16x16xf32>
    tpu.vector_store %arg15[%c0_50, %c0_51, %c0_52], %91 {strides = array<i32>} : memref<1x16x16xf32, #tpu.memory_space<vmem>>, vector<1x16x16xf32>,
    return
  }
  func.func @transform_0(%arg0: i32) -> (i32, i32, i32) {
    %c0_i32 = arith.constant 0 : i32
    %c0_i32_0 = arith.constant 0 : i32
    %c0_i32_1 = arith.constant 0 : i32
    return %arg0, %c0_i32, %c0_i32_0 : i32, i32, i32
  }
  func.func @transform_1(%arg0: i32) -> (i32, i32) {
    %c0_i32 = arith.constant 0 : i32
    %c0_i32_0 = arith.constant 0 : i32
    %c0_i32_1 = arith.constant 0 : i32
    return %c0_i32, %c0_i32_0 : i32, i32
  }
  func.func @transform_2(%arg0: i32) -> (i32, i32) {
    %c0_i32 = arith.constant 0 : i32
    %c0_i32_0 = arith.constant 0 : i32
    %c0_i32_1 = arith.constant 0 : i32
    return %c0_i32, %c0_i32_0 : i32, i32
  }
  func.func @transform_3(%arg0: i32) -> (i32, i32) {
    %c0_i32 = arith.constant 0 : i32
    %c0_i32_0 = arith.constant 0 : i32
    %c0_i32_1 = arith.constant 0 : i32
    return %c0_i32, %c0_i32_0 : i32, i32
  }
  func.func @transform_4(%arg0: i32) -> (i32, i32) {
    %c0_i32 = arith.constant 0 : i32
    %c0_i32_0 = arith.constant 0 : i32
    %c0_i32_1 = arith.constant 0 : i32
    return %c0_i32, %c0_i32_0 : i32, i32
  }
  func.func @transform_5(%arg0: i32) -> (i32, i32) {
    %c0_i32 = arith.constant 0 : i32
    %c0_i32_0 = arith.constant 0 : i32
    %c0_i32_1 = arith.constant 0 : i32
    return %c0_i32, %c0_i32_0 : i32, i32
  }
  func.func @transform_6(%arg0: i32) -> (i32, i32) {
    %c0_i32 = arith.constant 0 : i32
    %c0_i32_0 = arith.constant 0 : i32
    %c0_i32_1 = arith.constant 0 : i32
    return %c0_i32, %c0_i32_0 : i32, i32
  }
  func.func @transform_7(%arg0: i32) -> (i32, i32) {
    %c0_i32 = arith.constant 0 : i32
    %c0_i32_0 = arith.constant 0 : i32
    %c0_i32_1 = arith.constant 0 : i32
    return %c0_i32, %c0_i32_0 : i32, i32
  }
  func.func @transform_8(%arg0: i32) -> (i32, i32) {
    %c0_i32 = arith.constant 0 : i32
    %c0_i32_0 = arith.constant 0 : i32
    %c0_i32_1 = arith.constant 0 : i32
    return %c0_i32, %c0_i32_0 : i32, i32
  }
  func.func @transform_9(%arg0: i32) -> (i32, i32) {
    %c0_i32 = arith.constant 0 : i32
    %c0_i32_0 = arith.constant 0 : i32
    %c0_i32_1 = arith.constant 0 : i32
    return %c0_i32, %c0_i32_0 : i32, i32
  }
  func.func @transform_10(%arg0: i32) -> (i32, i32) {
    %c0_i32 = arith.constant 0 : i32
    %c0_i32_0 = arith.constant 0 : i32
    %c0_i32_1 = arith.constant 0 : i32
    return %c0_i32, %c0_i32_0 : i32, i32
  }
  func.func @transform_11(%arg0: i32) -> (i32, i32) {
    %c0_i32 = arith.constant 0 : i32
    %c0_i32_0 = arith.constant 0 : i32
    %c0_i32_1 = arith.constant 0 : i32
    return %c0_i32, %c0_i32_0 : i32, i32
  }
  func.func @transform_12(%arg0: i32) -> (i32, i32) {
    %c0_i32 = arith.constant 0 : i32
    %c0_i32_0 = arith.constant 0 : i32
    %c0_i32_1 = arith.constant 0 : i32
    return %c0_i32, %c0_i32_0 : i32, i32
  }
  func.func @transform_13(%arg0: i32) -> (i32, i32, i32) {
    %c0_i32 = arith.constant 0 : i32
    %c0_i32_0 = arith.constant 0 : i32
    %c0_i32_1 = arith.constant 0 : i32
    return %arg0, %c0_i32, %c0_i32_0 : i32, i32, i32
  }
  func.func @transform_14(%arg0: i32) -> (i32, i32, i32) {
    %c0_i32 = arith.constant 0 : i32
    %c0_i32_0 = arith.constant 0 : i32
    %c0_i32_1 = arith.constant 0 : i32
    return %arg0, %c0_i32, %c0_i32_0 : i32, i32, i32
  }
}

module attributes {stable_mosaic.version = 11 : i64} {
  func.func @_encoder_layer_kernel(%arg0: i32, %arg1: memref<1x16x128xf32, #tpu.memory_space<vmem>>, %arg2: memref<128x16xf32, #tpu.memory_space<vmem>>, %arg3: memref<128x16xf32, #tpu.memory_space<vmem>>, %arg4: memref<128x16xf32, #tpu.memory_space<vmem>>, %arg5: memref<16x128xf32, #tpu.memory_space<vmem>>, %arg6: memref<1x128xf32, #tpu.memory_space<vmem>>, %arg7: memref<1x128xf32, #tpu.memory_space<vmem>>, %arg8: memref<128x256xf32, #tpu.memory_space<vmem>>, %arg9: memref<1x256xf32, #tpu.memory_space<vmem>>, %arg10: memref<256x128xf32, #tpu.memory_space<vmem>>, %arg11: memref<1x128xf32, #tpu.memory_space<vmem>>, %arg12: memref<1x128xf32, #tpu.memory_space<vmem>>, %arg13: memref<1x128xf32, #tpu.memory_space<vmem>>, %arg14: memref<1x16x128xf32, #tpu.memory_space<vmem>>, %arg15: memref<1x16x16xf32, #tpu.memory_space<vmem>>) attributes {dimension_semantics = [#tpu.dimension_semantics<parallel>], iteration_bounds = array<i64: 2>, scalar_prefetch = 0 : i64, scratch_operands = 0 : i64, tpu.core_type = #tpu.core_type<tc>, window_params = [{transform_indices = @transform_0, window_bounds = array<i64: 1, 16, 128>}, {pipeline_mode = #tpu.pipeline_mode<synchronous>, transform_indices = @transform_1, window_bounds = array<i64: 128, 16>}, {pipeline_mode = #tpu.pipeline_mode<synchronous>, transform_indices = @transform_2, window_bounds = array<i64: 128, 16>}, {pipeline_mode = #tpu.pipeline_mode<synchronous>, transform_indices = @transform_3, window_bounds = array<i64: 128, 16>}, {pipeline_mode = #tpu.pipeline_mode<synchronous>, transform_indices = @transform_4, window_bounds = array<i64: 16, 128>}, {pipeline_mode = #tpu.pipeline_mode<synchronous>, transform_indices = @transform_5, window_bounds = array<i64: 1, 128>}, {pipeline_mode = #tpu.pipeline_mode<synchronous>, transform_indices = @transform_6, window_bounds = array<i64: 1, 128>}, {pipeline_mode = #tpu.pipeline_mode<synchronous>, transform_indices = @transform_7, window_bounds = array<i64: 128, 256>}, {pipeline_mode = #tpu.pipeline_mode<synchronous>, transform_indices = @transform_8, window_bounds = array<i64: 1, 256>}, {pipeline_mode = #tpu.pipeline_mode<synchronous>, transform_indices = @transform_9, window_bounds = array<i64: 256, 128>}, {pipeline_mode = #tpu.pipeline_mode<synchronous>, transform_indices = @transform_10, window_bounds = array<i64: 1, 128>}, {pipeline_mode = #tpu.pipeline_mode<synchronous>, transform_indices = @transform_11, window_bounds = array<i64: 1, 128>}, {pipeline_mode = #tpu.pipeline_mode<synchronous>, transform_indices = @transform_12, window_bounds = array<i64: 1, 128>}, {transform_indices = @transform_13, window_bounds = array<i64: 1, 16, 128>}, {transform_indices = @transform_14, window_bounds = array<i64: 1, 16, 16>}]} {
    %c0 = arith.constant 0 : index
    %c0_0 = arith.constant 0 : index
    %c0_1 = arith.constant 0 : index
    %0 = vector.load %arg1[%c0, %c0_0, %c0_1] : memref<1x16x128xf32, #tpu.memory_space<vmem>>, vector<1x16x128xf32>
    %1 = vector.shape_cast %0 : vector<1x16x128xf32> to vector<16x128xf32>
    %c0_2 = arith.constant 0 : index
    %c0_3 = arith.constant 0 : index
    %2 = vector.load %arg2[%c0_2, %c0_3] : memref<128x16xf32, #tpu.memory_space<vmem>>, vector<128x16xf32>
    %cst = arith.constant dense<0.000000e+00> : vector<16x16xf32>
    %3 = tpu.matmul %1, %2, %cst {dimension_numbers = #tpu.dot_dimension_numbers<[1], [0], [0], [1], [0, 0, 1, 1], [], []>} : vector<16x128xf32>, vector<128x16xf32>, vector<16x16xf32> -> vector<16x16xf32>
    %c0_4 = arith.constant 0 : index
    %c0_5 = arith.constant 0 : index
    %4 = vector.load %arg3[%c0_4, %c0_5] : memref<128x16xf32, #tpu.memory_space<vmem>>, vector<128x16xf32>
    %cst_6 = arith.constant dense<0.000000e+00> : vector<16x16xf32>
    %5 = tpu.matmul %1, %4, %cst_6 {dimension_numbers = #tpu.dot_dimension_numbers<[1], [0], [0], [1], [0, 0, 1, 1], [], []>} : vector<16x128xf32>, vector<128x16xf32>, vector<16x16xf32> -> vector<16x16xf32>
    %c0_7 = arith.constant 0 : index
    %c0_8 = arith.constant 0 : index
    %6 = vector.load %arg4[%c0_7, %c0_8] : memref<128x16xf32, #tpu.memory_space<vmem>>, vector<128x16xf32>
    %cst_9 = arith.constant dense<0.000000e+00> : vector<16x16xf32>
    %7 = tpu.matmul %1, %6, %cst_9 {dimension_numbers = #tpu.dot_dimension_numbers<[1], [0], [0], [1], [0, 0, 1, 1], [], []>} : vector<16x128xf32>, vector<128x16xf32>, vector<16x16xf32> -> vector<16x16xf32>
    %8 = tpu.transpose %5, [1, 0] : vector<16x16xf32> -> vector<16x16xf32>
    %cst_10 = arith.constant dense<0.000000e+00> : vector<16x16xf32>
    %9 = tpu.matmul %3, %8, %cst_10 {dimension_numbers = #tpu.dot_dimension_numbers<[1], [0], [0], [1], [0, 0, 1, 1], [], []>} : vector<16x16xf32>, vector<16x16xf32>, vector<16x16xf32> -> vector<16x16xf32>
    %cst_11 = arith.constant 2.500000e-01 : f32
    %10 = vector.broadcast %cst_11 : f32 to vector<16x16xf32>
    %11 = arith.mulf %9, %10 : vector<16x16xf32>
    %cst_12 = arith.constant dense<0xFF800000> : vector<16xf32>
    %12 = vector.multi_reduction <maximumf>, %11, %cst_12 [1] : vector<16x16xf32> to vector<16xf32>
    %13 = vector.shape_cast %12 : vector<16xf32> to vector<16x1xf32>
    %14 = vector.broadcast %13 : vector<16x1xf32> to vector<16x16xf32>
    %15 = arith.subf %11, %14 : vector<16x16xf32>
    %16 = math.exp %15 : vector<16x16xf32>
    %cst_13 = arith.constant dense<0.000000e+00> : vector<16xf32>
    %17 = vector.multi_reduction <add>, %16, %cst_13 [1] : vector<16x16xf32> to vector<16xf32>
    %18 = vector.shape_cast %17 : vector<16xf32> to vector<16x1xf32>
    %19 = vector.broadcast %18 : vector<16x1xf32> to vector<16x16xf32>
    %20 = arith.divf %16, %19 : vector<16x16xf32>
    %cst_14 = arith.constant dense<0.000000e+00> : vector<16x16xf32>
    %21 = tpu.matmul %20, %7, %cst_14 {dimension_numbers = #tpu.dot_dimension_numbers<[1], [0], [0], [1], [0, 0, 1, 1], [], []>} : vector<16x16xf32>, vector<16x16xf32>, vector<16x16xf32> -> vector<16x16xf32>
    %c0_15 = arith.constant 0 : index
    %c0_16 = arith.constant 0 : index
    %22 = vector.load %arg5[%c0_15, %c0_16] : memref<16x128xf32, #tpu.memory_space<vmem>>, vector<16x128xf32>
    %cst_17 = arith.constant dense<0.000000e+00> : vector<16x128xf32>
    %23 = tpu.matmul %21, %22, %cst_17 {dimension_numbers = #tpu.dot_dimension_numbers<[1], [0], [0], [1], [0, 0, 1, 1], [], []>} : vector<16x16xf32>, vector<16x128xf32>, vector<16x128xf32> -> vector<16x128xf32>
    %24 = arith.addf %1, %23 : vector<16x128xf32>
    %c0_18 = arith.constant 0 : index
    %c0_19 = arith.constant 0 : index
    %25 = vector.load %arg6[%c0_18, %c0_19] : memref<1x128xf32, #tpu.memory_space<vmem>>, vector<1x128xf32>
    %c0_20 = arith.constant 0 : index
    %c0_21 = arith.constant 0 : index
    %26 = vector.load %arg7[%c0_20, %c0_21] : memref<1x128xf32, #tpu.memory_space<vmem>>, vector<1x128xf32>
    %cst_22 = arith.constant dense<0.000000e+00> : vector<16xf32>
    %27 = vector.multi_reduction <add>, %24, %cst_22 [1] : vector<16x128xf32> to vector<16xf32>
    %28 = vector.shape_cast %27 : vector<16xf32> to vector<16x1xf32>
    %cst_23 = arith.constant 1.280000e+02 : f32
    %29 = vector.broadcast %cst_23 : f32 to vector<16x1xf32>
    %30 = arith.divf %28, %29 : vector<16x1xf32>
    %31 = vector.broadcast %30 : vector<16x1xf32> to vector<16x128xf32>
    %32 = arith.subf %24, %31 : vector<16x128xf32>
    %33 = arith.mulf %32, %32 : vector<16x128xf32>
    %cst_24 = arith.constant dense<0.000000e+00> : vector<16xf32>
    %34 = vector.multi_reduction <add>, %33, %cst_24 [1] : vector<16x128xf32> to vector<16xf32>
    %35 = vector.shape_cast %34 : vector<16xf32> to vector<16x1xf32>
    %cst_25 = arith.constant 1.280000e+02 : f32
    %36 = vector.broadcast %cst_25 : f32 to vector<16x1xf32>
    %37 = arith.divf %35, %36 : vector<16x1xf32>
    %38 = vector.broadcast %30 : vector<16x1xf32> to vector<16x128xf32>
    %39 = arith.subf %24, %38 : vector<16x128xf32>
    %cst_26 = arith.constant 9.99999974E-6 : f32
    %40 = vector.broadcast %cst_26 : f32 to vector<16x1xf32>
    %41 = arith.addf %37, %40 : vector<16x1xf32>
    %42 = math.rsqrt %41 : vector<16x1xf32>
    %43 = vector.broadcast %42 : vector<16x1xf32> to vector<16x128xf32>
    %44 = arith.mulf %39, %43 : vector<16x128xf32>
    %45 = vector.broadcast %25 : vector<1x128xf32> to vector<16x128xf32>
    %46 = arith.mulf %44, %45 : vector<16x128xf32>
    %47 = vector.broadcast %26 : vector<1x128xf32> to vector<16x128xf32>
    %48 = arith.addf %46, %47 : vector<16x128xf32>
    %c0_27 = arith.constant 0 : index
    %c0_28 = arith.constant 0 : index
    %49 = vector.load %arg8[%c0_27, %c0_28] : memref<128x256xf32, #tpu.memory_space<vmem>>, vector<128x256xf32>
    %cst_29 = arith.constant dense<0.000000e+00> : vector<16x256xf32>
    %50 = tpu.matmul %48, %49, %cst_29 {dimension_numbers = #tpu.dot_dimension_numbers<[1], [0], [0], [1], [0, 0, 1, 1], [], []>} : vector<16x128xf32>, vector<128x256xf32>, vector<16x256xf32> -> vector<16x256xf32>
    %c0_30 = arith.constant 0 : index
    %c0_31 = arith.constant 0 : index
    %51 = vector.load %arg9[%c0_30, %c0_31] : memref<1x256xf32, #tpu.memory_space<vmem>>, vector<1x256xf32>
    %52 = vector.broadcast %51 : vector<1x256xf32> to vector<16x256xf32>
    %53 = arith.addf %50, %52 : vector<16x256xf32>
    %cst_32 = arith.constant 0.000000e+00 : f32
    %54 = vector.broadcast %cst_32 : f32 to vector<16x256xf32>
    %55 = arith.maximumf %53, %54 : vector<16x256xf32>
    %c0_33 = arith.constant 0 : index
    %c0_34 = arith.constant 0 : index
    %56 = vector.load %arg10[%c0_33, %c0_34] : memref<256x128xf32, #tpu.memory_space<vmem>>, vector<256x128xf32>
    %cst_35 = arith.constant dense<0.000000e+00> : vector<16x128xf32>
    %57 = tpu.matmul %55, %56, %cst_35 {dimension_numbers = #tpu.dot_dimension_numbers<[1], [0], [0], [1], [0, 0, 1, 1], [], []>} : vector<16x256xf32>, vector<256x128xf32>, vector<16x128xf32> -> vector<16x128xf32>
    %c0_36 = arith.constant 0 : index
    %c0_37 = arith.constant 0 : index
    %58 = vector.load %arg11[%c0_36, %c0_37] : memref<1x128xf32, #tpu.memory_space<vmem>>, vector<1x128xf32>
    %59 = vector.broadcast %58 : vector<1x128xf32> to vector<16x128xf32>
    %60 = arith.addf %57, %59 : vector<16x128xf32>
    %61 = arith.addf %48, %60 : vector<16x128xf32>
    %c0_38 = arith.constant 0 : index
    %c0_39 = arith.constant 0 : index
    %62 = vector.load %arg12[%c0_38, %c0_39] : memref<1x128xf32, #tpu.memory_space<vmem>>, vector<1x128xf32>
    %c0_40 = arith.constant 0 : index
    %c0_41 = arith.constant 0 : index
    %63 = vector.load %arg13[%c0_40, %c0_41] : memref<1x128xf32, #tpu.memory_space<vmem>>, vector<1x128xf32>
    %cst_42 = arith.constant dense<0.000000e+00> : vector<16xf32>
    %64 = vector.multi_reduction <add>, %61, %cst_42 [1] : vector<16x128xf32> to vector<16xf32>
    %65 = vector.shape_cast %64 : vector<16xf32> to vector<16x1xf32>
    %cst_43 = arith.constant 1.280000e+02 : f32
    %66 = vector.broadcast %cst_43 : f32 to vector<16x1xf32>
    %67 = arith.divf %65, %66 : vector<16x1xf32>
    %68 = vector.broadcast %67 : vector<16x1xf32> to vector<16x128xf32>
    %69 = arith.subf %61, %68 : vector<16x128xf32>
    %70 = arith.mulf %69, %69 : vector<16x128xf32>
    %cst_44 = arith.constant dense<0.000000e+00> : vector<16xf32>
    %71 = vector.multi_reduction <add>, %70, %cst_44 [1] : vector<16x128xf32> to vector<16xf32>
    %72 = vector.shape_cast %71 : vector<16xf32> to vector<16x1xf32>
    %cst_45 = arith.constant 1.280000e+02 : f32
    %73 = vector.broadcast %cst_45 : f32 to vector<16x1xf32>
    %74 = arith.divf %72, %73 : vector<16x1xf32>
    %75 = vector.broadcast %67 : vector<16x1xf32> to vector<16x128xf32>
    %76 = arith.subf %61, %75 : vector<16x128xf32>
    %cst_46 = arith.constant 9.99999974E-6 : f32
    %77 = vector.broadcast %cst_46 : f32 to vector<16x1xf32>
    %78 = arith.addf %74, %77 : vector<16x1xf32>
    %79 = math.rsqrt %78 : vector<16x1xf32>
    %80 = vector.broadcast %79 : vector<16x1xf32> to vector<16x128xf32>
    %81 = arith.mulf %76, %80 : vector<16x128xf32>
    %82 = vector.broadcast %62 : vector<1x128xf32> to vector<16x128xf32>
    %83 = arith.mulf %81, %82 : vector<16x128xf32>
    %84 = vector.broadcast %63 : vector<1x128xf32> to vector<16x128xf32>
    %85 = arith.addf %83, %84 : vector<16x128xf32>
    %c0_47 = arith.constant 0 : index
    %c0_48 = arith.constant 0 : index
    %c0_49 = arith.constant 0 : index
    %86 = vector.load %arg14[%c0_47, %c0_48, %c0_49] : memref<1x16x128xf32, #tpu.memory_space<vmem>>, vector<1x16x128xf32>
    %87 = vector.shape_cast %86 : vector<1x16x128xf32> to vector<16x128xf32>
    %88 = vector.shape_cast %85 : vector<16x128xf32> to vector<1x16x128xf32>
    tpu.vector_store %arg14[%c0_47, %c0_48, %c0_49], %88 {strides = array<i32>} : memref<1x16x128xf32, #tpu.memory_space<vmem>>, vector<1x16x128xf32>,
    %c0_50 = arith.constant 0 : index
    %c0_51 = arith.constant 0 : index
    %c0_52 = arith.constant 0 : index
    %89 = vector.load %arg15[%c0_50, %c0_51, %c0_52] : memref<1x16x16xf32, #tpu.memory_space<vmem>>, vector<1x16x16xf32>
    %90 = vector.shape_cast %89 : vector<1x16x16xf32> to vector<16x16xf32>
    %91 = vector.shape_cast %20 : vector<16x16xf32> to vector<1x16x16xf32>
    tpu.vector_store %arg15[%c0_50, %c0_51, %c0_52], %91 {strides = array<i32>} : memref<1x16x16xf32, #tpu.memory_space<vmem>>, vector<1x16x16xf32>,
    return
  }
  func.func @transform_0(%arg0: i32) -> (i32, i32, i32) {
    %c0_i32 = arith.constant 0 : i32
    %c0_i32_0 = arith.constant 0 : i32
    %c0_i32_1 = arith.constant 0 : i32
    return %arg0, %c0_i32, %c0_i32_0 : i32, i32, i32
  }
  func.func @transform_1(%arg0: i32) -> (i32, i32) {
    %c0_i32 = arith.constant 0 : i32
    %c0_i32_0 = arith.constant 0 : i32
    %c0_i32_1 = arith.constant 0 : i32
    return %c0_i32, %c0_i32_0 : i32, i32
  }
  func.func @transform_2(%arg0: i32) -> (i32, i32) {
    %c0_i32 = arith.constant 0 : i32
    %c0_i32_0 = arith.constant 0 : i32
    %c0_i32_1 = arith.constant 0 : i32
    return %c0_i32, %c0_i32_0 : i32, i32
  }
  func.func @transform_3(%arg0: i32) -> (i32, i32) {
    %c0_i32 = arith.constant 0 : i32
    %c0_i32_0 = arith.constant 0 : i32
    %c0_i32_1 = arith.constant 0 : i32
    return %c0_i32, %c0_i32_0 : i32, i32
  }
  func.func @transform_4(%arg0: i32) -> (i32, i32) {
    %c0_i32 = arith.constant 0 : i32
    %c0_i32_0 = arith.constant 0 : i32
    %c0_i32_1 = arith.constant 0 : i32
    return %c0_i32, %c0_i32_0 : i32, i32
  }
  func.func @transform_5(%arg0: i32) -> (i32, i32) {
    %c0_i32 = arith.constant 0 : i32
    %c0_i32_0 = arith.constant 0 : i32
    %c0_i32_1 = arith.constant 0 : i32
    return %c0_i32, %c0_i32_0 : i32, i32
  }
  func.func @transform_6(%arg0: i32) -> (i32, i32) {
    %c0_i32 = arith.constant 0 : i32
    %c0_i32_0 = arith.constant 0 : i32
    %c0_i32_1 = arith.constant 0 : i32
    return %c0_i32, %c0_i32_0 : i32, i32
  }
  func.func @transform_7(%arg0: i32) -> (i32, i32) {
    %c0_i32 = arith.constant 0 : i32
    %c0_i32_0 = arith.constant 0 : i32
    %c0_i32_1 = arith.constant 0 : i32
    return %c0_i32, %c0_i32_0 : i32, i32
  }
  func.func @transform_8(%arg0: i32) -> (i32, i32) {
    %c0_i32 = arith.constant 0 : i32
    %c0_i32_0 = arith.constant 0 : i32
    %c0_i32_1 = arith.constant 0 : i32
    return %c0_i32, %c0_i32_0 : i32, i32
  }
  func.func @transform_9(%arg0: i32) -> (i32, i32) {
    %c0_i32 = arith.constant 0 : i32
    %c0_i32_0 = arith.constant 0 : i32
    %c0_i32_1 = arith.constant 0 : i32
    return %c0_i32, %c0_i32_0 : i32, i32
  }
  func.func @transform_10(%arg0: i32) -> (i32, i32) {
    %c0_i32 = arith.constant 0 : i32
    %c0_i32_0 = arith.constant 0 : i32
    %c0_i32_1 = arith.constant 0 : i32
    return %c0_i32, %c0_i32_0 : i32, i32
  }
  func.func @transform_11(%arg0: i32) -> (i32, i32) {
    %c0_i32 = arith.constant 0 : i32
    %c0_i32_0 = arith.constant 0 : i32
    %c0_i32_1 = arith.constant 0 : i32
    return %c0_i32, %c0_i32_0 : i32, i32
  }
  func.func @transform_12(%arg0: i32) -> (i32, i32) {
    %c0_i32 = arith.constant 0 : i32
    %c0_i32_0 = arith.constant 0 : i32
    %c0_i32_1 = arith.constant 0 : i32
    return %c0_i32, %c0_i32_0 : i32, i32
  }
  func.func @transform_13(%arg0: i32) -> (i32, i32, i32) {
    %c0_i32 = arith.constant 0 : i32
    %c0_i32_0 = arith.constant 0 : i32
    %c0_i32_1 = arith.constant 0 : i32
    return %arg0, %c0_i32, %c0_i32_0 : i32, i32, i32
  }
  func.func @transform_14(%arg0: i32) -> (i32, i32, i32) {
    %c0_i32 = arith.constant 0 : i32
    %c0_i32_0 = arith.constant 0 : i32
    %c0_i32_1 = arith.constant 0 : i32
    return %arg0, %c0_i32, %c0_i32_0 : i32, i32, i32
  }
}

</mosaic_0001>

<llo_original>
// kernel: encoder_forward.2
$region0: #{encoder_forward.2}
  #allocation0 [shape = 'u32[]', space=smem, size = 0x4, offset = 0x4, fixed_abs, tag = 'smem constant byte address 0x4 - core index']
  #allocation1 [shape = 'u32[144,128]{1,0:T(1,128)}', space=vmem, size = 0x12000, scoped, tag = 'internal scratch']
  %s0 = inlined_call_operand.vmem [shape: f32[2,16,128], index: 0, kind: input, shape index: {}]
  %s1 = inlined_call_operand.vmem [shape: f32[128,16], index: 1, kind: input, shape index: {}]
  %s2 = inlined_call_operand.vmem [shape: f32[128,16], index: 2, kind: input, shape index: {}]
  %s3 = inlined_call_operand.vmem [shape: f32[128,16], index: 3, kind: input, shape index: {}]
  %s4 = inlined_call_operand.vmem [shape: f32[16,128], index: 4, kind: input, shape index: {}]
  %s5 = inlined_call_operand.vmem [shape: f32[1,128], index: 5, kind: input, shape index: {}]
  %s6 = inlined_call_operand.vmem [shape: f32[1,128], index: 6, kind: input, shape index: {}]
  %s7 = inlined_call_operand.vmem [shape: f32[128,256], index: 7, kind: input, shape index: {}]
  %s8 = inlined_call_operand.vmem [shape: f32[1,256], index: 8, kind: input, shape index: {}]
  %s9 = inlined_call_operand.hbm [shape: f32[256,128], index: 9, kind: input, shape index: {}]
  %s10 = inlined_call_operand.vmem [shape: f32[1,128], index: 10, kind: input, shape index: {}]
  %s11 = inlined_call_operand.vmem [shape: f32[1,128], index: 11, kind: input, shape index: {}]
  %s12 = inlined_call_operand.vmem [shape: f32[1,128], index: 12, kind: input, shape index: {}]
  %s13 = inlined_call_operand.vmem [shape: f32[2,16,128], index: 13, kind: output, shape index: {0}]
  %s14 = inlined_call_operand.hbm [shape: f32[2,16,16], index: 14, kind: output, shape index: {1}]
  %15 = xla_tuple %s13, %s14
  %s16 = sld [smem:[#allocation0]]
  $region97: #{encoder_forward.2} parent=0
    _
  %s18 = ssub.s32 1, %s16
  %s19 = scalar_select 0, %s18, %s16
  $region1: #{encoder_forward.2} parent=0
    #allocation2 [shape = 'u8[131072]{0}', space=vmem, size = 0x20000, scoped, tag = 'input window, operand 9, single buffered']
    #allocation3 [shape = 's32[2]{0}', space=sflag, size = 0x8, scoped, tag = 'scoped memory for encoder_forward.2']
    #allocation4 [shape = 's32[2]{0}', space=sflag, size = 0x8, scoped, tag = 'scoped memory for encoder_forward.2']
    #allocation5 [shape = 'u8[16384]{0}', space=vmem, size = 0x4000, scoped, tag = 'output window, operand 1']
    %20 = vsyncpa [#allocation3], 0
    %21 = vsyncpa [#allocation4], 0
    %s22 = scalar_lea.sflag [#allocation4], 1
    %23 = vsyncpa %s22, 0
    loop: start=0, step=1, limit=4
    $region2: #{encoder_forward.2} parent=1 // loop_pre_header
      _
    $region3: #{encoder_forward.2} parent=1 // loop_header
      %s25 = sphi 0, %s29
      %p26 = scmp.ge.s32.totalorder %s25, 4
      %s35 = sphi 0, %s37
      %s38 = sphi 0, %s35
      %s39 = sphi 0, %s38
      %s55 = sphi 0, %s39
      %s59 = sphi 0, %s59
      %s61 = sphi 0, %s59
      %s62 = sphi 0, %s61
      %s76 = sphi 0, %s62
      %s80 = sphi 0, %s80
      %s82 = sphi 0, %s80
      %s83 = sphi 0, %s82
      %s97 = sphi 0, %s83
      %s101 = sphi 0, %s101
      %s103 = sphi 0, %s101
      %s104 = sphi 0, %s103
      %s118 = sphi 0, %s104
      %s122 = sphi 0, %s122
      %s124 = sphi 0, %s122
      %s125 = sphi 0, %s124
      %s139 = sphi 0, %s125
      %s143 = sphi 0, %s143
      %s145 = sphi 0, %s143
      %s146 = sphi 0, %s145
      %s160 = sphi 0, %s146
      %s164 = sphi 0, %s164
      %s166 = sphi 0, %s164
      %s167 = sphi 0, %s166
      %s181 = sphi 0, %s167
      %s185 = sphi 0, %s185
      %s187 = sphi 0, %s185
      %s188 = sphi 0, %s187
      %s202 = sphi 0, %s188
      %s206 = sphi 0, %s206
      %s208 = sphi 0, %s206
      %s209 = sphi 0, %s208
      %s223 = sphi 0, %s209
      %s227 = sphi 0, %s227
      %s229 = sphi 0, %s227
      %s230 = sphi 0, %s229
      %s244 = sphi 0, %s230
      %s248 = sphi 0, %s248
      %s250 = sphi 0, %s248
      %s251 = sphi 0, %s250
      %s265 = sphi 0, %s251
      %s269 = sphi 0, %s269
      %s271 = sphi 0, %s269
      %s272 = sphi 0, %s271
      %s286 = sphi 0, %s272
      %s290 = sphi 0, %s290
      %s292 = sphi 0, %s290
      %s293 = sphi 0, %s292
      %s307 = sphi 0, %s293
      %s313 = sphi 0, %s315
      %s316 = sphi 0, %s313
      %s317 = sphi 0, %s316
      %s333 = sphi 0, %s317
      %s339 = sphi 0, %s341
      %s342 = sphi 0, %s339
      %s343 = sphi 0, %s342
      %s359 = sphi 0, %s343
    $region4: #{encoder_forward.2} parent=1 // loop_header_branch
      %28 = sbr.rel (%p26) target = $region8
    $region5: #{encoder_forward.2} parent=1 // loop_body
      %s30 = ssub.s32 %s25, 1
      %s31 = ssub.s32 %s25, 2
      %s32 = sadd.s32 %s25, 1
      %s33 = ssub.s32 %s25, %s32
      %p34 = scmp.eq.s32.totalorder %s33, 0
      %s36 = sadd.s32 %s35, 1
      %s37 = scalar_select %p34, %s35, %s36
      %p40 = pneg %p34
      %p41 = scmp.eq.s32.totalorder %s25, 1
      %p42 = por %p40, %p41
      %p43 = scmp.ne.s32.totalorder %s35, %s38
      %p44 = scmp.eq.s32.totalorder %s25, 0
      %p45 = por %p43, %p44
      %p46 = scmp.ne.s32.totalorder %s35, %s38
      %p47 = scmp.eq.s32.totalorder %s30, 1
      %p48 = por %p46, %p47
      %p49 = scmp.ne.s32.totalorder %s38, %s39
      %p50 = scmp.eq.s32.totalorder %s30, 0
      %p51 = por %p49, %p50
      %p52 = scmp.ne.s32.totalorder %s38, %s39
      %p53 = scmp.eq.s32.totalorder %s31, 1
      %p54 = por %p52, %p53
      %p56 = scmp.ne.s32.totalorder %s39, %s55
      %p57 = scmp.eq.s32.totalorder %s31, 0
      %p58 = por %p56, %p57
      %s60 = sadd.s32 %s59, 1
      %p63 = scmp.eq.s32.totalorder %s25, 1
      %p64 = scmp.ne.s32.totalorder %s59, %s61
      %p65 = scmp.eq.s32.totalorder %s25, 0
      %p66 = por %p64, %p65
      %p67 = scmp.ne.s32.totalorder %s59, %s61
      %p68 = scmp.eq.s32.totalorder %s30, 1
      %p69 = por %p67, %p68
      %p70 = scmp.ne.s32.totalorder %s61, %s62
      %p71 = scmp.eq.s32.totalorder %s30, 0
      %p72 = por %p70, %p71
      %p73 = scmp.ne.s32.totalorder %s61, %s62
      %p74 = scmp.eq.s32.totalorder %s31, 1
      %p75 = por %p73, %p74
      %p77 = scmp.ne.s32.totalorder %s62, %s76
      %p78 = scmp.eq.s32.totalorder %s31, 0
      %p79 = por %p77, %p78
      %s81 = sadd.s32 %s80, 1
      %p84 = scmp.eq.s32.totalorder %s25, 1
      %p85 = scmp.ne.s32.totalorder %s80, %s82
      %p86 = scmp.eq.s32.totalorder %s25, 0
      %p87 = por %p85, %p86
      %p88 = scmp.ne.s32.totalorder %s80, %s82
      %p89 = scmp.eq.s32.totalorder %s30, 1
      %p90 = por %p88, %p89
      %p91 = scmp.ne.s32.totalorder %s82, %s83
      %p92 = scmp.eq.s32.totalorder %s30, 0
      %p93 = por %p91, %p92
      %p94 = scmp.ne.s32.totalorder %s82, %s83
      %p95 = scmp.eq.s32.totalorder %s31, 1
      %p96 = por %p94, %p95
      %p98 = scmp.ne.s32.totalorder %s83, %s97
      %p99 = scmp.eq.s32.totalorder %s31, 0
      %p100 = por %p98, %p99
      %s102 = sadd.s32 %s101, 1
      %p105 = scmp.eq.s32.totalorder %s25, 1
      %p106 = scmp.ne.s32.totalorder %s101, %s103
      %p107 = scmp.eq.s32.totalorder %s25, 0
      %p108 = por %p106, %p107
      %p109 = scmp.ne.s32.totalorder %s101, %s103
      %p110 = scmp.eq.s32.totalorder %s30, 1
      %p111 = por %p109, %p110
      %p112 = scmp.ne.s32.totalorder %s103, %s104
      %p113 = scmp.eq.s32.totalorder %s30, 0
      %p114 = por %p112, %p113
      %p115 = scmp.ne.s32.totalorder %s103, %s104
      %p116 = scmp.eq.s32.totalorder %s31, 1
      %p117 = por %p115, %p116
      %p119 = scmp.ne.s32.totalorder %s104, %s118
      %p120 = scmp.eq.s32.totalorder %s31, 0
      %p121 = por %p119, %p120
      %s123 = sadd.s32 %s122, 1
      %p126 = scmp.eq.s32.totalorder %s25, 1
      %p127 = scmp.ne.s32.totalorder %s122, %s124
      %p128 = scmp.eq.s32.totalorder %s25, 0
      %p129 = por %p127, %p128
      %p130 = scmp.ne.s32.totalorder %s122, %s124
      %p131 = scmp.eq.s32.totalorder %s30, 1
      %p132 = por %p130, %p131
      %p133 = scmp.ne.s32.totalorder %s124, %s125
      %p134 = scmp.eq.s32.totalorder %s30, 0
      %p135 = por %p133, %p134
      %p136 = scmp.ne.s32.totalorder %s124, %s125
      %p137 = scmp.eq.s32.totalorder %s31, 1
      %p138 = por %p136, %p137
      %p140 = scmp.ne.s32.totalorder %s125, %s139
      %p141 = scmp.eq.s32.totalorder %s31, 0
      %p142 = por %p140, %p141
      %s144 = sadd.s32 %s143, 1
      %p147 = scmp.eq.s32.totalorder %s25, 1
      %p148 = scmp.ne.s32.totalorder %s143, %s145
      %p149 = scmp.eq.s32.totalorder %s25, 0
      %p150 = por %p148, %p149
      %p151 = scmp.ne.s32.totalorder %s143, %s145
      %p152 = scmp.eq.s32.totalorder %s30, 1
      %p153 = por %p151, %p152
      %p154 = scmp.ne.s32.totalorder %s145, %s146
      %p155 = scmp.eq.s32.totalorder %s30, 0
      %p156 = por %p154, %p155
      %p157 = scmp.ne.s32.totalorder %s145, %s146
      %p158 = scmp.eq.s32.totalorder %s31, 1
      %p159 = por %p157, %p158
      %p161 = scmp.ne.s32.totalorder %s146, %s160
      %p162 = scmp.eq.s32.totalorder %s31, 0
      %p163 = por %p161, %p162
      %s165 = sadd.s32 %s164, 1
      %p168 = scmp.eq.s32.totalorder %s25, 1
      %p169 = scmp.ne.s32.totalorder %s164, %s166
      %p170 = scmp.eq.s32.totalorder %s25, 0
      %p171 = por %p169, %p170
      %p172 = scmp.ne.s32.totalorder %s164, %s166
      %p173 = scmp.eq.s32.totalorder %s30, 1
      %p174 = por %p172, %p173
      %p175 = scmp.ne.s32.totalorder %s166, %s167
      %p176 = scmp.eq.s32.totalorder %s30, 0
      %p177 = por %p175, %p176
      %p178 = scmp.ne.s32.totalorder %s166, %s167
      %p179 = scmp.eq.s32.totalorder %s31, 1
      %p180 = por %p178, %p179
      %p182 = scmp.ne.s32.totalorder %s167, %s181
      %p183 = scmp.eq.s32.totalorder %s31, 0
      %p184 = por %p182, %p183
      %s186 = sadd.s32 %s185, 1
      %p189 = scmp.eq.s32.totalorder %s25, 1
      %p190 = scmp.ne.s32.totalorder %s185, %s187
      %p191 = scmp.eq.s32.totalorder %s25, 0
      %p192 = por %p190, %p191
      %p193 = scmp.ne.s32.totalorder %s185, %s187
      %p194 = scmp.eq.s32.totalorder %s30, 1
      %p195 = por %p193, %p194
      %p196 = scmp.ne.s32.totalorder %s187, %s188
      %p197 = scmp.eq.s32.totalorder %s30, 0
      %p198 = por %p196, %p197
      %p199 = scmp.ne.s32.totalorder %s187, %s188
      %p200 = scmp.eq.s32.totalorder %s31, 1
      %p201 = por %p199, %p200
      %p203 = scmp.ne.s32.totalorder %s188, %s202
      %p204 = scmp.eq.s32.totalorder %s31, 0
      %p205 = por %p203, %p204
      %s207 = sadd.s32 %s206, 1
      %p210 = scmp.eq.s32.totalorder %s25, 1
      %p211 = scmp.ne.s32.totalorder %s206, %s208
      %p212 = scmp.eq.s32.totalorder %s25, 0
      %p213 = por %p211, %p212
      %p214 = scmp.ne.s32.totalorder %s206, %s208
      %p215 = scmp.eq.s32.totalorder %s30, 1
      %p216 = por %p214, %p215
      %p217 = scmp.ne.s32.totalorder %s208, %s209
      %p218 = scmp.eq.s32.totalorder %s30, 0
      %p219 = por %p217, %p218
      %p220 = scmp.ne.s32.totalorder %s208, %s209
      %p221 = scmp.eq.s32.totalorder %s31, 1
      %p222 = por %p220, %p221
      %p224 = scmp.ne.s32.totalorder %s209, %s223
      %p225 = scmp.eq.s32.totalorder %s31, 0
      %p226 = por %p224, %p225
      %s228 = sadd.s32 %s227, 1
      %p231 = scmp.eq.s32.totalorder %s25, 1
      %p232 = scmp.ne.s32.totalorder %s227, %s229
      %p233 = scmp.eq.s32.totalorder %s25, 0
      %p234 = por %p232, %p233
      %p235 = scmp.ne.s32.totalorder %s227, %s229
      %p236 = scmp.eq.s32.totalorder %s30, 1
      %p237 = por %p235, %p236
      %p238 = scmp.ne.s32.totalorder %s229, %s230
      %p239 = scmp.eq.s32.totalorder %s30, 0
      %p240 = por %p238, %p239
      %p241 = scmp.ne.s32.totalorder %s229, %s230
      %p242 = scmp.eq.s32.totalorder %s31, 1
      %p243 = por %p241, %p242
      %p245 = scmp.ne.s32.totalorder %s230, %s244
      %p246 = scmp.eq.s32.totalorder %s31, 0
      %p247 = por %p245, %p246
      %s249 = sadd.s32 %s248, 1
      %p252 = scmp.eq.s32.totalorder %s25, 1
      %p253 = scmp.ne.s32.totalorder %s248, %s250
      %p254 = scmp.eq.s32.totalorder %s25, 0
      %p255 = por %p253, %p254
      %p256 = scmp.ne.s32.totalorder %s248, %s250
      %p257 = scmp.eq.s32.totalorder %s30, 1
      %p258 = por %p256, %p257
      %p259 = scmp.ne.s32.totalorder %s250, %s251
      %p260 = scmp.eq.s32.totalorder %s30, 0
      %p261 = por %p259, %p260
      %p262 = scmp.ne.s32.totalorder %s250, %s251
      %p263 = scmp.eq.s32.totalorder %s31, 1
      %p264 = por %p262, %p263
      %p266 = scmp.ne.s32.totalorder %s251, %s265
      %p267 = scmp.eq.s32.totalorder %s31, 0
      %p268 = por %p266, %p267
      %s270 = sadd.s32 %s269, 1
      %p273 = scmp.eq.s32.totalorder %s25, 1
      %p274 = scmp.ne.s32.totalorder %s269, %s271
      %p275 = scmp.eq.s32.totalorder %s25, 0
      %p276 = por %p274, %p275
      %p277 = scmp.ne.s32.totalorder %s269, %s271
      %p278 = scmp.eq.s32.totalorder %s30, 1
      %p279 = por %p277, %p278
      %p280 = scmp.ne.s32.totalorder %s271, %s272
      %p281 = scmp.eq.s32.totalorder %s30, 0
      %p282 = por %p280, %p281
      %p283 = scmp.ne.s32.totalorder %s271, %s272
      %p284 = scmp.eq.s32.totalorder %s31, 1
      %p285 = por %p283, %p284
      %p287 = scmp.ne.s32.totalorder %s272, %s286
      %p288 = scmp.eq.s32.totalorder %s31, 0
      %p289 = por %p287, %p288
      %s291 = sadd.s32 %s290, 1
      %p294 = scmp.eq.s32.totalorder %s25, 1
      %p295 = scmp.ne.s32.totalorder %s290, %s292
      %p296 = scmp.eq.s32.totalorder %s25, 0
      %p297 = por %p295, %p296
      %p298 = scmp.ne.s32.totalorder %s290, %s292
      %p299 = scmp.eq.s32.totalorder %s30, 1
      %p300 = por %p298, %p299
      %p301 = scmp.ne.s32.totalorder %s292, %s293
      %p302 = scmp.eq.s32.totalorder %s30, 0
      %p303 = por %p301, %p302
      %p304 = scmp.ne.s32.totalorder %s292, %s293
      %p305 = scmp.eq.s32.totalorder %s31, 1
      %p306 = por %p304, %p305
      %p308 = scmp.ne.s32.totalorder %s293, %s307
      %p309 = scmp.eq.s32.totalorder %s31, 0
      %p310 = por %p308, %p309
      %s311 = ssub.s32 %s25, %s32
      %p312 = scmp.eq.s32.totalorder %s311, 0
      %s314 = sadd.s32 %s313, 1
      %s315 = scalar_select %p312, %s313, %s314
      %p318 = pneg %p312
      %p319 = scmp.eq.s32.totalorder %s25, 1
      %p320 = por %p318, %p319
      %p321 = scmp.ne.s32.totalorder %s313, %s316
      %p322 = scmp.eq.s32.totalorder %s25, 0
      %p323 = por %p321, %p322
      %p324 = scmp.ne.s32.totalorder %s313, %s316
      %p325 = scmp.eq.s32.totalorder %s30, 1
      %p326 = por %p324, %p325
      %p327 = scmp.ne.s32.totalorder %s316, %s317
      %p328 = scmp.eq.s32.totalorder %s30, 0
      %p329 = por %p327, %p328
      %p330 = scmp.ne.s32.totalorder %s316, %s317
      %p331 = scmp.eq.s32.totalorder %s31, 1
      %p332 = por %p330, %p331
      %p334 = scmp.ne.s32.totalorder %s317, %s333
      %p335 = scmp.eq.s32.totalorder %s31, 0
      %p336 = por %p334, %p335
      %s337 = ssub.s32 %s25, %s32
      %p338 = scmp.eq.s32.totalorder %s337, 0
      %s340 = sadd.s32 %s339, 1
      %s341 = scalar_select %p338, %s339, %s340
      %p344 = pneg %p338
      %p345 = scmp.eq.s32.totalorder %s25, 1
      %p346 = por %p344, %p345
      %p347 = scmp.ne.s32.totalorder %s339, %s342
      %p348 = scmp.eq.s32.totalorder %s25, 0
      %p349 = por %p347, %p348
      %p350 = scmp.ne.s32.totalorder %s339, %s342
      %p351 = scmp.eq.s32.totalorder %s30, 1
      %p352 = por %p350, %p351
      %p353 = scmp.ne.s32.totalorder %s342, %s343
      %p354 = scmp.eq.s32.totalorder %s30, 0
      %p355 = por %p353, %p354
      %p356 = scmp.ne.s32.totalorder %s342, %s343
      %p357 = scmp.eq.s32.totalorder %s31, 1
      %p358 = por %p356, %p357
      %p360 = scmp.ne.s32.totalorder %s343, %s359
      %p361 = scmp.eq.s32.totalorder %s31, 0
      %p362 = por %p360, %p361
      %p363 = scmp.le.s32.totalorder 1, %s25
      %p364 = scmp.lt.s32.totalorder %s25, 3
      %p365 = pnand %p363, %p364
      %p366 = pneg %p365
      // Predicated region
      $region9: #{encoder_forward.2} parent=5 // pred_check
        _
      $region10: #{encoder_forward.2} parent=5 // pred_check_branch
        %368 = sbr.rel (%p365) target = $region12
      $region11: #{encoder_forward.2} parent=5 // pred_region
        %s369 = ssub.s32 %s25, 1
        // Predicated region
        $region13: #{encoder_forward.2} parent=11 // pred_check
          %p370 = pneg %p72
        $region14: #{encoder_forward.2} parent=11 // pred_check_branch
          %372 = sbr.rel (%p370) target = $region16
        $region15: #{encoder_forward.2} parent=11 // pred_region
          _
        $region16: #{encoder_forward.2} parent=11 // pred_fallthru
          _
        // Predicated region
        $region17: #{encoder_forward.2} parent=11 // pred_check
          %p373 = pneg %p93
        $region18: #{encoder_forward.2} parent=11 // pred_check_branch
          %375 = sbr.rel (%p373) target = $region20
        $region19: #{encoder_forward.2} parent=11 // pred_region
          _
        $region20: #{encoder_forward.2} parent=11 // pred_fallthru
          _
        // Predicated region
        $region21: #{encoder_forward.2} parent=11 // pred_check
          %p376 = pneg %p114
        $region22: #{encoder_forward.2} parent=11 // pred_check_branch
          %378 = sbr.rel (%p376) target = $region24
        $region23: #{encoder_forward.2} parent=11 // pred_region
          _
        $region24: #{encoder_forward.2} parent=11 // pred_fallthru
          _
        // Predicated region
        $region25: #{encoder_forward.2} parent=11 // pred_check
          %p379 = pneg %p135
        $region26: #{encoder_forward.2} parent=11 // pred_check_branch
          %381 = sbr.rel (%p379) target = $region28
        $region27: #{encoder_forward.2} parent=11 // pred_region
          _
        $region28: #{encoder_forward.2} parent=11 // pred_fallthru
          _
        // Predicated region
        $region29: #{encoder_forward.2} parent=11 // pred_check
          %p382 = pneg %p156
        $region30: #{encoder_forward.2} parent=11 // pred_check_branch
          %384 = sbr.rel (%p382) target = $region32
        $region31: #{encoder_forward.2} parent=11 // pred_region
          _
        $region32: #{encoder_forward.2} parent=11 // pred_fallthru
          _
        // Predicated region
        $region33: #{encoder_forward.2} parent=11 // pred_check
          %p385 = pneg %p177
        $region34: #{encoder_forward.2} parent=11 // pred_check_branch
          %387 = sbr.rel (%p385) target = $region36
        $region35: #{encoder_forward.2} parent=11 // pred_region
          _
        $region36: #{encoder_forward.2} parent=11 // pred_fallthru
          _
        // Predicated region
        $region37: #{encoder_forward.2} parent=11 // pred_check
          %p388 = pneg %p198
        $region38: #{encoder_forward.2} parent=11 // pred_check_branch
          %390 = sbr.rel (%p388) target = $region40
        $region39: #{encoder_forward.2} parent=11 // pred_region
          _
        $region40: #{encoder_forward.2} parent=11 // pred_fallthru
          _
        // Predicated region
        $region41: #{encoder_forward.2} parent=11 // pred_check
          %p391 = pneg %p219
        $region42: #{encoder_forward.2} parent=11 // pred_check_branch
          %393 = sbr.rel (%p391) target = $region44
        $region43: #{encoder_forward.2} parent=11 // pred_region
          _
        $region44: #{encoder_forward.2} parent=11 // pred_fallthru
          _
        // Predicated region
        $region45: #{encoder_forward.2} parent=11 // pred_check
          %p394 = pneg %p240
        $region46: #{encoder_forward.2} parent=11 // pred_check_branch
          %396 = sbr.rel (%p394) target = $region48
        $region47: #{encoder_forward.2} parent=11 // pred_region
          %s398 = ssub.s32 4096, 4096
          %399 = vsyncadd [#allocation3], %s398
          %s400 = sshll.u32 [#allocation2], 4
          %s401 = int_to_ptr.vmem [resolvable:$true] %s400
          %406 = dma.hbm_to_vmem [thread:$0]  %s9, 4096, %s401, [#allocation3], 128, 128, 8
        $region48: #{encoder_forward.2} parent=11 // pred_fallthru
          _
        // Predicated region
        $region49: #{encoder_forward.2} parent=11 // pred_check
          %p407 = pneg %p261
        $region50: #{encoder_forward.2} parent=11 // pred_check_branch
          %409 = sbr.rel (%p407) target = $region52
        $region51: #{encoder_forward.2} parent=11 // pred_region
          _
        $region52: #{encoder_forward.2} parent=11 // pred_fallthru
          _
        // Predicated region
        $region53: #{encoder_forward.2} parent=11 // pred_check
          %p410 = pneg %p282
        $region54: #{encoder_forward.2} parent=11 // pred_check_branch
          %412 = sbr.rel (%p410) target = $region56
        $region55: #{encoder_forward.2} parent=11 // pred_region
          _
        $region56: #{encoder_forward.2} parent=11 // pred_fallthru
          _
        // Predicated region
        $region57: #{encoder_forward.2} parent=11 // pred_check
          %p413 = pneg %p303
        $region58: #{encoder_forward.2} parent=11 // pred_check_branch
          %415 = sbr.rel (%p413) target = $region60
        $region59: #{encoder_forward.2} parent=11 // pred_region
          _
        $region60: #{encoder_forward.2} parent=11 // pred_fallthru
          _
      $region12: #{encoder_forward.2} parent=5 // pred_fallthru
        _
      %p416 = scmp.lt.s32.totalorder %s25, 2
      // Predicated region
      $region61: #{encoder_forward.2} parent=5 // pred_check
        %p417 = pneg %p416
      $region62: #{encoder_forward.2} parent=5 // pred_check_branch
        %419 = sbr.rel (%p417) target = $region64
      $region63: #{encoder_forward.2} parent=5 // pred_region
        // Predicated region
        $region65: #{encoder_forward.2} parent=63 // pred_check
          %p420 = pneg %p45
        $region66: #{encoder_forward.2} parent=63 // pred_check_branch
          %422 = sbr.rel (%p420) target = $region68
        $region67: #{encoder_forward.2} parent=63 // pred_region
          %p423 = scmp.lt.s32.totalorder %s25, 1
          %s424 = scalar_select %p423, %s25, 1
          %s425 = smul.addr %s424, 2
          %s426 = smul.addr %s425, 8
          %s427 = scalar_lea.vmem %s0, %s426
        $region68: #{encoder_forward.2} parent=63 // pred_fallthru
          _
      $region64: #{encoder_forward.2} parent=5 // pred_fallthru
        _
      %p428 = scmp.le.s32.totalorder 1, %s25
      %p429 = scmp.lt.s32.totalorder %s25, 3
      %p430 = pnand %p428, %p429
      %p431 = pneg %p430
      // Predicated region
      $region69: #{encoder_forward.2} parent=5 // pred_check
        _
      $region70: #{encoder_forward.2} parent=5 // pred_check_branch
        %433 = sbr.rel (%p430) target = $region72
      $region71: #{encoder_forward.2} parent=5 // pred_region
        %s434 = ssub.s32 %s25, 1
        // Predicated region
        $region73: #{encoder_forward.2} parent=71 // pred_check
          %p435 = pneg %p240
        $region74: #{encoder_forward.2} parent=71 // pred_check_branch
          %437 = sbr.rel (%p435) target = $region76
        $region75: #{encoder_forward.2} parent=71 // pred_region
          %438 = dma.done [#allocation3], 4096
        $region76: #{encoder_forward.2} parent=71 // pred_fallthru
          _
        %p439 = scmp.lt.s32.totalorder %s30, 1
        %s440 = scalar_select %p439, %s30, 1
        %s441 = smul.addr %s440, 2
        %s442 = smul.addr %s441, 8
        %s443 = scalar_lea.vmem %s0, %s442
        %p444 = pneg %p51
        %p445 = pneg %p48
        %p446 = pneg %p72
        %p447 = pneg %p69
        %p448 = pneg %p93
        %p449 = pneg %p90
        %p450 = pneg %p114
        %p451 = pneg %p111
        %p452 = pneg %p135
        %p453 = pneg %p132
        %p454 = pneg %p156
        %p455 = pneg %p153
        %p456 = pneg %p177
        %p457 = pneg %p174
        %p458 = pneg %p198
        %p459 = pneg %p195
        %p460 = pneg %p219
        %p461 = pneg %p216
        %p462 = pneg %p240
        %p463 = pneg %p237
        %p464 = pneg %p261
        %p465 = pneg %p258
        %p466 = pneg %p282
        %p467 = pneg %p279
        %p468 = pneg %p303
        %p469 = pneg %p300
        %p470 = pneg %p329
        %p471 = pneg %p326
        %p472 = scmp.lt.s32.totalorder %s30, 1
        %s473 = scalar_select %p472, %s30, 1
        %s474 = smul.addr %s473, 2
        %s475 = smul.addr %s474, 8
        %s476 = scalar_lea.vmem %s13, %s475
        %p477 = pneg %p355
        %p478 = pneg %p352
        %s479 = sand.u32 %s342, 1
        %s480 = scalar_lea.sflag [#allocation4], %s479
        %s481 = sand.u32 %s342, 1
        %s482 = smul.addr %s481, 16
        %s483 = scalar_lea.vmem [#allocation5], %s482
        %p484 = scmp.lt.s32.totalorder %s30, 1
        %s485 = scalar_select %p484, %s30, 1
        %s486 = smul.addr %s485, 2
        %s487 = smul.addr %s486, 8
        %s488 = scalar_lea.vmem %s0, %s487
        %p489 = scmp.lt.s32.totalorder %s30, 1
        %s490 = scalar_select %p489, %s30, 1
        %s491 = smul.addr %s490, 2
        %s492 = smul.addr %s491, 8
        %s493 = scalar_lea.vmem %s13, %s492
        %v494 = vld [vmem:[%s488] sm:$0xff]
        %v495 = vld [vmem:[%s488 + $0x8] sm:$0xff]
        %v496 = vld [vmem:[%s1] sm:$0xff]
        %v497 = vld [vmem:[%s1 + $0x8] sm:$0xff]
        %v498 = vld [vmem:[%s1 + $0x10] sm:$0xff]
        %v499 = vld [vmem:[%s1 + $0x18] sm:$0xff]
        %v500 = vld [vmem:[%s1 + $0x20] sm:$0xff]
        %v501 = vld [vmem:[%s1 + $0x28] sm:$0xff]
        %v502 = vld [vmem:[%s1 + $0x30] sm:$0xff]
        %v503 = vld [vmem:[%s1 + $0x38] sm:$0xff]
        %v504 = vld [vmem:[%s1 + $0x40] sm:$0xff]
        %v505 = vld [vmem:[%s1 + $0x48] sm:$0xff]
        %v506 = vld [vmem:[%s1 + $0x50] sm:$0xff]
        %v507 = vld [vmem:[%s1 + $0x58] sm:$0xff]
        %v508 = vld [vmem:[%s1 + $0x60] sm:$0xff]
        %v509 = vld [vmem:[%s1 + $0x68] sm:$0xff]
        %v510 = vld [vmem:[%s1 + $0x70] sm:$0xff]
        %v511 = vld [vmem:[%s1 + $0x78] sm:$0xff]
        %512 = vmatprep.subr.mxu0 0.0
        %513 = vmatpush1.msra.mxu0 %v511
        %514 = vmatprep.subr.mxu0 0.0
        %515 = vmatpush1.msra.mxu0 %v510
        %516 = vmatprep.subr.mxu0 0.0
        %517 = vmatpush1.msra.mxu0 %v509
        %518 = vmatprep.subr.mxu0 0.0
        %519 = vmatpush1.msra.mxu0 %v508
        %520 = vmatprep.subr.mxu0 0.0
        %521 = vmatpush1.msra.mxu0 %v507
        %522 = vmatprep.subr.mxu0 0.0
        %523 = vmatpush1.msra.mxu0 %v506
        %524 = vmatprep.subr.mxu0 0.0
        %525 = vmatpush1.msra.mxu0 %v505
        %526 = vmatprep.subr.mxu0 0.0
        %527 = vmatpush1.msra.mxu0 %v504
        %528 = vmatprep.subr.mxu0 0.0
        %529 = vmatpush1.msra.mxu0 %v503
        %530 = vmatprep.subr.mxu0 0.0
        %531 = vmatpush1.msra.mxu0 %v502
        %532 = vmatprep.subr.mxu0 0.0
        %533 = vmatpush1.msra.mxu0 %v501
        %534 = vmatprep.subr.mxu0 0.0
        %535 = vmatpush1.msra.mxu0 %v500
        %536 = vmatprep.subr.mxu0 0.0
        %537 = vmatpush1.msra.mxu0 %v499
        %538 = vmatprep.subr.mxu0 0.0
        %539 = vmatpush1.msra.mxu0 %v498
        %540 = vmatprep.subr.mxu0 0.0
        %541 = vmatpush1.msra.mxu0 %v497
        %542 = vmatprep.subr.mxu0 0.0
        %543 = vmatpush1.msra.mxu0 %v496
        %544 = vmatprep.subr.mxu0 0.0
        %545 = vmatpush2.msra.mxu0 0.0
        %546 = vmatprep.subr.mxu0 0.0
        %547 = vmatpush2.msra.mxu0 0.0
        %548 = vmatprep.subr.mxu0 0.0
        %549 = vmatpush2.msra.mxu0 0.0
        %550 = vmatprep.subr.mxu0 0.0
        %551 = vmatpush2.msra.mxu0 0.0
        %552 = vmatprep.subr.mxu0 0.0
        %553 = vmatpush2.msra.mxu0 0.0
        %554 = vmatprep.subr.mxu0 0.0
        %555 = vmatpush2.msra.mxu0 0.0
        %556 = vmatprep.subr.mxu0 0.0
        %557 = vmatpush2.msra.mxu0 0.0
        %558 = vmatprep.subr.mxu0 0.0
        %559 = vmatpush2.msra.mxu0 0.0
        %560 = vmatprep.subr.mxu0 0.0
        %561 = vmatpush2.msra.mxu0 0.0
        %562 = vmatprep.subr.mxu0 0.0
        %563 = vmatpush2.msra.mxu0 0.0
        %564 = vmatprep.subr.mxu0 0.0
        %565 = vmatpush2.msra.mxu0 0.0
        %566 = vmatprep.subr.mxu0 0.0
        %567 = vmatpush2.msra.mxu0 0.0
        %568 = vmatprep.subr.mxu0 0.0
        %569 = vmatpush2.msra.mxu0 0.0
        %570 = vmatprep.subr.mxu0 0.0
        %571 = vmatpush2.msra.mxu0 0.0
        %572 = vmatprep.subr.mxu0 0.0
        %573 = vmatpush2.msra.mxu0 0.0
        %574 = vmatprep.subr.mxu0 0.0
        %575 = vmatpush2.msra.mxu0 0.0
        %576 = vmatprep.mubr.f32.mxu0 0.0
        %577 = vmatmul.mubr.f32.gmra.mxu0 %v494
        %v578 = vpop.f32.mrf.mxu0
        %v579 = vadd.f32 0.0, %v578
        %v580 = vpop.f32.mrf.mxu0
        %581 = vmatprep.mubr.f32.mxu0 0.0
        %582 = vmatmul.mubr.f32.gmra.mxu0 %v495
        %v583 = vpop.f32.mrf.mxu0
        %v584 = vadd.f32 0.0, %v583
        %v585 = vpop.f32.mrf.mxu0
        %586 = vdwg.mxu0
        %v587 = vld [vmem:[%s2] sm:$0xff]
        %v588 = vld [vmem:[%s2 + $0x8] sm:$0xff]
        %v589 = vld [vmem:[%s2 + $0x10] sm:$0xff]
        %v590 = vld [vmem:[%s2 + $0x18] sm:$0xff]
        %v591 = vld [vmem:[%s2 + $0x20] sm:$0xff]
        %v592 = vld [vmem:[%s2 + $0x28] sm:$0xff]
        %v593 = vld [vmem:[%s2 + $0x30] sm:$0xff]
        %v594 = vld [vmem:[%s2 + $0x38] sm:$0xff]
        %v595 = vld [vmem:[%s2 + $0x40] sm:$0xff]
        %v596 = vld [vmem:[%s2 + $0x48] sm:$0xff]
        %v597 = vld [vmem:[%s2 + $0x50] sm:$0xff]
        %v598 = vld [vmem:[%s2 + $0x58] sm:$0xff]
        %v599 = vld [vmem:[%s2 + $0x60] sm:$0xff]
        %v600 = vld [vmem:[%s2 + $0x68] sm:$0xff]
        %v601 = vld [vmem:[%s2 + $0x70] sm:$0xff]
        %v602 = vld [vmem:[%s2 + $0x78] sm:$0xff]
        %603 = vmatprep.subr.mxu0 0.0
        %604 = vmatpush1.msra.mxu0 %v602
        %605 = vmatprep.subr.mxu0 0.0
        %606 = vmatpush1.msra.mxu0 %v601
        %607 = vmatprep.subr.mxu0 0.0
        %608 = vmatpush1.msra.mxu0 %v600
        %609 = vmatprep.subr.mxu0 0.0
        %610 = vmatpush1.msra.mxu0 %v599
        %611 = vmatprep.subr.mxu0 0.0
        %612 = vmatpush1.msra.mxu0 %v598
        %613 = vmatprep.subr.mxu0 0.0
        %614 = vmatpush1.msra.mxu0 %v597
        %615 = vmatprep.subr.mxu0 0.0
        %616 = vmatpush1.msra.mxu0 %v596
        %617 = vmatprep.subr.mxu0 0.0
        %618 = vmatpush1.msra.mxu0 %v595
        %619 = vmatprep.subr.mxu0 0.0
        %620 = vmatpush1.msra.mxu0 %v594
        %621 = vmatprep.subr.mxu0 0.0
        %622 = vmatpush1.msra.mxu0 %v593
        %623 = vmatprep.subr.mxu0 0.0
        %624 = vmatpush1.msra.mxu0 %v592
        %625 = vmatprep.subr.mxu0 0.0
        %626 = vmatpush1.msra.mxu0 %v591
        %627 = vmatprep.subr.mxu0 0.0
        %628 = vmatpush1.msra.mxu0 %v590
        %629 = vmatprep.subr.mxu0 0.0
        %630 = vmatpush1.msra.mxu0 %v589
        %631 = vmatprep.subr.mxu0 0.0
        %632 = vmatpush1.msra.mxu0 %v588
        %633 = vmatprep.subr.mxu0 0.0
        %634 = vmatpush1.msra.mxu0 %v587
        %635 = vmatprep.subr.mxu0 0.0
        %636 = vmatpush2.msra.mxu0 0.0
        %637 = vmatprep.subr.mxu0 0.0
        %638 = vmatpush2.msra.mxu0 0.0
        %639 = vmatprep.subr.mxu0 0.0
        %640 = vmatpush2.msra.mxu0 0.0
        %641 = vmatprep.subr.mxu0 0.0
        %642 = vmatpush2.msra.mxu0 0.0
        %643 = vmatprep.subr.mxu0 0.0
        %644 = vmatpush2.msra.mxu0 0.0
        %645 = vmatprep.subr.mxu0 0.0
        %646 = vmatpush2.msra.mxu0 0.0
        %647 = vmatprep.subr.mxu0 0.0
        %648 = vmatpush2.msra.mxu0 0.0
        %649 = vmatprep.subr.mxu0 0.0
        %650 = vmatpush2.msra.mxu0 0.0
        %651 = vmatprep.subr.mxu0 0.0
        %652 = vmatpush2.msra.mxu0 0.0
        %653 = vmatprep.subr.mxu0 0.0
        %654 = vmatpush2.msra.mxu0 0.0
        %655 = vmatprep.subr.mxu0 0.0
        %656 = vmatpush2.msra.mxu0 0.0
        %657 = vmatprep.subr.mxu0 0.0
        %658 = vmatpush2.msra.mxu0 0.0
        %659 = vmatprep.subr.mxu0 0.0
        %660 = vmatpush2.msra.mxu0 0.0
        %661 = vmatprep.subr.mxu0 0.0
        %662 = vmatpush2.msra.mxu0 0.0
        %663 = vmatprep.subr.mxu0 0.0
        %664 = vmatpush2.msra.mxu0 0.0
        %665 = vmatprep.subr.mxu0 0.0
        %666 = vmatpush2.msra.mxu0 0.0
        %667 = vmatprep.mubr.f32.mxu0 0.0
        %668 = vmatmul.mubr.f32.gmra.mxu0 %v494
        %v669 = vpop.f32.mrf.mxu0
        %v670 = vadd.f32 0.0, %v669
        %v671 = vpop.f32.mrf.mxu0
        %672 = vmatprep.mubr.f32.mxu0 0.0
        %673 = vmatmul.mubr.f32.gmra.mxu0 %v495
        %v674 = vpop.f32.mrf.mxu0
        %v675 = vadd.f32 0.0, %v674
        %v676 = vpop.f32.mrf.mxu0
        %677 = vdwg.mxu0
        %v678 = vld [vmem:[%s3] sm:$0xff]
        %v679 = vld [vmem:[%s3 + $0x8] sm:$0xff]
        %v680 = vld [vmem:[%s3 + $0x10] sm:$0xff]
        %v681 = vld [vmem:[%s3 + $0x18] sm:$0xff]
        %v682 = vld [vmem:[%s3 + $0x20] sm:$0xff]
        %v683 = vld [vmem:[%s3 + $0x28] sm:$0xff]
        %v684 = vld [vmem:[%s3 + $0x30] sm:$0xff]
        %v685 = vld [vmem:[%s3 + $0x38] sm:$0xff]
        %v686 = vld [vmem:[%s3 + $0x40] sm:$0xff]
        %v687 = vld [vmem:[%s3 + $0x48] sm:$0xff]
        %v688 = vld [vmem:[%s3 + $0x50] sm:$0xff]
        %v689 = vld [vmem:[%s3 + $0x58] sm:$0xff]
        %v690 = vld [vmem:[%s3 + $0x60] sm:$0xff]
        %v691 = vld [vmem:[%s3 + $0x68] sm:$0xff]
        %v692 = vld [vmem:[%s3 + $0x70] sm:$0xff]
        %v693 = vld [vmem:[%s3 + $0x78] sm:$0xff]
        %694 = vmatprep.subr.mxu0 0.0
        %695 = vmatpush1.msra.mxu0 %v693
        %696 = vmatprep.subr.mxu0 0.0
        %697 = vmatpush1.msra.mxu0 %v692
        %698 = vmatprep.subr.mxu0 0.0
        %699 = vmatpush1.msra.mxu0 %v691
        %700 = vmatprep.subr.mxu0 0.0
        %701 = vmatpush1.msra.mxu0 %v690
        %702 = vmatprep.subr.mxu0 0.0
        %703 = vmatpush1.msra.mxu0 %v689
        %704 = vmatprep.subr.mxu0 0.0
        %705 = vmatpush1.msra.mxu0 %v688
        %706 = vmatprep.subr.mxu0 0.0
        %707 = vmatpush1.msra.mxu0 %v687
        %708 = vmatprep.subr.mxu0 0.0
        %709 = vmatpush1.msra.mxu0 %v686
        %710 = vmatprep.subr.mxu0 0.0
        %711 = vmatpush1.msra.mxu0 %v685
        %712 = vmatprep.subr.mxu0 0.0
        %713 = vmatpush1.msra.mxu0 %v684
        %714 = vmatprep.subr.mxu0 0.0
        %715 = vmatpush1.msra.mxu0 %v683
        %716 = vmatprep.subr.mxu0 0.0
        %717 = vmatpush1.msra.mxu0 %v682
        %718 = vmatprep.subr.mxu0 0.0
        %719 = vmatpush1.msra.mxu0 %v681
        %720 = vmatprep.subr.mxu0 0.0
        %721 = vmatpush1.msra.mxu0 %v680
        %722 = vmatprep.subr.mxu0 0.0
        %723 = vmatpush1.msra.mxu0 %v679
        %724 = vmatprep.subr.mxu0 0.0
        %725 = vmatpush1.msra.mxu0 %v678
        %726 = vmatprep.subr.mxu0 0.0
        %727 = vmatpush2.msra.mxu0 0.0
        %728 = vmatprep.subr.mxu0 0.0
        %729 = vmatpush2.msra.mxu0 0.0
        %730 = vmatprep.subr.mxu0 0.0
        %731 = vmatpush2.msra.mxu0 0.0
        %732 = vmatprep.subr.mxu0 0.0
        %733 = vmatpush2.msra.mxu0 0.0
        %734 = vmatprep.subr.mxu0 0.0
        %735 = vmatpush2.msra.mxu0 0.0
        %736 = vmatprep.subr.mxu0 0.0
        %737 = vmatpush2.msra.mxu0 0.0
        %738 = vmatprep.subr.mxu0 0.0
        %739 = vmatpush2.msra.mxu0 0.0
        %740 = vmatprep.subr.mxu0 0.0
        %741 = vmatpush2.msra.mxu0 0.0
        %742 = vmatprep.subr.mxu0 0.0
        %743 = vmatpush2.msra.mxu0 0.0
        %744 = vmatprep.subr.mxu0 0.0
        %745 = vmatpush2.msra.mxu0 0.0
        %746 = vmatprep.subr.mxu0 0.0
        %747 = vmatpush2.msra.mxu0 0.0
        %748 = vmatprep.subr.mxu0 0.0
        %749 = vmatpush2.msra.mxu0 0.0
        %750 = vmatprep.subr.mxu0 0.0
        %751 = vmatpush2.msra.mxu0 0.0
        %752 = vmatprep.subr.mxu0 0.0
        %753 = vmatpush2.msra.mxu0 0.0
        %754 = vmatprep.subr.mxu0 0.0
        %755 = vmatpush2.msra.mxu0 0.0
        %756 = vmatprep.subr.mxu0 0.0
        %757 = vmatpush2.msra.mxu0 0.0
        %758 = vmatprep.mubr.f32.mxu0 0.0
        %759 = vmatmul.mubr.f32.gmra.mxu0 %v494
        %v760 = vpop.f32.mrf.mxu0
        %v761 = vadd.f32 0.0, %v760
        %v762 = vpop.f32.mrf.mxu0
        %763 = vmatprep.mubr.f32.mxu0 0.0
        %764 = vmatmul.mubr.f32.gmra.mxu0 %v495
        %v765 = vpop.f32.mrf.mxu0
        %v766 = vadd.f32 0.0, %v765
        %v767 = vpop.f32.mrf.mxu0
        %768 = vdwg.mxu0
        %vm769 = vcmask 130048
        %v771 = vsel %vm769, %v579, 0
        %v774 = vsel %vm769, %v584, 0
        %v777 = vsel %vm769, %v670, 0
        %v780 = vsel %vm769, %v675, 0
        %782 = vmatprep.subr.mxu0 0.0
        %783 = vmatpush1.xpose.msra.mxu0 0.0
        %784 = vmatprep.subr.mxu0 0.0
        %785 = vmatpush1.xpose.msra.mxu0 0.0
        %786 = vmatprep.subr.mxu0 0.0
        %787 = vmatpush1.xpose.msra.mxu0 0.0
        %788 = vmatprep.subr.mxu0 0.0
        %789 = vmatpush1.xpose.msra.mxu0 0.0
        %790 = vmatprep.subr.mxu0 0.0
        %791 = vmatpush1.xpose.msra.mxu0 0.0
        %792 = vmatprep.subr.mxu0 0.0
        %793 = vmatpush1.xpose.msra.mxu0 0.0
        %794 = vmatprep.subr.mxu0 0.0
        %795 = vmatpush1.xpose.msra.mxu0 0.0
        %796 = vmatprep.subr.mxu0 0.0
        %797 = vmatpush1.xpose.msra.mxu0 0.0
        %798 = vmatprep.subr.mxu0 0.0
        %799 = vmatpush1.xpose.msra.mxu0 0.0
        %800 = vmatprep.subr.mxu0 0.0
        %801 = vmatpush1.xpose.msra.mxu0 0.0
        %802 = vmatprep.subr.mxu0 0.0
        %803 = vmatpush1.xpose.msra.mxu0 0.0
        %804 = vmatprep.subr.mxu0 0.0
        %805 = vmatpush1.xpose.msra.mxu0 0.0
        %806 = vmatprep.subr.mxu0 0.0
        %807 = vmatpush1.xpose.msra.mxu0 0.0
        %808 = vmatprep.subr.mxu0 0.0
        %809 = vmatpush1.xpose.msra.mxu0 0.0
        %810 = vmatprep.subr.mxu0 0.0
        %811 = vmatpush1.xpose.msra.mxu0 %v780
        %812 = vmatprep.subr.mxu0 0.0
        %813 = vmatpush1.xpose.msra.mxu0 %v777
        %814 = vmatprep.subr.mxu0 0.0
        %815 = vmatpush2.xpose.msra.mxu0 0.0
        %816 = vmatprep.subr.mxu0 0.0
        %817 = vmatpush2.xpose.msra.mxu0 0.0
        %818 = vmatprep.subr.mxu0 0.0
        %819 = vmatpush2.xpose.msra.mxu0 0.0
        %820 = vmatprep.subr.mxu0 0.0
        %821 = vmatpush2.xpose.msra.mxu0 0.0
        %822 = vmatprep.subr.mxu0 0.0
        %823 = vmatpush2.xpose.msra.mxu0 0.0
        %824 = vmatprep.subr.mxu0 0.0
        %825 = vmatpush2.xpose.msra.mxu0 0.0
        %826 = vmatprep.subr.mxu0 0.0
        %827 = vmatpush2.xpose.msra.mxu0 0.0
        %828 = vmatprep.subr.mxu0 0.0
        %829 = vmatpush2.xpose.msra.mxu0 0.0
        %830 = vmatprep.subr.mxu0 0.0
        %831 = vmatpush2.xpose.msra.mxu0 0.0
        %832 = vmatprep.subr.mxu0 0.0
        %833 = vmatpush2.xpose.msra.mxu0 0.0
        %834 = vmatprep.subr.mxu0 0.0
        %835 = vmatpush2.xpose.msra.mxu0 0.0
        %836 = vmatprep.subr.mxu0 0.0
        %837 = vmatpush2.xpose.msra.mxu0 0.0
        %838 = vmatprep.subr.mxu0 0.0
        %839 = vmatpush2.xpose.msra.mxu0 0.0
        %840 = vmatprep.subr.mxu0 0.0
        %841 = vmatpush2.xpose.msra.mxu0 0.0
        %842 = vmatprep.subr.mxu0 0.0
        %843 = vmatpush2.xpose.msra.mxu0 0.0
        %844 = vmatprep.subr.mxu0 0.0
        %845 = vmatpush2.xpose.msra.mxu0 0.0
        %846 = vmatprep.mubr.f32.mxu0 0.0
        %847 = vmatmul.mubr.f32.gmra.mxu0 %v771
        %v848 = vpop.f32.mrf.mxu0
        %v849 = vadd.f32 0.0, %v848
        %v850 = vpop.f32.mrf.mxu0
        %851 = vmatprep.mubr.f32.mxu0 0.0
        %852 = vmatmul.mubr.f32.gmra.mxu0 %v774
        %v853 = vpop.f32.mrf.mxu0
        %v854 = vadd.f32 0.0, %v853
        %v855 = vpop.f32.mrf.mxu0
        %856 = vdwg.mxu0
        %v857 = vmul.f32 %v849, 0.25
        %v858 = vmul.f32 %v854, 0.25
        %v859 = vsel %vm769, %v857, -inf
        %860 = vmax.xlane.f32.xlu0 %v859
        %v861 = vpop.xlane.xlu0 %860
        %v862 = vsel %vm769, %v858, -inf
        %863 = vmax.xlane.f32.xlu0 %v862
        %v864 = vpop.xlane.xlu0 %863
        %v865 = vsub.f32 %v857, %v861
        %v866 = vsub.f32 %v858, %v864
        %v867 = vmul.f32 %v865, 1.442695
        %v868 = vpow.pop %v867
        %v869 = vmul.f32 %v866, 1.442695
        %v870 = vpow.pop %v869
        %v871 = vsel %vm769, %v868, 0.0
        %872 = vadd.xlane.f32.xlu0 %v871
        %v873 = vpop.xlane.xlu0 %872
        %v874 = vsel %vm769, %v870, 0.0
        %875 = vadd.xlane.f32.xlu0 %v874
        %v876 = vpop.xlane.xlu0 %875
        %v877 = vrcp.pop %v873
        %v878 = vmul.f32 %v868, %v877
        %v879 = vrcp.pop %v876
        %v880 = vmul.f32 %v870, %v879
        %v882 = vsel %vm769, %v878, 0
        %v885 = vsel %vm769, %v880, 0
        %887 = vmatprep.subr.mxu0 0.0
        %888 = vmatpush1.msra.mxu0 0.0
        %889 = vmatprep.subr.mxu0 0.0
        %890 = vmatpush1.msra.mxu0 0.0
        %891 = vmatprep.subr.mxu0 0.0
        %892 = vmatpush1.msra.mxu0 0.0
        %893 = vmatprep.subr.mxu0 0.0
        %894 = vmatpush1.msra.mxu0 0.0
        %895 = vmatprep.subr.mxu0 0.0
        %896 = vmatpush1.msra.mxu0 0.0
        %897 = vmatprep.subr.mxu0 0.0
        %898 = vmatpush1.msra.mxu0 0.0
        %899 = vmatprep.subr.mxu0 0.0
        %900 = vmatpush1.msra.mxu0 0.0
        %901 = vmatprep.subr.mxu0 0.0
        %902 = vmatpush1.msra.mxu0 0.0
        %903 = vmatprep.subr.mxu0 0.0
        %904 = vmatpush1.msra.mxu0 0.0
        %905 = vmatprep.subr.mxu0 0.0
        %906 = vmatpush1.msra.mxu0 0.0
        %907 = vmatprep.subr.mxu0 0.0
        %908 = vmatpush1.msra.mxu0 0.0
        %909 = vmatprep.subr.mxu0 0.0
        %910 = vmatpush1.msra.mxu0 0.0
        %911 = vmatprep.subr.mxu0 0.0
        %912 = vmatpush1.msra.mxu0 0.0
        %913 = vmatprep.subr.mxu0 0.0
        %914 = vmatpush1.msra.mxu0 0.0
        %915 = vmatprep.subr.mxu0 0.0
        %916 = vmatpush1.msra.mxu0 %v766
        %917 = vmatprep.subr.mxu0 0.0
        %918 = vmatpush1.msra.mxu0 %v761
        %919 = vmatprep.subr.mxu0 0.0
        %920 = vmatpush2.msra.mxu0 0.0
        %921 = vmatprep.subr.mxu0 0.0
        %922 = vmatpush2.msra.mxu0 0.0
        %923 = vmatprep.subr.mxu0 0.0
        %924 = vmatpush2.msra.mxu0 0.0
        %925 = vmatprep.subr.mxu0 0.0
        %926 = vmatpush2.msra.mxu0 0.0
        %927 = vmatprep.subr.mxu0 0.0
        %928 = vmatpush2.msra.mxu0 0.0
        %929 = vmatprep.subr.mxu0 0.0
        %930 = vmatpush2.msra.mxu0 0.0
        %931 = vmatprep.subr.mxu0 0.0
        %932 = vmatpush2.msra.mxu0 0.0
        %933 = vmatprep.subr.mxu0 0.0
        %934 = vmatpush2.msra.mxu0 0.0
        %935 = vmatprep.subr.mxu0 0.0
        %936 = vmatpush2.msra.mxu0 0.0
        %937 = vmatprep.subr.mxu0 0.0
        %938 = vmatpush2.msra.mxu0 0.0
        %939 = vmatprep.subr.mxu0 0.0
        %940 = vmatpush2.msra.mxu0 0.0
        %941 = vmatprep.subr.mxu0 0.0
        %942 = vmatpush2.msra.mxu0 0.0
        %943 = vmatprep.subr.mxu0 0.0
        %944 = vmatpush2.msra.mxu0 0.0
        %945 = vmatprep.subr.mxu0 0.0
        %946 = vmatpush2.msra.mxu0 0.0
        %947 = vmatprep.subr.mxu0 0.0
        %948 = vmatpush2.msra.mxu0 0.0
        %949 = vmatprep.subr.mxu0 0.0
        %950 = vmatpush2.msra.mxu0 0.0
        %951 = vmatprep.mubr.f32.mxu0 0.0
        %952 = vmatmul.mubr.f32.gmra.mxu0 %v882
        %v953 = vpop.f32.mrf.mxu0
        %v954 = vadd.f32 0.0, %v953
        %v955 = vpop.f32.mrf.mxu0
        %956 = vmatprep.mubr.f32.mxu0 0.0
        %957 = vmatmul.mubr.f32.gmra.mxu0 %v885
        %v958 = vpop.f32.mrf.mxu0
        %v959 = vadd.f32 0.0, %v958
        %v960 = vpop.f32.mrf.mxu0
        %961 = vdwg.mxu0
        %v962 = vld [vmem:[%s4] sm:$0xff]
        %v963 = vld [vmem:[%s4 + $0x8] sm:$0xff]
        %v965 = vsel %vm769, %v954, 0
        %v968 = vsel %vm769, %v959, 0
        %970 = vmatprep.subr.mxu0 0.0
        %971 = vmatpush1.msra.mxu0 0.0
        %972 = vmatprep.subr.mxu0 0.0
        %973 = vmatpush1.msra.mxu0 0.0
        %974 = vmatprep.subr.mxu0 0.0
        %975 = vmatpush1.msra.mxu0 0.0
        %976 = vmatprep.subr.mxu0 0.0
        %977 = vmatpush1.msra.mxu0 0.0
        %978 = vmatprep.subr.mxu0 0.0
        %979 = vmatpush1.msra.mxu0 0.0
        %980 = vmatprep.subr.mxu0 0.0
        %981 = vmatpush1.msra.mxu0 0.0
        %982 = vmatprep.subr.mxu0 0.0
        %983 = vmatpush1.msra.mxu0 0.0
        %984 = vmatprep.subr.mxu0 0.0
        %985 = vmatpush1.msra.mxu0 0.0
        %986 = vmatprep.subr.mxu0 0.0
        %987 = vmatpush1.msra.mxu0 0.0
        %988 = vmatprep.subr.mxu0 0.0
        %989 = vmatpush1.msra.mxu0 0.0
        %990 = vmatprep.subr.mxu0 0.0
        %991 = vmatpush1.msra.mxu0 0.0
        %992 = vmatprep.subr.mxu0 0.0
        %993 = vmatpush1.msra.mxu0 0.0
        %994 = vmatprep.subr.mxu0 0.0
        %995 = vmatpush1.msra.mxu0 0.0
        %996 = vmatprep.subr.mxu0 0.0
        %997 = vmatpush1.msra.mxu0 0.0
        %998 = vmatprep.subr.mxu0 0.0
        %999 = vmatpush1.msra.mxu0 %v963
        %1000 = vmatprep.subr.mxu0 0.0
        %1001 = vmatpush1.msra.mxu0 %v962
        %1002 = vmatprep.subr.mxu0 0.0
        %1003 = vmatpush2.msra.mxu0 0.0
        %1004 = vmatprep.subr.mxu0 0.0
        %1005 = vmatpush2.msra.mxu0 0.0
        %1006 = vmatprep.subr.mxu0 0.0
        %1007 = vmatpush2.msra.mxu0 0.0
        %1008 = vmatprep.subr.mxu0 0.0
        %1009 = vmatpush2.msra.mxu0 0.0
        %1010 = vmatprep.subr.mxu0 0.0
        %1011 = vmatpush2.msra.mxu0 0.0
        %1012 = vmatprep.subr.mxu0 0.0
        %1013 = vmatpush2.msra.mxu0 0.0
        %1014 = vmatprep.subr.mxu0 0.0
        %1015 = vmatpush2.msra.mxu0 0.0
        %1016 = vmatprep.subr.mxu0 0.0
        %1017 = vmatpush2.msra.mxu0 0.0
        %1018 = vmatprep.subr.mxu0 0.0
        %1019 = vmatpush2.msra.mxu0 0.0
        %1020 = vmatprep.subr.mxu0 0.0
        %1021 = vmatpush2.msra.mxu0 0.0
        %1022 = vmatprep.subr.mxu0 0.0
        %1023 = vmatpush2.msra.mxu0 0.0
        %1024 = vmatprep.subr.mxu0 0.0
        %1025 = vmatpush2.msra.mxu0 0.0
        %1026 = vmatprep.subr.mxu0 0.0
        %1027 = vmatpush2.msra.mxu0 0.0
        %1028 = vmatprep.subr.mxu0 0.0
        %1029 = vmatpush2.msra.mxu0 0.0
        %1030 = vmatprep.subr.mxu0 0.0
        %1031 = vmatpush2.msra.mxu0 0.0
        %1032 = vmatprep.subr.mxu0 0.0
        %1033 = vmatpush2.msra.mxu0 0.0
        %1034 = vmatprep.mubr.f32.mxu0 0.0
        %1035 = vmatmul.mubr.f32.gmra.mxu0 %v965
        %v1036 = vpop.f32.mrf.mxu0
        %v1037 = vadd.f32 0.0, %v1036
        %v1038 = vpop.f32.mrf.mxu0
        %1039 = vmatprep.mubr.f32.mxu0 0.0
        %1040 = vmatmul.mubr.f32.gmra.mxu0 %v968
        %v1041 = vpop.f32.mrf.mxu0
        %v1042 = vadd.f32 0.0, %v1041
        %v1043 = vpop.f32.mrf.mxu0
        %1044 = vdwg.mxu0
        %v1045 = vadd.f32 %v494, %v1037
        %v1046 = vadd.f32 %v495, %v1042
        %v1047 = vld [vmem:[%s5] sm:$0x1]
        %v1048 = vld [vmem:[%s6] sm:$0x1]
        %1049 = vadd.xlane.f32.xlu0 %v1045
        %v1050 = vpop.xlane.xlu0 %1049
        %1051 = vadd.xlane.f32.xlu0 %v1046
        %v1052 = vpop.xlane.xlu0 %1051
        %v1053 = vrcp.pop 128.0
        %v1054 = vmul.f32 %v1050, %v1053
        %v1055 = vmul.f32 %v1052, %v1053
        %v1056 = vsub.f32 %v1045, %v1054
        %v1057 = vsub.f32 %v1046, %v1055
        %v1058 = vmul.f32 %v1056, %v1056
        %v1059 = vmul.f32 %v1057, %v1057
        %1060 = vadd.xlane.f32.xlu0 %v1058
        %v1061 = vpop.xlane.xlu0 %1060
        %1062 = vadd.xlane.f32.xlu0 %v1059
        %v1063 = vpop.xlane.xlu0 %1062
        %v1064 = vmul.f32 %v1061, %v1053
        %v1065 = vmul.f32 %v1063, %v1053
        %v1066 = vadd.f32 %v1064, 1e-05
        %v1067 = vadd.f32 %v1065, 1e-05
        %v1068 = vrsqrt.pop %v1066
        %v1069 = vrsqrt.pop %v1067
        %v1070 = vmul.f32 %v1056, %v1068
        %v1071 = vmul.f32 %v1057, %v1069
        %v1073 = vlaneseq
        %v1074 = vshrl.u32 %v1073, 7
        %v1075 = vsub.s32 0, %v1074
        %v1076 = vrot.slane %v1047, %v1075
        %v1078 = vmul.f32 %v1070, %v1076
        %v1079 = vmul.f32 %v1071, %v1076
        %v1081 = vlaneseq
        %v1082 = vshrl.u32 %v1081, 7
        %v1083 = vsub.s32 0, %v1082
        %v1084 = vrot.slane %v1048, %v1083
        %v1086 = vadd.f32 %v1078, %v1084
        %v1087 = vadd.f32 %v1079, %v1084
        %v1088 = vld [vmem:[%s7] sm:$0xff]
        %v1089 = vld [vmem:[%s7 + $0x8] sm:$0xff]
        %v1090 = vld [vmem:[%s7 + $0x10] sm:$0xff]
        %v1091 = vld [vmem:[%s7 + $0x18] sm:$0xff]
        %v1092 = vld [vmem:[%s7 + $0x20] sm:$0xff]
        %v1093 = vld [vmem:[%s7 + $0x28] sm:$0xff]
        %v1094 = vld [vmem:[%s7 + $0x30] sm:$0xff]
        %v1095 = vld [vmem:[%s7 + $0x38] sm:$0xff]
        %v1096 = vld [vmem:[%s7 + $0x40] sm:$0xff]
        %v1097 = vld [vmem:[%s7 + $0x48] sm:$0xff]
        %v1098 = vld [vmem:[%s7 + $0x50] sm:$0xff]
        %v1099 = vld [vmem:[%s7 + $0x58] sm:$0xff]
        %v1100 = vld [vmem:[%s7 + $0x60] sm:$0xff]
        %v1101 = vld [vmem:[%s7 + $0x68] sm:$0xff]
        %v1102 = vld [vmem:[%s7 + $0x70] sm:$0xff]
        %v1103 = vld [vmem:[%s7 + $0x78] sm:$0xff]
        %v1104 = vld [vmem:[%s7 + $0x80] sm:$0xff]
        %v1105 = vld [vmem:[%s7 + $0x88] sm:$0xff]
        %v1106 = vld [vmem:[%s7 + $0x90] sm:$0xff]
        %v1107 = vld [vmem:[%s7 + $0x98] sm:$0xff]
        %v1108 = vld [vmem:[%s7 + $0xa0] sm:$0xff]
        %v1109 = vld [vmem:[%s7 + $0xa8] sm:$0xff]
        %v1110 = vld [vmem:[%s7 + $0xb0] sm:$0xff]
        %v1111 = vld [vmem:[%s7 + $0xb8] sm:$0xff]
        %v1112 = vld [vmem:[%s7 + $0xc0] sm:$0xff]
        %v1113 = vld [vmem:[%s7 + $0xc8] sm:$0xff]
        %v1114 = vld [vmem:[%s7 + $0xd0] sm:$0xff]
        %v1115 = vld [vmem:[%s7 + $0xd8] sm:$0xff]
        %v1116 = vld [vmem:[%s7 + $0xe0] sm:$0xff]
        %v1117 = vld [vmem:[%s7 + $0xe8] sm:$0xff]
        %v1118 = vld [vmem:[%s7 + $0xf0] sm:$0xff]
        %v1119 = vld [vmem:[%s7 + $0xf8] sm:$0xff]
        %v1120 = vld [vmem:[%s8] sm:$0x3]
        %v1122 = vlaneseq
        %v1123 = vshrl.u32 %v1122, 7
        %v1124 = vsub.s32 0, %v1123
        %v1125 = vrot.slane %v1120, %v1124
        %v1126 = vlaneseq
        %v1127 = vshrl.u32 %v1126, 7
        %v1128 = vsub.s32 1, %v1127
        %v1129 = vrot.slane %v1120, %v1128
        %1132 = vmatprep.subr.mxu0 %v1119
        %1133 = vmatpush1.msra.mxu0 %v1118
        %1134 = vmatprep.subr.mxu0 %v1117
        %1135 = vmatpush1.msra.mxu0 %v1116
        %1136 = vmatprep.subr.mxu0 %v1115
        %1137 = vmatpush1.msra.mxu0 %v1114
        %1138 = vmatprep.subr.mxu0 %v1113
        %1139 = vmatpush1.msra.mxu0 %v1112
        %1140 = vmatprep.subr.mxu0 %v1111
        %1141 = vmatpush1.msra.mxu0 %v1110
        %1142 = vmatprep.subr.mxu0 %v1109
        %1143 = vmatpush1.msra.mxu0 %v1108
        %1144 = vmatprep.subr.mxu0 %v1107
        %1145 = vmatpush1.msra.mxu0 %v1106
        %1146 = vmatprep.subr.mxu0 %v1105
        %1147 = vmatpush1.msra.mxu0 %v1104
        %1148 = vmatprep.subr.mxu0 %v1103
        %1149 = vmatpush1.msra.mxu0 %v1102
        %1150 = vmatprep.subr.mxu0 %v1101
        %1151 = vmatpush1.msra.mxu0 %v1100
        %1152 = vmatprep.subr.mxu0 %v1099
        %1153 = vmatpush1.msra.mxu0 %v1098
        %1154 = vmatprep.subr.mxu0 %v1097
        %1155 = vmatpush1.msra.mxu0 %v1096
        %1156 = vmatprep.subr.mxu0 %v1095
        %1157 = vmatpush1.msra.mxu0 %v1094
        %1158 = vmatprep.subr.mxu0 %v1093
        %1159 = vmatpush1.msra.mxu0 %v1092
        %1160 = vmatprep.subr.mxu0 %v1091
        %1161 = vmatpush1.msra.mxu0 %v1090
        %1162 = vmatprep.subr.mxu0 %v1089
        %1163 = vmatpush1.msra.mxu0 %v1088
        %1164 = vmatprep.subr.mxu0 0.0
        %1165 = vmatpush2.msra.mxu0 0.0
        %1166 = vmatprep.subr.mxu0 0.0
        %1167 = vmatpush2.msra.mxu0 0.0
        %1168 = vmatprep.subr.mxu0 0.0
        %1169 = vmatpush2.msra.mxu0 0.0
        %1170 = vmatprep.subr.mxu0 0.0
        %1171 = vmatpush2.msra.mxu0 0.0
        %1172 = vmatprep.subr.mxu0 0.0
        %1173 = vmatpush2.msra.mxu0 0.0
        %1174 = vmatprep.subr.mxu0 0.0
        %1175 = vmatpush2.msra.mxu0 0.0
        %1176 = vmatprep.subr.mxu0 0.0
        %1177 = vmatpush2.msra.mxu0 0.0
        %1178 = vmatprep.subr.mxu0 0.0
        %1179 = vmatpush2.msra.mxu0 0.0
        %1180 = vmatprep.subr.mxu0 0.0
        %1181 = vmatpush2.msra.mxu0 0.0
        %1182 = vmatprep.subr.mxu0 0.0
        %1183 = vmatpush2.msra.mxu0 0.0
        %1184 = vmatprep.subr.mxu0 0.0
        %1185 = vmatpush2.msra.mxu0 0.0
        %1186 = vmatprep.subr.mxu0 0.0
        %1187 = vmatpush2.msra.mxu0 0.0
        %1188 = vmatprep.subr.mxu0 0.0
        %1189 = vmatpush2.msra.mxu0 0.0
        %1190 = vmatprep.subr.mxu0 0.0
        %1191 = vmatpush2.msra.mxu0 0.0
        %1192 = vmatprep.subr.mxu0 0.0
        %1193 = vmatpush2.msra.mxu0 0.0
        %1194 = vmatprep.subr.mxu0 0.0
        %1195 = vmatpush2.msra.mxu0 0.0
        %1196 = vmatprep.mubr.f32.mxu0 0.0
        %1197 = vmatmul.mubr.f32.gmra.mxu0 %v1086
        %v1198 = vpop.f32.mrf.mxu0
        %v1199 = vadd.f32 %v1125, %v1198
        %v1200 = vpop.f32.mrf.mxu0
        %v1201 = vadd.f32 %v1129, %v1200
        %1202 = vmatprep.mubr.f32.mxu0 0.0
        %1203 = vmatmul.mubr.f32.gmra.mxu0 %v1087
        %v1204 = vpop.f32.mrf.mxu0
        %v1205 = vadd.f32 %v1125, %v1204
        %v1206 = vpop.f32.mrf.mxu0
        %v1207 = vadd.f32 %v1129, %v1206
        %1208 = vdwg.mxu0
        %v1209 = vmax.f32 %v1199, 0.0
        %v1210 = vmax.f32 %v1201, 0.0
        %v1211 = vmax.f32 %v1205, 0.0
        %v1212 = vmax.f32 %v1207, 0.0
        %v1213 = vld [vmem:[#allocation2] sm:$0xff]
        %v1214 = vld [vmem:[#allocation2 + $0x8] sm:$0xff]
        %v1215 = vld [vmem:[#allocation2 + $0x10] sm:$0xff]
        %v1216 = vld [vmem:[#allocation2 + $0x18] sm:$0xff]
        %v1217 = vld [vmem:[#allocation2 + $0x20] sm:$0xff]
        %v1218 = vld [vmem:[#allocation2 + $0x28] sm:$0xff]
        %v1219 = vld [vmem:[#allocation2 + $0x30] sm:$0xff]
        %v1220 = vld [vmem:[#allocation2 + $0x38] sm:$0xff]
        %v1221 = vld [vmem:[#allocation2 + $0x40] sm:$0xff]
        %v1222 = vld [vmem:[#allocation2 + $0x48] sm:$0xff]
        %v1223 = vld [vmem:[#allocation2 + $0x50] sm:$0xff]
        %v1224 = vld [vmem:[#allocation2 + $0x58] sm:$0xff]
        %v1225 = vld [vmem:[#allocation2 + $0x60] sm:$0xff]
        %v1226 = vld [vmem:[#allocation2 + $0x68] sm:$0xff]
        %v1227 = vld [vmem:[#allocation2 + $0x70] sm:$0xff]
        %v1228 = vld [vmem:[#allocation2 + $0x78] sm:$0xff]
        %v1229 = vld [vmem:[#allocation2 + $0x80] sm:$0xff]
        %v1230 = vld [vmem:[#allocation2 + $0x88] sm:$0xff]
        %v1231 = vld [vmem:[#allocation2 + $0x90] sm:$0xff]
        %v1232 = vld [vmem:[#allocation2 + $0x98] sm:$0xff]
        %v1233 = vld [vmem:[#allocation2 + $0xa0] sm:$0xff]
        %v1234 = vld [vmem:[#allocation2 + $0xa8] sm:$0xff]
        %v1235 = vld [vmem:[#allocation2 + $0xb0] sm:$0xff]
        %v1236 = vld [vmem:[#allocation2 + $0xb8] sm:$0xff]
        %v1237 = vld [vmem:[#allocation2 + $0xc0] sm:$0xff]
        %v1238 = vld [vmem:[#allocation2 + $0xc8] sm:$0xff]
        %v1239 = vld [vmem:[#allocation2 + $0xd0] sm:$0xff]
        %v1240 = vld [vmem:[#allocation2 + $0xd8] sm:$0xff]
        %v1241 = vld [vmem:[#allocation2 + $0xe0] sm:$0xff]
        %v1242 = vld [vmem:[#allocation2 + $0xe8] sm:$0xff]
        %v1243 = vld [vmem:[#allocation2 + $0xf0] sm:$0xff]
        %v1244 = vld [vmem:[#allocation2 + $0xf8] sm:$0xff]
        %v1245 = vld [vmem:[%s10] sm:$0x1]
        %v1247 = vlaneseq
        %v1248 = vshrl.u32 %v1247, 7
        %v1249 = vsub.s32 0, %v1248
        %v1250 = vrot.slane %v1245, %v1249
        %1252 = vmatprep.subr.mxu0 0.0
        %1253 = vmatpush1.msra.mxu0 %v1228
        %1254 = vmatprep.subr.mxu0 0.0
        %1255 = vmatpush1.msra.mxu0 %v1227
        %1256 = vmatprep.subr.mxu0 0.0
        %1257 = vmatpush1.msra.mxu0 %v1226
        %1258 = vmatprep.subr.mxu0 0.0
        %1259 = vmatpush1.msra.mxu0 %v1225
        %1260 = vmatprep.subr.mxu0 0.0
        %1261 = vmatpush1.msra.mxu0 %v1224
        %1262 = vmatprep.subr.mxu0 0.0
        %1263 = vmatpush1.msra.mxu0 %v1223
        %1264 = vmatprep.subr.mxu0 0.0
        %1265 = vmatpush1.msra.mxu0 %v1222
        %1266 = vmatprep.subr.mxu0 0.0
        %1267 = vmatpush1.msra.mxu0 %v1221
        %1268 = vmatprep.subr.mxu0 0.0
        %1269 = vmatpush1.msra.mxu0 %v1220
        %1270 = vmatprep.subr.mxu0 0.0
        %1271 = vmatpush1.msra.mxu0 %v1219
        %1272 = vmatprep.subr.mxu0 0.0
        %1273 = vmatpush1.msra.mxu0 %v1218
        %1274 = vmatprep.subr.mxu0 0.0
        %1275 = vmatpush1.msra.mxu0 %v1217
        %1276 = vmatprep.subr.mxu0 0.0
        %1277 = vmatpush1.msra.mxu0 %v1216
        %1278 = vmatprep.subr.mxu0 0.0
        %1279 = vmatpush1.msra.mxu0 %v1215
        %1280 = vmatprep.subr.mxu0 0.0
        %1281 = vmatpush1.msra.mxu0 %v1214
        %1282 = vmatprep.subr.mxu0 0.0
        %1283 = vmatpush1.msra.mxu0 %v1213
        %1284 = vmatprep.subr.mxu0 0.0
        %1285 = vmatpush2.msra.mxu0 %v1244
        %1286 = vmatprep.subr.mxu0 0.0
        %1287 = vmatpush2.msra.mxu0 %v1243
        %1288 = vmatprep.subr.mxu0 0.0
        %1289 = vmatpush2.msra.mxu0 %v1242
        %1290 = vmatprep.subr.mxu0 0.0
        %1291 = vmatpush2.msra.mxu0 %v1241
        %1292 = vmatprep.subr.mxu0 0.0
        %1293 = vmatpush2.msra.mxu0 %v1240
        %1294 = vmatprep.subr.mxu0 0.0
        %1295 = vmatpush2.msra.mxu0 %v1239
        %1296 = vmatprep.subr.mxu0 0.0
        %1297 = vmatpush2.msra.mxu0 %v1238
        %1298 = vmatprep.subr.mxu0 0.0
        %1299 = vmatpush2.msra.mxu0 %v1237
        %1300 = vmatprep.subr.mxu0 0.0
        %1301 = vmatpush2.msra.mxu0 %v1236
        %1302 = vmatprep.subr.mxu0 0.0
        %1303 = vmatpush2.msra.mxu0 %v1235
        %1304 = vmatprep.subr.mxu0 0.0
        %1305 = vmatpush2.msra.mxu0 %v1234
        %1306 = vmatprep.subr.mxu0 0.0
        %1307 = vmatpush2.msra.mxu0 %v1233
        %1308 = vmatprep.subr.mxu0 0.0
        %1309 = vmatpush2.msra.mxu0 %v1232
        %1310 = vmatprep.subr.mxu0 0.0
        %1311 = vmatpush2.msra.mxu0 %v1231
        %1312 = vmatprep.subr.mxu0 0.0
        %1313 = vmatpush2.msra.mxu0 %v1230
        %1314 = vmatprep.subr.mxu0 0.0
        %1315 = vmatpush2.msra.mxu0 %v1229
        %1316 = vmatprep.mubr.f32.mxu0 %v1210
        %1317 = vmatmul.mubr.f32.gmra.mxu0 %v1209
        %v1318 = vpop.f32.mrf.mxu0
        %v1319 = vadd.f32 %v1250, %v1318
        %v1320 = vpop.f32.mrf.mxu0
        %1321 = vmatprep.mubr.f32.mxu0 %v1212
        %1322 = vmatmul.mubr.f32.gmra.mxu0 %v1211
        %v1323 = vpop.f32.mrf.mxu0
        %v1324 = vadd.f32 %v1250, %v1323
        %v1325 = vpop.f32.mrf.mxu0
        %1326 = vdwg.mxu0
        %v1327 = vadd.f32 %v1086, %v1319
        %v1328 = vadd.f32 %v1087, %v1324
        %v1329 = vld [vmem:[%s11] sm:$0x1]
        %v1330 = vld [vmem:[%s12] sm:$0x1]
        %1331 = vadd.xlane.f32.xlu0 %v1327
        %v1332 = vpop.xlane.xlu0 %1331
        %1333 = vadd.xlane.f32.xlu0 %v1328
        %v1334 = vpop.xlane.xlu0 %1333
        %v1335 = vmul.f32 %v1332, %v1053
        %v1336 = vmul.f32 %v1334, %v1053
        %v1337 = vsub.f32 %v1327, %v1335
        %v1338 = vsub.f32 %v1328, %v1336
        %v1339 = vmul.f32 %v1337, %v1337
        %v1340 = vmul.f32 %v1338, %v1338
        %1341 = vadd.xlane.f32.xlu0 %v1339
        %v1342 = vpop.xlane.xlu0 %1341
        %1343 = vadd.xlane.f32.xlu0 %v1340
        %v1344 = vpop.xlane.xlu0 %1343
        %v1345 = vmul.f32 %v1342, %v1053
        %v1346 = vmul.f32 %v1344, %v1053
        %v1347 = vadd.f32 %v1345, 1e-05
        %v1348 = vadd.f32 %v1346, 1e-05
        %v1349 = vrsqrt.pop %v1347
        %v1350 = vrsqrt.pop %v1348
        %v1351 = vmul.f32 %v1337, %v1349
        %v1352 = vmul.f32 %v1338, %v1350
        %v1354 = vlaneseq
        %v1355 = vshrl.u32 %v1354, 7
        %v1356 = vsub.s32 0, %v1355
        %v1357 = vrot.slane %v1329, %v1356
        %v1359 = vmul.f32 %v1351, %v1357
        %v1360 = vmul.f32 %v1352, %v1357
        %v1362 = vlaneseq
        %v1363 = vshrl.u32 %v1362, 7
        %v1364 = vsub.s32 0, %v1363
        %v1365 = vrot.slane %v1330, %v1364
        %v1367 = vadd.f32 %v1359, %v1365
        %v1368 = vadd.f32 %v1360, %v1365
        %1369 = vst [vmem:[%s493] sm:$0xff] %v1367
        %1370 = vst [vmem:[%s493 + $0x8] sm:$0xff] %v1368
        %1371 = vst.msk [vmem:[%s483] sm:$0xff] %vm769, %v878
        %1372 = vst.msk [vmem:[%s483 + $0x8] sm:$0xff] %vm769, %v880
        %p1373 = scmp.lt.s32.totalorder %s30, 1
        %s1374 = scalar_select %p1373, %s30, 1
        %s1375 = smul.addr %s1374, 2
        %s1376 = smul.addr %s1375, 8
        %s1377 = scalar_lea.vmem %s13, %s1376
        %s1378 = sand.u32 %s342, 1
        %s1379 = scalar_lea.sflag [#allocation4], %s1378
        %s1380 = sand.u32 %s342, 1
        %s1381 = smul.addr %s1380, 16
        %s1382 = scalar_lea.vmem [#allocation5], %s1381
        // Predicated region
        $region77: #{encoder_forward.2} parent=71 // pred_check
          %p1383 = pneg %p326
        $region78: #{encoder_forward.2} parent=71 // pred_check_branch
          %1385 = sbr.rel (%p1383) target = $region80
        $region79: #{encoder_forward.2} parent=71 // pred_region
          _
        $region80: #{encoder_forward.2} parent=71 // pred_fallthru
          _
        // Predicated region
        $region81: #{encoder_forward.2} parent=71 // pred_check
          %p1386 = pneg %p352
        $region82: #{encoder_forward.2} parent=71 // pred_check_branch
          %1388 = sbr.rel (%p1386) target = $region84
        $region83: #{encoder_forward.2} parent=71 // pred_region
          %s1390 = ssub.s32 256, 256
          %1391 = vsyncadd %s1379, %s1390
          %s1392 = smul.addr %s30, 2
          %s1393 = smul.addr %s1392, 128
          %s1394 = scalar_lea.hbm %s14, %s1393
          %s1395 = sshll.u32 %s1382, 4
          %s1396 = int_to_ptr.vmem [resolvable:$true] %s1395
          %1401 = dma.vmem_to_hbm [thread:$0]  %s1396, 256, %s1394, %s1379, 128, 128, 8
        $region84: #{encoder_forward.2} parent=71 // pred_fallthru
          _
      $region72: #{encoder_forward.2} parent=5 // pred_fallthru
        _
      %p1402 = scmp.le.s32.totalorder 2, %s25
      // Predicated region
      $region85: #{encoder_forward.2} parent=5 // pred_check
        %p1403 = pneg %p1402
      $region86: #{encoder_forward.2} parent=5 // pred_check_branch
        %1405 = sbr.rel (%p1403) target = $region88
      $region87: #{encoder_forward.2} parent=5 // pred_region
        %s1406 = ssub.s32 %s25, 2
        // Predicated region
        $region89: #{encoder_forward.2} parent=87 // pred_check
          %p1407 = pneg %p332
        $region90: #{encoder_forward.2} parent=87 // pred_check_branch
          %1409 = sbr.rel (%p1407) target = $region92
        $region91: #{encoder_forward.2} parent=87 // pred_region
          %p1410 = scmp.lt.s32.totalorder %s31, 1
          %s1411 = scalar_select %p1410, %s31, 1
          %s1412 = smul.addr %s1411, 2
          %s1413 = smul.addr %s1412, 8
          %s1414 = scalar_lea.vmem %s13, %s1413
        $region92: #{encoder_forward.2} parent=87 // pred_fallthru
          _
        // Predicated region
        $region93: #{encoder_forward.2} parent=87 // pred_check
          %p1415 = pneg %p358
        $region94: #{encoder_forward.2} parent=87 // pred_check_branch
          %1417 = sbr.rel (%p1415) target = $region96
        $region95: #{encoder_forward.2} parent=87 // pred_region
          %s1418 = sand.u32 %s343, 1
          %s1419 = scalar_lea.sflag [#allocation4], %s1418
          %s1420 = sand.u32 %s343, 1
          %s1421 = smul.addr %s1420, 16
          %s1422 = scalar_lea.vmem [#allocation5], %s1421
          %1423 = dma.done %s1419, 256
        $region96: #{encoder_forward.2} parent=87 // pred_fallthru
          _
      $region88: #{encoder_forward.2} parent=5 // pred_fallthru
        _
    $region6: #{encoder_forward.2} parent=1 // loop_footer
      %s29 = sadd.s32 1, %s25
    $region7: #{encoder_forward.2} parent=1 // loop_footer_branch
      %24 = sbr.rel target = $region3
    $region8: #{encoder_forward.2} parent=1 // loop_exit
      _
    %1424 = vsyncpa [#allocation3], 1
    %s1425 = scalar_lea.sflag [#allocation3], 1
    %1426 = vsyncpa %s1425, 1
    %1427 = vsyncpa [#allocation4], 1
    %s1428 = scalar_lea.sflag [#allocation4], 1
    %1429 = vsyncpa %s1428, 1

// kernel: encoder_forward.3
$region0: #{encoder_forward.3}
  #allocation0 [shape = 'u32[]', space=smem, size = 0x4, offset = 0x4, fixed_abs, tag = 'smem constant byte address 0x4 - core index']
  #allocation1 [shape = 'u32[144,128]{1,0:T(1,128)}', space=vmem, size = 0x12000, scoped, tag = 'internal scratch']
  %s0 = inlined_call_operand.vmem [shape: f32[2,16,128], index: 0, kind: input, shape index: {}]
  %s1 = inlined_call_operand.vmem [shape: f32[128,16], index: 1, kind: input, shape index: {}]
  %s2 = inlined_call_operand.vmem [shape: f32[128,16], index: 2, kind: input, shape index: {}]
  %s3 = inlined_call_operand.vmem [shape: f32[128,16], index: 3, kind: input, shape index: {}]
  %s4 = inlined_call_operand.vmem [shape: f32[16,128], index: 4, kind: input, shape index: {}]
  %s5 = inlined_call_operand.vmem [shape: f32[1,128], index: 5, kind: input, shape index: {}]
  %s6 = inlined_call_operand.vmem [shape: f32[1,128], index: 6, kind: input, shape index: {}]
  %s7 = inlined_call_operand.vmem [shape: f32[128,256], index: 7, kind: input, shape index: {}]
  %s8 = inlined_call_operand.vmem [shape: f32[1,256], index: 8, kind: input, shape index: {}]
  %s9 = inlined_call_operand.vmem [shape: f32[256,128], index: 9, kind: input, shape index: {}]
  %s10 = inlined_call_operand.vmem [shape: f32[1,128], index: 10, kind: input, shape index: {}]
  %s11 = inlined_call_operand.vmem [shape: f32[1,128], index: 11, kind: input, shape index: {}]
  %s12 = inlined_call_operand.vmem [shape: f32[1,128], index: 12, kind: input, shape index: {}]
  %s13 = inlined_call_operand.hbm [shape: f32[2,16,128], index: 13, kind: output, shape index: {0}]
  %s14 = inlined_call_operand.hbm [shape: f32[2,16,16], index: 14, kind: output, shape index: {1}]
  %15 = xla_tuple %s13, %s14
  %s16 = sld [smem:[#allocation0]]
  $region93: #{encoder_forward.3} parent=0
    _
  %s18 = ssub.s32 1, %s16
  %s19 = scalar_select 0, %s18, %s16
  $region1: #{encoder_forward.3} parent=0
    #allocation2 [shape = 'u8[16384]{0}', space=vmem, size = 0x4000, scoped, tag = 'output window, operand 0']
    #allocation3 [shape = 's32[2]{0}', space=sflag, size = 0x8, scoped, tag = 'scoped memory for encoder_forward.3']
    #allocation4 [shape = 'u8[16384]{0}', space=vmem, size = 0x4000, scoped, tag = 'output window, operand 1']
    #allocation5 [shape = 's32[2]{0}', space=sflag, size = 0x8, scoped, tag = 'scoped memory for encoder_forward.3']
    %20 = vsyncpa [#allocation3], 0
    %s21 = scalar_lea.sflag [#allocation3], 1
    %22 = vsyncpa %s21, 0
    %23 = vsyncpa [#allocation5], 0
    %s24 = scalar_lea.sflag [#allocation5], 1
    %25 = vsyncpa %s24, 0
    loop: start=0, step=1, limit=4
    $region2: #{encoder_forward.3} parent=1 // loop_pre_header
      _
    $region3: #{encoder_forward.3} parent=1 // loop_header
      %s27 = sphi 0, %s31
      %p28 = scmp.ge.s32.totalorder %s27, 4
      %s37 = sphi 0, %s39
      %s40 = sphi 0, %s37
      %s41 = sphi 0, %s40
      %s57 = sphi 0, %s41
      %s61 = sphi 0, %s61
      %s63 = sphi 0, %s61
      %s64 = sphi 0, %s63
      %s78 = sphi 0, %s64
      %s82 = sphi 0, %s82
      %s84 = sphi 0, %s82
      %s85 = sphi 0, %s84
      %s99 = sphi 0, %s85
      %s103 = sphi 0, %s103
      %s105 = sphi 0, %s103
      %s106 = sphi 0, %s105
      %s120 = sphi 0, %s106
      %s124 = sphi 0, %s124
      %s126 = sphi 0, %s124
      %s127 = sphi 0, %s126
      %s141 = sphi 0, %s127
      %s145 = sphi 0, %s145
      %s147 = sphi 0, %s145
      %s148 = sphi 0, %s147
      %s162 = sphi 0, %s148
      %s166 = sphi 0, %s166
      %s168 = sphi 0, %s166
      %s169 = sphi 0, %s168
      %s183 = sphi 0, %s169
      %s187 = sphi 0, %s187
      %s189 = sphi 0, %s187
      %s190 = sphi 0, %s189
      %s204 = sphi 0, %s190
      %s208 = sphi 0, %s208
      %s210 = sphi 0, %s208
      %s211 = sphi 0, %s210
      %s225 = sphi 0, %s211
      %s229 = sphi 0, %s229
      %s231 = sphi 0, %s229
      %s232 = sphi 0, %s231
      %s246 = sphi 0, %s232
      %s250 = sphi 0, %s250
      %s252 = sphi 0, %s250
      %s253 = sphi 0, %s252
      %s267 = sphi 0, %s253
      %s271 = sphi 0, %s271
      %s273 = sphi 0, %s271
      %s274 = sphi 0, %s273
      %s288 = sphi 0, %s274
      %s292 = sphi 0, %s292
      %s294 = sphi 0, %s292
      %s295 = sphi 0, %s294
      %s309 = sphi 0, %s295
      %s315 = sphi 0, %s317
      %s318 = sphi 0, %s315
      %s319 = sphi 0, %s318
      %s335 = sphi 0, %s319
      %s341 = sphi 0, %s343
      %s344 = sphi 0, %s341
      %s345 = sphi 0, %s344
      %s361 = sphi 0, %s345
    $region4: #{encoder_forward.3} parent=1 // loop_header_branch
      %30 = sbr.rel (%p28) target = $region8
    $region5: #{encoder_forward.3} parent=1 // loop_body
      %s32 = ssub.s32 %s27, 1
      %s33 = ssub.s32 %s27, 2
      %s34 = sadd.s32 %s27, 1
      %s35 = ssub.s32 %s27, %s34
      %p36 = scmp.eq.s32.totalorder %s35, 0
      %s38 = sadd.s32 %s37, 1
      %s39 = scalar_select %p36, %s37, %s38
      %p42 = pneg %p36
      %p43 = scmp.eq.s32.totalorder %s27, 1
      %p44 = por %p42, %p43
      %p45 = scmp.ne.s32.totalorder %s37, %s40
      %p46 = scmp.eq.s32.totalorder %s27, 0
      %p47 = por %p45, %p46
      %p48 = scmp.ne.s32.totalorder %s37, %s40
      %p49 = scmp.eq.s32.totalorder %s32, 1
      %p50 = por %p48, %p49
      %p51 = scmp.ne.s32.totalorder %s40, %s41
      %p52 = scmp.eq.s32.totalorder %s32, 0
      %p53 = por %p51, %p52
      %p54 = scmp.ne.s32.totalorder %s40, %s41
      %p55 = scmp.eq.s32.totalorder %s33, 1
      %p56 = por %p54, %p55
      %p58 = scmp.ne.s32.totalorder %s41, %s57
      %p59 = scmp.eq.s32.totalorder %s33, 0
      %p60 = por %p58, %p59
      %s62 = sadd.s32 %s61, 1
      %p65 = scmp.eq.s32.totalorder %s27, 1
      %p66 = scmp.ne.s32.totalorder %s61, %s63
      %p67 = scmp.eq.s32.totalorder %s27, 0
      %p68 = por %p66, %p67
      %p69 = scmp.ne.s32.totalorder %s61, %s63
      %p70 = scmp.eq.s32.totalorder %s32, 1
      %p71 = por %p69, %p70
      %p72 = scmp.ne.s32.totalorder %s63, %s64
      %p73 = scmp.eq.s32.totalorder %s32, 0
      %p74 = por %p72, %p73
      %p75 = scmp.ne.s32.totalorder %s63, %s64
      %p76 = scmp.eq.s32.totalorder %s33, 1
      %p77 = por %p75, %p76
      %p79 = scmp.ne.s32.totalorder %s64, %s78
      %p80 = scmp.eq.s32.totalorder %s33, 0
      %p81 = por %p79, %p80
      %s83 = sadd.s32 %s82, 1
      %p86 = scmp.eq.s32.totalorder %s27, 1
      %p87 = scmp.ne.s32.totalorder %s82, %s84
      %p88 = scmp.eq.s32.totalorder %s27, 0
      %p89 = por %p87, %p88
      %p90 = scmp.ne.s32.totalorder %s82, %s84
      %p91 = scmp.eq.s32.totalorder %s32, 1
      %p92 = por %p90, %p91
      %p93 = scmp.ne.s32.totalorder %s84, %s85
      %p94 = scmp.eq.s32.totalorder %s32, 0
      %p95 = por %p93, %p94
      %p96 = scmp.ne.s32.totalorder %s84, %s85
      %p97 = scmp.eq.s32.totalorder %s33, 1
      %p98 = por %p96, %p97
      %p100 = scmp.ne.s32.totalorder %s85, %s99
      %p101 = scmp.eq.s32.totalorder %s33, 0
      %p102 = por %p100, %p101
      %s104 = sadd.s32 %s103, 1
      %p107 = scmp.eq.s32.totalorder %s27, 1
      %p108 = scmp.ne.s32.totalorder %s103, %s105
      %p109 = scmp.eq.s32.totalorder %s27, 0
      %p110 = por %p108, %p109
      %p111 = scmp.ne.s32.totalorder %s103, %s105
      %p112 = scmp.eq.s32.totalorder %s32, 1
      %p113 = por %p111, %p112
      %p114 = scmp.ne.s32.totalorder %s105, %s106
      %p115 = scmp.eq.s32.totalorder %s32, 0
      %p116 = por %p114, %p115
      %p117 = scmp.ne.s32.totalorder %s105, %s106
      %p118 = scmp.eq.s32.totalorder %s33, 1
      %p119 = por %p117, %p118
      %p121 = scmp.ne.s32.totalorder %s106, %s120
      %p122 = scmp.eq.s32.totalorder %s33, 0
      %p123 = por %p121, %p122
      %s125 = sadd.s32 %s124, 1
      %p128 = scmp.eq.s32.totalorder %s27, 1
      %p129 = scmp.ne.s32.totalorder %s124, %s126
      %p130 = scmp.eq.s32.totalorder %s27, 0
      %p131 = por %p129, %p130
      %p132 = scmp.ne.s32.totalorder %s124, %s126
      %p133 = scmp.eq.s32.totalorder %s32, 1
      %p134 = por %p132, %p133
      %p135 = scmp.ne.s32.totalorder %s126, %s127
      %p136 = scmp.eq.s32.totalorder %s32, 0
      %p137 = por %p135, %p136
      %p138 = scmp.ne.s32.totalorder %s126, %s127
      %p139 = scmp.eq.s32.totalorder %s33, 1
      %p140 = por %p138, %p139
      %p142 = scmp.ne.s32.totalorder %s127, %s141
      %p143 = scmp.eq.s32.totalorder %s33, 0
      %p144 = por %p142, %p143
      %s146 = sadd.s32 %s145, 1
      %p149 = scmp.eq.s32.totalorder %s27, 1
      %p150 = scmp.ne.s32.totalorder %s145, %s147
      %p151 = scmp.eq.s32.totalorder %s27, 0
      %p152 = por %p150, %p151
      %p153 = scmp.ne.s32.totalorder %s145, %s147
      %p154 = scmp.eq.s32.totalorder %s32, 1
      %p155 = por %p153, %p154
      %p156 = scmp.ne.s32.totalorder %s147, %s148
      %p157 = scmp.eq.s32.totalorder %s32, 0
      %p158 = por %p156, %p157
      %p159 = scmp.ne.s32.totalorder %s147, %s148
      %p160 = scmp.eq.s32.totalorder %s33, 1
      %p161 = por %p159, %p160
      %p163 = scmp.ne.s32.totalorder %s148, %s162
      %p164 = scmp.eq.s32.totalorder %s33, 0
      %p165 = por %p163, %p164
      %s167 = sadd.s32 %s166, 1
      %p170 = scmp.eq.s32.totalorder %s27, 1
      %p171 = scmp.ne.s32.totalorder %s166, %s168
      %p172 = scmp.eq.s32.totalorder %s27, 0
      %p173 = por %p171, %p172
      %p174 = scmp.ne.s32.totalorder %s166, %s168
      %p175 = scmp.eq.s32.totalorder %s32, 1
      %p176 = por %p174, %p175
      %p177 = scmp.ne.s32.totalorder %s168, %s169
      %p178 = scmp.eq.s32.totalorder %s32, 0
      %p179 = por %p177, %p178
      %p180 = scmp.ne.s32.totalorder %s168, %s169
      %p181 = scmp.eq.s32.totalorder %s33, 1
      %p182 = por %p180, %p181
      %p184 = scmp.ne.s32.totalorder %s169, %s183
      %p185 = scmp.eq.s32.totalorder %s33, 0
      %p186 = por %p184, %p185
      %s188 = sadd.s32 %s187, 1
      %p191 = scmp.eq.s32.totalorder %s27, 1
      %p192 = scmp.ne.s32.totalorder %s187, %s189
      %p193 = scmp.eq.s32.totalorder %s27, 0
      %p194 = por %p192, %p193
      %p195 = scmp.ne.s32.totalorder %s187, %s189
      %p196 = scmp.eq.s32.totalorder %s32, 1
      %p197 = por %p195, %p196
      %p198 = scmp.ne.s32.totalorder %s189, %s190
      %p199 = scmp.eq.s32.totalorder %s32, 0
      %p200 = por %p198, %p199
      %p201 = scmp.ne.s32.totalorder %s189, %s190
      %p202 = scmp.eq.s32.totalorder %s33, 1
      %p203 = por %p201, %p202
      %p205 = scmp.ne.s32.totalorder %s190, %s204
      %p206 = scmp.eq.s32.totalorder %s33, 0
      %p207 = por %p205, %p206
      %s209 = sadd.s32 %s208, 1
      %p212 = scmp.eq.s32.totalorder %s27, 1
      %p213 = scmp.ne.s32.totalorder %s208, %s210
      %p214 = scmp.eq.s32.totalorder %s27, 0
      %p215 = por %p213, %p214
      %p216 = scmp.ne.s32.totalorder %s208, %s210
      %p217 = scmp.eq.s32.totalorder %s32, 1
      %p218 = por %p216, %p217
      %p219 = scmp.ne.s32.totalorder %s210, %s211
      %p220 = scmp.eq.s32.totalorder %s32, 0
      %p221 = por %p219, %p220
      %p222 = scmp.ne.s32.totalorder %s210, %s211
      %p223 = scmp.eq.s32.totalorder %s33, 1
      %p224 = por %p222, %p223
      %p226 = scmp.ne.s32.totalorder %s211, %s225
      %p227 = scmp.eq.s32.totalorder %s33, 0
      %p228 = por %p226, %p227
      %s230 = sadd.s32 %s229, 1
      %p233 = scmp.eq.s32.totalorder %s27, 1
      %p234 = scmp.ne.s32.totalorder %s229, %s231
      %p235 = scmp.eq.s32.totalorder %s27, 0
      %p236 = por %p234, %p235
      %p237 = scmp.ne.s32.totalorder %s229, %s231
      %p238 = scmp.eq.s32.totalorder %s32, 1
      %p239 = por %p237, %p238
      %p240 = scmp.ne.s32.totalorder %s231, %s232
      %p241 = scmp.eq.s32.totalorder %s32, 0
      %p242 = por %p240, %p241
      %p243 = scmp.ne.s32.totalorder %s231, %s232
      %p244 = scmp.eq.s32.totalorder %s33, 1
      %p245 = por %p243, %p244
      %p247 = scmp.ne.s32.totalorder %s232, %s246
      %p248 = scmp.eq.s32.totalorder %s33, 0
      %p249 = por %p247, %p248
      %s251 = sadd.s32 %s250, 1
      %p254 = scmp.eq.s32.totalorder %s27, 1
      %p255 = scmp.ne.s32.totalorder %s250, %s252
      %p256 = scmp.eq.s32.totalorder %s27, 0
      %p257 = por %p255, %p256
      %p258 = scmp.ne.s32.totalorder %s250, %s252
      %p259 = scmp.eq.s32.totalorder %s32, 1
      %p260 = por %p258, %p259
      %p261 = scmp.ne.s32.totalorder %s252, %s253
      %p262 = scmp.eq.s32.totalorder %s32, 0
      %p263 = por %p261, %p262
      %p264 = scmp.ne.s32.totalorder %s252, %s253
      %p265 = scmp.eq.s32.totalorder %s33, 1
      %p266 = por %p264, %p265
      %p268 = scmp.ne.s32.totalorder %s253, %s267
      %p269 = scmp.eq.s32.totalorder %s33, 0
      %p270 = por %p268, %p269
      %s272 = sadd.s32 %s271, 1
      %p275 = scmp.eq.s32.totalorder %s27, 1
      %p276 = scmp.ne.s32.totalorder %s271, %s273
      %p277 = scmp.eq.s32.totalorder %s27, 0
      %p278 = por %p276, %p277
      %p279 = scmp.ne.s32.totalorder %s271, %s273
      %p280 = scmp.eq.s32.totalorder %s32, 1
      %p281 = por %p279, %p280
      %p282 = scmp.ne.s32.totalorder %s273, %s274
      %p283 = scmp.eq.s32.totalorder %s32, 0
      %p284 = por %p282, %p283
      %p285 = scmp.ne.s32.totalorder %s273, %s274
      %p286 = scmp.eq.s32.totalorder %s33, 1
      %p287 = por %p285, %p286
      %p289 = scmp.ne.s32.totalorder %s274, %s288
      %p290 = scmp.eq.s32.totalorder %s33, 0
      %p291 = por %p289, %p290
      %s293 = sadd.s32 %s292, 1
      %p296 = scmp.eq.s32.totalorder %s27, 1
      %p297 = scmp.ne.s32.totalorder %s292, %s294
      %p298 = scmp.eq.s32.totalorder %s27, 0
      %p299 = por %p297, %p298
      %p300 = scmp.ne.s32.totalorder %s292, %s294
      %p301 = scmp.eq.s32.totalorder %s32, 1
      %p302 = por %p300, %p301
      %p303 = scmp.ne.s32.totalorder %s294, %s295
      %p304 = scmp.eq.s32.totalorder %s32, 0
      %p305 = por %p303, %p304
      %p306 = scmp.ne.s32.totalorder %s294, %s295
      %p307 = scmp.eq.s32.totalorder %s33, 1
      %p308 = por %p306, %p307
      %p310 = scmp.ne.s32.totalorder %s295, %s309
      %p311 = scmp.eq.s32.totalorder %s33, 0
      %p312 = por %p310, %p311
      %s313 = ssub.s32 %s27, %s34
      %p314 = scmp.eq.s32.totalorder %s313, 0
      %s316 = sadd.s32 %s315, 1
      %s317 = scalar_select %p314, %s315, %s316
      %p320 = pneg %p314
      %p321 = scmp.eq.s32.totalorder %s27, 1
      %p322 = por %p320, %p321
      %p323 = scmp.ne.s32.totalorder %s315, %s318
      %p324 = scmp.eq.s32.totalorder %s27, 0
      %p325 = por %p323, %p324
      %p326 = scmp.ne.s32.totalorder %s315, %s318
      %p327 = scmp.eq.s32.totalorder %s32, 1
      %p328 = por %p326, %p327
      %p329 = scmp.ne.s32.totalorder %s318, %s319
      %p330 = scmp.eq.s32.totalorder %s32, 0
      %p331 = por %p329, %p330
      %p332 = scmp.ne.s32.totalorder %s318, %s319
      %p333 = scmp.eq.s32.totalorder %s33, 1
      %p334 = por %p332, %p333
      %p336 = scmp.ne.s32.totalorder %s319, %s335
      %p337 = scmp.eq.s32.totalorder %s33, 0
      %p338 = por %p336, %p337
      %s339 = ssub.s32 %s27, %s34
      %p340 = scmp.eq.s32.totalorder %s339, 0
      %s342 = sadd.s32 %s341, 1
      %s343 = scalar_select %p340, %s341, %s342
      %p346 = pneg %p340
      %p347 = scmp.eq.s32.totalorder %s27, 1
      %p348 = por %p346, %p347
      %p349 = scmp.ne.s32.totalorder %s341, %s344
      %p350 = scmp.eq.s32.totalorder %s27, 0
      %p351 = por %p349, %p350
      %p352 = scmp.ne.s32.totalorder %s341, %s344
      %p353 = scmp.eq.s32.totalorder %s32, 1
      %p354 = por %p352, %p353
      %p355 = scmp.ne.s32.totalorder %s344, %s345
      %p356 = scmp.eq.s32.totalorder %s32, 0
      %p357 = por %p355, %p356
      %p358 = scmp.ne.s32.totalorder %s344, %s345
      %p359 = scmp.eq.s32.totalorder %s33, 1
      %p360 = por %p358, %p359
      %p362 = scmp.ne.s32.totalorder %s345, %s361
      %p363 = scmp.eq.s32.totalorder %s33, 0
      %p364 = por %p362, %p363
      %p365 = scmp.le.s32.totalorder 1, %s27
      %p366 = scmp.lt.s32.totalorder %s27, 3
      %p367 = pnand %p365, %p366
      %p368 = pneg %p367
      // Predicated region
      $region9: #{encoder_forward.3} parent=5 // pred_check
        _
      $region10: #{encoder_forward.3} parent=5 // pred_check_branch
        %370 = sbr.rel (%p367) target = $region12
      $region11: #{encoder_forward.3} parent=5 // pred_region
        %s371 = ssub.s32 %s27, 1
        // Predicated region
        $region13: #{encoder_forward.3} parent=11 // pred_check
          %p372 = pneg %p74
        $region14: #{encoder_forward.3} parent=11 // pred_check_branch
          %374 = sbr.rel (%p372) target = $region16
        $region15: #{encoder_forward.3} parent=11 // pred_region
          _
        $region16: #{encoder_forward.3} parent=11 // pred_fallthru
          _
        // Predicated region
        $region17: #{encoder_forward.3} parent=11 // pred_check
          %p375 = pneg %p95
        $region18: #{encoder_forward.3} parent=11 // pred_check_branch
          %377 = sbr.rel (%p375) target = $region20
        $region19: #{encoder_forward.3} parent=11 // pred_region
          _
        $region20: #{encoder_forward.3} parent=11 // pred_fallthru
          _
        // Predicated region
        $region21: #{encoder_forward.3} parent=11 // pred_check
          %p378 = pneg %p116
        $region22: #{encoder_forward.3} parent=11 // pred_check_branch
          %380 = sbr.rel (%p378) target = $region24
        $region23: #{encoder_forward.3} parent=11 // pred_region
          _
        $region24: #{encoder_forward.3} parent=11 // pred_fallthru
          _
        // Predicated region
        $region25: #{encoder_forward.3} parent=11 // pred_check
          %p381 = pneg %p137
        $region26: #{encoder_forward.3} parent=11 // pred_check_branch
          %383 = sbr.rel (%p381) target = $region28
        $region27: #{encoder_forward.3} parent=11 // pred_region
          _
        $region28: #{encoder_forward.3} parent=11 // pred_fallthru
          _
        // Predicated region
        $region29: #{encoder_forward.3} parent=11 // pred_check
          %p384 = pneg %p158
        $region30: #{encoder_forward.3} parent=11 // pred_check_branch
          %386 = sbr.rel (%p384) target = $region32
        $region31: #{encoder_forward.3} parent=11 // pred_region
          _
        $region32: #{encoder_forward.3} parent=11 // pred_fallthru
          _
        // Predicated region
        $region33: #{encoder_forward.3} parent=11 // pred_check
          %p387 = pneg %p179
        $region34: #{encoder_forward.3} parent=11 // pred_check_branch
          %389 = sbr.rel (%p387) target = $region36
        $region35: #{encoder_forward.3} parent=11 // pred_region
          _
        $region36: #{encoder_forward.3} parent=11 // pred_fallthru
          _
        // Predicated region
        $region37: #{encoder_forward.3} parent=11 // pred_check
          %p390 = pneg %p200
        $region38: #{encoder_forward.3} parent=11 // pred_check_branch
          %392 = sbr.rel (%p390) target = $region40
        $region39: #{encoder_forward.3} parent=11 // pred_region
          _
        $region40: #{encoder_forward.3} parent=11 // pred_fallthru
          _
        // Predicated region
        $region41: #{encoder_forward.3} parent=11 // pred_check
          %p393 = pneg %p221
        $region42: #{encoder_forward.3} parent=11 // pred_check_branch
          %395 = sbr.rel (%p393) target = $region44
        $region43: #{encoder_forward.3} parent=11 // pred_region
          _
        $region44: #{encoder_forward.3} parent=11 // pred_fallthru
          _
        // Predicated region
        $region45: #{encoder_forward.3} parent=11 // pred_check
          %p396 = pneg %p242
        $region46: #{encoder_forward.3} parent=11 // pred_check_branch
          %398 = sbr.rel (%p396) target = $region48
        $region47: #{encoder_forward.3} parent=11 // pred_region
          _
        $region48: #{encoder_forward.3} parent=11 // pred_fallthru
          _
        // Predicated region
        $region49: #{encoder_forward.3} parent=11 // pred_check
          %p399 = pneg %p263
        $region50: #{encoder_forward.3} parent=11 // pred_check_branch
          %401 = sbr.rel (%p399) target = $region52
        $region51: #{encoder_forward.3} parent=11 // pred_region
          _
        $region52: #{encoder_forward.3} parent=11 // pred_fallthru
          _
        // Predicated region
        $region53: #{encoder_forward.3} parent=11 // pred_check
          %p402 = pneg %p284
        $region54: #{encoder_forward.3} parent=11 // pred_check_branch
          %404 = sbr.rel (%p402) target = $region56
        $region55: #{encoder_forward.3} parent=11 // pred_region
          _
        $region56: #{encoder_forward.3} parent=11 // pred_fallthru
          _
        // Predicated region
        $region57: #{encoder_forward.3} parent=11 // pred_check
          %p405 = pneg %p305
        $region58: #{encoder_forward.3} parent=11 // pred_check_branch
          %407 = sbr.rel (%p405) target = $region60
        $region59: #{encoder_forward.3} parent=11 // pred_region
          _
        $region60: #{encoder_forward.3} parent=11 // pred_fallthru
          _
      $region12: #{encoder_forward.3} parent=5 // pred_fallthru
        _
      %p408 = scmp.lt.s32.totalorder %s27, 2
      // Predicated region
      $region61: #{encoder_forward.3} parent=5 // pred_check
        %p409 = pneg %p408
      $region62: #{encoder_forward.3} parent=5 // pred_check_branch
        %411 = sbr.rel (%p409) target = $region64
      $region63: #{encoder_forward.3} parent=5 // pred_region
        // Predicated region
        $region65: #{encoder_forward.3} parent=63 // pred_check
          %p412 = pneg %p47
        $region66: #{encoder_forward.3} parent=63 // pred_check_branch
          %414 = sbr.rel (%p412) target = $region68
        $region67: #{encoder_forward.3} parent=63 // pred_region
          %p415 = scmp.lt.s32.totalorder %s27, 1
          %s416 = scalar_select %p415, %s27, 1
          %s417 = smul.addr %s416, 2
          %s418 = smul.addr %s417, 8
          %s419 = scalar_lea.vmem %s0, %s418
        $region68: #{encoder_forward.3} parent=63 // pred_fallthru
          _
      $region64: #{encoder_forward.3} parent=5 // pred_fallthru
        _
      %p420 = scmp.le.s32.totalorder 1, %s27
      %p421 = scmp.lt.s32.totalorder %s27, 3
      %p422 = pnand %p420, %p421
      %p423 = pneg %p422
      // Predicated region
      $region69: #{encoder_forward.3} parent=5 // pred_check
        _
      $region70: #{encoder_forward.3} parent=5 // pred_check_branch
        %425 = sbr.rel (%p422) target = $region72
      $region71: #{encoder_forward.3} parent=5 // pred_region
        %s426 = ssub.s32 %s27, 1
        %p427 = scmp.lt.s32.totalorder %s32, 1
        %s428 = scalar_select %p427, %s32, 1
        %s429 = smul.addr %s428, 2
        %s430 = smul.addr %s429, 8
        %s431 = scalar_lea.vmem %s0, %s430
        %p432 = pneg %p53
        %p433 = pneg %p50
        %p434 = pneg %p74
        %p435 = pneg %p71
        %p436 = pneg %p95
        %p437 = pneg %p92
        %p438 = pneg %p116
        %p439 = pneg %p113
        %p440 = pneg %p137
        %p441 = pneg %p134
        %p442 = pneg %p158
        %p443 = pneg %p155
        %p444 = pneg %p179
        %p445 = pneg %p176
        %p446 = pneg %p200
        %p447 = pneg %p197
        %p448 = pneg %p221
        %p449 = pneg %p218
        %p450 = pneg %p242
        %p451 = pneg %p239
        %p452 = pneg %p263
        %p453 = pneg %p260
        %p454 = pneg %p284
        %p455 = pneg %p281
        %p456 = pneg %p305
        %p457 = pneg %p302
        %p458 = pneg %p331
        %p459 = pneg %p328
        %s460 = sand.u32 %s318, 1
        %s461 = scalar_lea.sflag [#allocation3], %s460
        %s462 = sand.u32 %s318, 1
        %s463 = smul.addr %s462, 16
        %s464 = scalar_lea.vmem [#allocation2], %s463
        %p465 = pneg %p357
        %p466 = pneg %p354
        %s467 = sand.u32 %s344, 1
        %s468 = scalar_lea.sflag [#allocation5], %s467
        %s469 = sand.u32 %s344, 1
        %s470 = smul.addr %s469, 16
        %s471 = scalar_lea.vmem [#allocation4], %s470
        %p472 = scmp.lt.s32.totalorder %s32, 1
        %s473 = scalar_select %p472, %s32, 1
        %s474 = smul.addr %s473, 2
        %s475 = smul.addr %s474, 8
        %s476 = scalar_lea.vmem %s0, %s475
        %v477 = vld [vmem:[%s476] sm:$0xff]
        %v478 = vld [vmem:[%s476 + $0x8] sm:$0xff]
        %v479 = vld [vmem:[%s1] sm:$0xff]
        %v480 = vld [vmem:[%s1 + $0x8] sm:$0xff]
        %v481 = vld [vmem:[%s1 + $0x10] sm:$0xff]
        %v482 = vld [vmem:[%s1 + $0x18] sm:$0xff]
        %v483 = vld [vmem:[%s1 + $0x20] sm:$0xff]
        %v484 = vld [vmem:[%s1 + $0x28] sm:$0xff]
        %v485 = vld [vmem:[%s1 + $0x30] sm:$0xff]
        %v486 = vld [vmem:[%s1 + $0x38] sm:$0xff]
        %v487 = vld [vmem:[%s1 + $0x40] sm:$0xff]
        %v488 = vld [vmem:[%s1 + $0x48] sm:$0xff]
        %v489 = vld [vmem:[%s1 + $0x50] sm:$0xff]
        %v490 = vld [vmem:[%s1 + $0x58] sm:$0xff]
        %v491 = vld [vmem:[%s1 + $0x60] sm:$0xff]
        %v492 = vld [vmem:[%s1 + $0x68] sm:$0xff]
        %v493 = vld [vmem:[%s1 + $0x70] sm:$0xff]
        %v494 = vld [vmem:[%s1 + $0x78] sm:$0xff]
        %495 = vmatprep.subr.mxu0 0.0
        %496 = vmatpush1.msra.mxu0 %v494
        %497 = vmatprep.subr.mxu0 0.0
        %498 = vmatpush1.msra.mxu0 %v493
        %499 = vmatprep.subr.mxu0 0.0
        %500 = vmatpush1.msra.mxu0 %v492
        %501 = vmatprep.subr.mxu0 0.0
        %502 = vmatpush1.msra.mxu0 %v491
        %503 = vmatprep.subr.mxu0 0.0
        %504 = vmatpush1.msra.mxu0 %v490
        %505 = vmatprep.subr.mxu0 0.0
        %506 = vmatpush1.msra.mxu0 %v489
        %507 = vmatprep.subr.mxu0 0.0
        %508 = vmatpush1.msra.mxu0 %v488
        %509 = vmatprep.subr.mxu0 0.0
        %510 = vmatpush1.msra.mxu0 %v487
        %511 = vmatprep.subr.mxu0 0.0
        %512 = vmatpush1.msra.mxu0 %v486
        %513 = vmatprep.subr.mxu0 0.0
        %514 = vmatpush1.msra.mxu0 %v485
        %515 = vmatprep.subr.mxu0 0.0
        %516 = vmatpush1.msra.mxu0 %v484
        %517 = vmatprep.subr.mxu0 0.0
        %518 = vmatpush1.msra.mxu0 %v483
        %519 = vmatprep.subr.mxu0 0.0
        %520 = vmatpush1.msra.mxu0 %v482
        %521 = vmatprep.subr.mxu0 0.0
        %522 = vmatpush1.msra.mxu0 %v481
        %523 = vmatprep.subr.mxu0 0.0
        %524 = vmatpush1.msra.mxu0 %v480
        %525 = vmatprep.subr.mxu0 0.0
        %526 = vmatpush1.msra.mxu0 %v479
        %527 = vmatprep.subr.mxu0 0.0
        %528 = vmatpush2.msra.mxu0 0.0
        %529 = vmatprep.subr.mxu0 0.0
        %530 = vmatpush2.msra.mxu0 0.0
        %531 = vmatprep.subr.mxu0 0.0
        %532 = vmatpush2.msra.mxu0 0.0
        %533 = vmatprep.subr.mxu0 0.0
        %534 = vmatpush2.msra.mxu0 0.0
        %535 = vmatprep.subr.mxu0 0.0
        %536 = vmatpush2.msra.mxu0 0.0
        %537 = vmatprep.subr.mxu0 0.0
        %538 = vmatpush2.msra.mxu0 0.0
        %539 = vmatprep.subr.mxu0 0.0
        %540 = vmatpush2.msra.mxu0 0.0
        %541 = vmatprep.subr.mxu0 0.0
        %542 = vmatpush2.msra.mxu0 0.0
        %543 = vmatprep.subr.mxu0 0.0
        %544 = vmatpush2.msra.mxu0 0.0
        %545 = vmatprep.subr.mxu0 0.0
        %546 = vmatpush2.msra.mxu0 0.0
        %547 = vmatprep.subr.mxu0 0.0
        %548 = vmatpush2.msra.mxu0 0.0
        %549 = vmatprep.subr.mxu0 0.0
        %550 = vmatpush2.msra.mxu0 0.0
        %551 = vmatprep.subr.mxu0 0.0
        %552 = vmatpush2.msra.mxu0 0.0
        %553 = vmatprep.subr.mxu0 0.0
        %554 = vmatpush2.msra.mxu0 0.0
        %555 = vmatprep.subr.mxu0 0.0
        %556 = vmatpush2.msra.mxu0 0.0
        %557 = vmatprep.subr.mxu0 0.0
        %558 = vmatpush2.msra.mxu0 0.0
        %559 = vmatprep.mubr.f32.mxu0 0.0
        %560 = vmatmul.mubr.f32.gmra.mxu0 %v477
        %v561 = vpop.f32.mrf.mxu0
        %v562 = vadd.f32 0.0, %v561
        %v563 = vpop.f32.mrf.mxu0
        %564 = vmatprep.mubr.f32.mxu0 0.0
        %565 = vmatmul.mubr.f32.gmra.mxu0 %v478
        %v566 = vpop.f32.mrf.mxu0
        %v567 = vadd.f32 0.0, %v566
        %v568 = vpop.f32.mrf.mxu0
        %569 = vdwg.mxu0
        %v570 = vld [vmem:[%s2] sm:$0xff]
        %v571 = vld [vmem:[%s2 + $0x8] sm:$0xff]
        %v572 = vld [vmem:[%s2 + $0x10] sm:$0xff]
        %v573 = vld [vmem:[%s2 + $0x18] sm:$0xff]
        %v574 = vld [vmem:[%s2 + $0x20] sm:$0xff]
        %v575 = vld [vmem:[%s2 + $0x28] sm:$0xff]
        %v576 = vld [vmem:[%s2 + $0x30] sm:$0xff]
        %v577 = vld [vmem:[%s2 + $0x38] sm:$0xff]
        %v578 = vld [vmem:[%s2 + $0x40] sm:$0xff]
        %v579 = vld [vmem:[%s2 + $0x48] sm:$0xff]
        %v580 = vld [vmem:[%s2 + $0x50] sm:$0xff]
        %v581 = vld [vmem:[%s2 + $0x58] sm:$0xff]
        %v582 = vld [vmem:[%s2 + $0x60] sm:$0xff]
        %v583 = vld [vmem:[%s2 + $0x68] sm:$0xff]
        %v584 = vld [vmem:[%s2 + $0x70] sm:$0xff]
        %v585 = vld [vmem:[%s2 + $0x78] sm:$0xff]
        %586 = vmatprep.subr.mxu0 0.0
        %587 = vmatpush1.msra.mxu0 %v585
        %588 = vmatprep.subr.mxu0 0.0
        %589 = vmatpush1.msra.mxu0 %v584
        %590 = vmatprep.subr.mxu0 0.0
        %591 = vmatpush1.msra.mxu0 %v583
        %592 = vmatprep.subr.mxu0 0.0
        %593 = vmatpush1.msra.mxu0 %v582
        %594 = vmatprep.subr.mxu0 0.0
        %595 = vmatpush1.msra.mxu0 %v581
        %596 = vmatprep.subr.mxu0 0.0
        %597 = vmatpush1.msra.mxu0 %v580
        %598 = vmatprep.subr.mxu0 0.0
        %599 = vmatpush1.msra.mxu0 %v579
        %600 = vmatprep.subr.mxu0 0.0
        %601 = vmatpush1.msra.mxu0 %v578
        %602 = vmatprep.subr.mxu0 0.0
        %603 = vmatpush1.msra.mxu0 %v577
        %604 = vmatprep.subr.mxu0 0.0
        %605 = vmatpush1.msra.mxu0 %v576
        %606 = vmatprep.subr.mxu0 0.0
        %607 = vmatpush1.msra.mxu0 %v575
        %608 = vmatprep.subr.mxu0 0.0
        %609 = vmatpush1.msra.mxu0 %v574
        %610 = vmatprep.subr.mxu0 0.0
        %611 = vmatpush1.msra.mxu0 %v573
        %612 = vmatprep.subr.mxu0 0.0
        %613 = vmatpush1.msra.mxu0 %v572
        %614 = vmatprep.subr.mxu0 0.0
        %615 = vmatpush1.msra.mxu0 %v571
        %616 = vmatprep.subr.mxu0 0.0
        %617 = vmatpush1.msra.mxu0 %v570
        %618 = vmatprep.subr.mxu0 0.0
        %619 = vmatpush2.msra.mxu0 0.0
        %620 = vmatprep.subr.mxu0 0.0
        %621 = vmatpush2.msra.mxu0 0.0
        %622 = vmatprep.subr.mxu0 0.0
        %623 = vmatpush2.msra.mxu0 0.0
        %624 = vmatprep.subr.mxu0 0.0
        %625 = vmatpush2.msra.mxu0 0.0
        %626 = vmatprep.subr.mxu0 0.0
        %627 = vmatpush2.msra.mxu0 0.0
        %628 = vmatprep.subr.mxu0 0.0
        %629 = vmatpush2.msra.mxu0 0.0
        %630 = vmatprep.subr.mxu0 0.0
        %631 = vmatpush2.msra.mxu0 0.0
        %632 = vmatprep.subr.mxu0 0.0
        %633 = vmatpush2.msra.mxu0 0.0
        %634 = vmatprep.subr.mxu0 0.0
        %635 = vmatpush2.msra.mxu0 0.0
        %636 = vmatprep.subr.mxu0 0.0
        %637 = vmatpush2.msra.mxu0 0.0
        %638 = vmatprep.subr.mxu0 0.0
        %639 = vmatpush2.msra.mxu0 0.0
        %640 = vmatprep.subr.mxu0 0.0
        %641 = vmatpush2.msra.mxu0 0.0
        %642 = vmatprep.subr.mxu0 0.0
        %643 = vmatpush2.msra.mxu0 0.0
        %644 = vmatprep.subr.mxu0 0.0
        %645 = vmatpush2.msra.mxu0 0.0
        %646 = vmatprep.subr.mxu0 0.0
        %647 = vmatpush2.msra.mxu0 0.0
        %648 = vmatprep.subr.mxu0 0.0
        %649 = vmatpush2.msra.mxu0 0.0
        %650 = vmatprep.mubr.f32.mxu0 0.0
        %651 = vmatmul.mubr.f32.gmra.mxu0 %v477
        %v652 = vpop.f32.mrf.mxu0
        %v653 = vadd.f32 0.0, %v652
        %v654 = vpop.f32.mrf.mxu0
        %655 = vmatprep.mubr.f32.mxu0 0.0
        %656 = vmatmul.mubr.f32.gmra.mxu0 %v478
        %v657 = vpop.f32.mrf.mxu0
        %v658 = vadd.f32 0.0, %v657
        %v659 = vpop.f32.mrf.mxu0
        %660 = vdwg.mxu0
        %v661 = vld [vmem:[%s3] sm:$0xff]
        %v662 = vld [vmem:[%s3 + $0x8] sm:$0xff]
        %v663 = vld [vmem:[%s3 + $0x10] sm:$0xff]
        %v664 = vld [vmem:[%s3 + $0x18] sm:$0xff]
        %v665 = vld [vmem:[%s3 + $0x20] sm:$0xff]
        %v666 = vld [vmem:[%s3 + $0x28] sm:$0xff]
        %v667 = vld [vmem:[%s3 + $0x30] sm:$0xff]
        %v668 = vld [vmem:[%s3 + $0x38] sm:$0xff]
        %v669 = vld [vmem:[%s3 + $0x40] sm:$0xff]
        %v670 = vld [vmem:[%s3 + $0x48] sm:$0xff]
        %v671 = vld [vmem:[%s3 + $0x50] sm:$0xff]
        %v672 = vld [vmem:[%s3 + $0x58] sm:$0xff]
        %v673 = vld [vmem:[%s3 + $0x60] sm:$0xff]
        %v674 = vld [vmem:[%s3 + $0x68] sm:$0xff]
        %v675 = vld [vmem:[%s3 + $0x70] sm:$0xff]
        %v676 = vld [vmem:[%s3 + $0x78] sm:$0xff]
        %677 = vmatprep.subr.mxu0 0.0
        %678 = vmatpush1.msra.mxu0 %v676
        %679 = vmatprep.subr.mxu0 0.0
        %680 = vmatpush1.msra.mxu0 %v675
        %681 = vmatprep.subr.mxu0 0.0
        %682 = vmatpush1.msra.mxu0 %v674
        %683 = vmatprep.subr.mxu0 0.0
        %684 = vmatpush1.msra.mxu0 %v673
        %685 = vmatprep.subr.mxu0 0.0
        %686 = vmatpush1.msra.mxu0 %v672
        %687 = vmatprep.subr.mxu0 0.0
        %688 = vmatpush1.msra.mxu0 %v671
        %689 = vmatprep.subr.mxu0 0.0
        %690 = vmatpush1.msra.mxu0 %v670
        %691 = vmatprep.subr.mxu0 0.0
        %692 = vmatpush1.msra.mxu0 %v669
        %693 = vmatprep.subr.mxu0 0.0
        %694 = vmatpush1.msra.mxu0 %v668
        %695 = vmatprep.subr.mxu0 0.0
        %696 = vmatpush1.msra.mxu0 %v667
        %697 = vmatprep.subr.mxu0 0.0
        %698 = vmatpush1.msra.mxu0 %v666
        %699 = vmatprep.subr.mxu0 0.0
        %700 = vmatpush1.msra.mxu0 %v665
        %701 = vmatprep.subr.mxu0 0.0
        %702 = vmatpush1.msra.mxu0 %v664
        %703 = vmatprep.subr.mxu0 0.0
        %704 = vmatpush1.msra.mxu0 %v663
        %705 = vmatprep.subr.mxu0 0.0
        %706 = vmatpush1.msra.mxu0 %v662
        %707 = vmatprep.subr.mxu0 0.0
        %708 = vmatpush1.msra.mxu0 %v661
        %709 = vmatprep.subr.mxu0 0.0
        %710 = vmatpush2.msra.mxu0 0.0
        %711 = vmatprep.subr.mxu0 0.0
        %712 = vmatpush2.msra.mxu0 0.0
        %713 = vmatprep.subr.mxu0 0.0
        %714 = vmatpush2.msra.mxu0 0.0
        %715 = vmatprep.subr.mxu0 0.0
        %716 = vmatpush2.msra.mxu0 0.0
        %717 = vmatprep.subr.mxu0 0.0
        %718 = vmatpush2.msra.mxu0 0.0
        %719 = vmatprep.subr.mxu0 0.0
        %720 = vmatpush2.msra.mxu0 0.0
        %721 = vmatprep.subr.mxu0 0.0
        %722 = vmatpush2.msra.mxu0 0.0
        %723 = vmatprep.subr.mxu0 0.0
        %724 = vmatpush2.msra.mxu0 0.0
        %725 = vmatprep.subr.mxu0 0.0
        %726 = vmatpush2.msra.mxu0 0.0
        %727 = vmatprep.subr.mxu0 0.0
        %728 = vmatpush2.msra.mxu0 0.0
        %729 = vmatprep.subr.mxu0 0.0
        %730 = vmatpush2.msra.mxu0 0.0
        %731 = vmatprep.subr.mxu0 0.0
        %732 = vmatpush2.msra.mxu0 0.0
        %733 = vmatprep.subr.mxu0 0.0
        %734 = vmatpush2.msra.mxu0 0.0
        %735 = vmatprep.subr.mxu0 0.0
        %736 = vmatpush2.msra.mxu0 0.0
        %737 = vmatprep.subr.mxu0 0.0
        %738 = vmatpush2.msra.mxu0 0.0
        %739 = vmatprep.subr.mxu0 0.0
        %740 = vmatpush2.msra.mxu0 0.0
        %741 = vmatprep.mubr.f32.mxu0 0.0
        %742 = vmatmul.mubr.f32.gmra.mxu0 %v477
        %v743 = vpop.f32.mrf.mxu0
        %v744 = vadd.f32 0.0, %v743
        %v745 = vpop.f32.mrf.mxu0
        %746 = vmatprep.mubr.f32.mxu0 0.0
        %747 = vmatmul.mubr.f32.gmra.mxu0 %v478
        %v748 = vpop.f32.mrf.mxu0
        %v749 = vadd.f32 0.0, %v748
        %v750 = vpop.f32.mrf.mxu0
        %751 = vdwg.mxu0
        %vm752 = vcmask 130048
        %v754 = vsel %vm752, %v562, 0
        %v757 = vsel %vm752, %v567, 0
        %v760 = vsel %vm752, %v653, 0
        %v763 = vsel %vm752, %v658, 0
        %765 = vmatprep.subr.mxu0 0.0
        %766 = vmatpush1.xpose.msra.mxu0 0.0
        %767 = vmatprep.subr.mxu0 0.0
        %768 = vmatpush1.xpose.msra.mxu0 0.0
        %769 = vmatprep.subr.mxu0 0.0
        %770 = vmatpush1.xpose.msra.mxu0 0.0
        %771 = vmatprep.subr.mxu0 0.0
        %772 = vmatpush1.xpose.msra.mxu0 0.0
        %773 = vmatprep.subr.mxu0 0.0
        %774 = vmatpush1.xpose.msra.mxu0 0.0
        %775 = vmatprep.subr.mxu0 0.0
        %776 = vmatpush1.xpose.msra.mxu0 0.0
        %777 = vmatprep.subr.mxu0 0.0
        %778 = vmatpush1.xpose.msra.mxu0 0.0
        %779 = vmatprep.subr.mxu0 0.0
        %780 = vmatpush1.xpose.msra.mxu0 0.0
        %781 = vmatprep.subr.mxu0 0.0
        %782 = vmatpush1.xpose.msra.mxu0 0.0
        %783 = vmatprep.subr.mxu0 0.0
        %784 = vmatpush1.xpose.msra.mxu0 0.0
        %785 = vmatprep.subr.mxu0 0.0
        %786 = vmatpush1.xpose.msra.mxu0 0.0
        %787 = vmatprep.subr.mxu0 0.0
        %788 = vmatpush1.xpose.msra.mxu0 0.0
        %789 = vmatprep.subr.mxu0 0.0
        %790 = vmatpush1.xpose.msra.mxu0 0.0
        %791 = vmatprep.subr.mxu0 0.0
        %792 = vmatpush1.xpose.msra.mxu0 0.0
        %793 = vmatprep.subr.mxu0 0.0
        %794 = vmatpush1.xpose.msra.mxu0 %v763
        %795 = vmatprep.subr.mxu0 0.0
        %796 = vmatpush1.xpose.msra.mxu0 %v760
        %797 = vmatprep.subr.mxu0 0.0
        %798 = vmatpush2.xpose.msra.mxu0 0.0
        %799 = vmatprep.subr.mxu0 0.0
        %800 = vmatpush2.xpose.msra.mxu0 0.0
        %801 = vmatprep.subr.mxu0 0.0
        %802 = vmatpush2.xpose.msra.mxu0 0.0
        %803 = vmatprep.subr.mxu0 0.0
        %804 = vmatpush2.xpose.msra.mxu0 0.0
        %805 = vmatprep.subr.mxu0 0.0
        %806 = vmatpush2.xpose.msra.mxu0 0.0
        %807 = vmatprep.subr.mxu0 0.0
        %808 = vmatpush2.xpose.msra.mxu0 0.0
        %809 = vmatprep.subr.mxu0 0.0
        %810 = vmatpush2.xpose.msra.mxu0 0.0
        %811 = vmatprep.subr.mxu0 0.0
        %812 = vmatpush2.xpose.msra.mxu0 0.0
        %813 = vmatprep.subr.mxu0 0.0
        %814 = vmatpush2.xpose.msra.mxu0 0.0
        %815 = vmatprep.subr.mxu0 0.0
        %816 = vmatpush2.xpose.msra.mxu0 0.0
        %817 = vmatprep.subr.mxu0 0.0
        %818 = vmatpush2.xpose.msra.mxu0 0.0
        %819 = vmatprep.subr.mxu0 0.0
        %820 = vmatpush2.xpose.msra.mxu0 0.0
        %821 = vmatprep.subr.mxu0 0.0
        %822 = vmatpush2.xpose.msra.mxu0 0.0
        %823 = vmatprep.subr.mxu0 0.0
        %824 = vmatpush2.xpose.msra.mxu0 0.0
        %825 = vmatprep.subr.mxu0 0.0
        %826 = vmatpush2.xpose.msra.mxu0 0.0
        %827 = vmatprep.subr.mxu0 0.0
        %828 = vmatpush2.xpose.msra.mxu0 0.0
        %829 = vmatprep.mubr.f32.mxu0 0.0
        %830 = vmatmul.mubr.f32.gmra.mxu0 %v754
        %v831 = vpop.f32.mrf.mxu0
        %v832 = vadd.f32 0.0, %v831
        %v833 = vpop.f32.mrf.mxu0
        %834 = vmatprep.mubr.f32.mxu0 0.0
        %835 = vmatmul.mubr.f32.gmra.mxu0 %v757
        %v836 = vpop.f32.mrf.mxu0
        %v837 = vadd.f32 0.0, %v836
        %v838 = vpop.f32.mrf.mxu0
        %839 = vdwg.mxu0
        %v840 = vmul.f32 %v832, 0.25
        %v841 = vmul.f32 %v837, 0.25
        %v842 = vsel %vm752, %v840, -inf
        %843 = vmax.xlane.f32.xlu0 %v842
        %v844 = vpop.xlane.xlu0 %843
        %v845 = vsel %vm752, %v841, -inf
        %846 = vmax.xlane.f32.xlu0 %v845
        %v847 = vpop.xlane.xlu0 %846
        %v848 = vsub.f32 %v840, %v844
        %v849 = vsub.f32 %v841, %v847
        %v850 = vmul.f32 %v848, 1.442695
        %v851 = vpow.pop %v850
        %v852 = vmul.f32 %v849, 1.442695
        %v853 = vpow.pop %v852
        %v854 = vsel %vm752, %v851, 0.0
        %855 = vadd.xlane.f32.xlu0 %v854
        %v856 = vpop.xlane.xlu0 %855
        %v857 = vsel %vm752, %v853, 0.0
        %858 = vadd.xlane.f32.xlu0 %v857
        %v859 = vpop.xlane.xlu0 %858
        %v860 = vrcp.pop %v856
        %v861 = vmul.f32 %v851, %v860
        %v862 = vrcp.pop %v859
        %v863 = vmul.f32 %v853, %v862
        %v865 = vsel %vm752, %v861, 0
        %v868 = vsel %vm752, %v863, 0
        %870 = vmatprep.subr.mxu0 0.0
        %871 = vmatpush1.msra.mxu0 0.0
        %872 = vmatprep.subr.mxu0 0.0
        %873 = vmatpush1.msra.mxu0 0.0
        %874 = vmatprep.subr.mxu0 0.0
        %875 = vmatpush1.msra.mxu0 0.0
        %876 = vmatprep.subr.mxu0 0.0
        %877 = vmatpush1.msra.mxu0 0.0
        %878 = vmatprep.subr.mxu0 0.0
        %879 = vmatpush1.msra.mxu0 0.0
        %880 = vmatprep.subr.mxu0 0.0
        %881 = vmatpush1.msra.mxu0 0.0
        %882 = vmatprep.subr.mxu0 0.0
        %883 = vmatpush1.msra.mxu0 0.0
        %884 = vmatprep.subr.mxu0 0.0
        %885 = vmatpush1.msra.mxu0 0.0
        %886 = vmatprep.subr.mxu0 0.0
        %887 = vmatpush1.msra.mxu0 0.0
        %888 = vmatprep.subr.mxu0 0.0
        %889 = vmatpush1.msra.mxu0 0.0
        %890 = vmatprep.subr.mxu0 0.0
        %891 = vmatpush1.msra.mxu0 0.0
        %892 = vmatprep.subr.mxu0 0.0
        %893 = vmatpush1.msra.mxu0 0.0
        %894 = vmatprep.subr.mxu0 0.0
        %895 = vmatpush1.msra.mxu0 0.0
        %896 = vmatprep.subr.mxu0 0.0
        %897 = vmatpush1.msra.mxu0 0.0
        %898 = vmatprep.subr.mxu0 0.0
        %899 = vmatpush1.msra.mxu0 %v749
        %900 = vmatprep.subr.mxu0 0.0
        %901 = vmatpush1.msra.mxu0 %v744
        %902 = vmatprep.subr.mxu0 0.0
        %903 = vmatpush2.msra.mxu0 0.0
        %904 = vmatprep.subr.mxu0 0.0
        %905 = vmatpush2.msra.mxu0 0.0
        %906 = vmatprep.subr.mxu0 0.0
        %907 = vmatpush2.msra.mxu0 0.0
        %908 = vmatprep.subr.mxu0 0.0
        %909 = vmatpush2.msra.mxu0 0.0
        %910 = vmatprep.subr.mxu0 0.0
        %911 = vmatpush2.msra.mxu0 0.0
        %912 = vmatprep.subr.mxu0 0.0
        %913 = vmatpush2.msra.mxu0 0.0
        %914 = vmatprep.subr.mxu0 0.0
        %915 = vmatpush2.msra.mxu0 0.0
        %916 = vmatprep.subr.mxu0 0.0
        %917 = vmatpush2.msra.mxu0 0.0
        %918 = vmatprep.subr.mxu0 0.0
        %919 = vmatpush2.msra.mxu0 0.0
        %920 = vmatprep.subr.mxu0 0.0
        %921 = vmatpush2.msra.mxu0 0.0
        %922 = vmatprep.subr.mxu0 0.0
        %923 = vmatpush2.msra.mxu0 0.0
        %924 = vmatprep.subr.mxu0 0.0
        %925 = vmatpush2.msra.mxu0 0.0
        %926 = vmatprep.subr.mxu0 0.0
        %927 = vmatpush2.msra.mxu0 0.0
        %928 = vmatprep.subr.mxu0 0.0
        %929 = vmatpush2.msra.mxu0 0.0
        %930 = vmatprep.subr.mxu0 0.0
        %931 = vmatpush2.msra.mxu0 0.0
        %932 = vmatprep.subr.mxu0 0.0
        %933 = vmatpush2.msra.mxu0 0.0
        %934 = vmatprep.mubr.f32.mxu0 0.0
        %935 = vmatmul.mubr.f32.gmra.mxu0 %v865
        %v936 = vpop.f32.mrf.mxu0
        %v937 = vadd.f32 0.0, %v936
        %v938 = vpop.f32.mrf.mxu0
        %939 = vmatprep.mubr.f32.mxu0 0.0
        %940 = vmatmul.mubr.f32.gmra.mxu0 %v868
        %v941 = vpop.f32.mrf.mxu0
        %v942 = vadd.f32 0.0, %v941
        %v943 = vpop.f32.mrf.mxu0
        %944 = vdwg.mxu0
        %v945 = vld [vmem:[%s4] sm:$0xff]
        %v946 = vld [vmem:[%s4 + $0x8] sm:$0xff]
        %v948 = vsel %vm752, %v937, 0
        %v951 = vsel %vm752, %v942, 0
        %953 = vmatprep.subr.mxu0 0.0
        %954 = vmatpush1.msra.mxu0 0.0
        %955 = vmatprep.subr.mxu0 0.0
        %956 = vmatpush1.msra.mxu0 0.0
        %957 = vmatprep.subr.mxu0 0.0
        %958 = vmatpush1.msra.mxu0 0.0
        %959 = vmatprep.subr.mxu0 0.0
        %960 = vmatpush1.msra.mxu0 0.0
        %961 = vmatprep.subr.mxu0 0.0
        %962 = vmatpush1.msra.mxu0 0.0
        %963 = vmatprep.subr.mxu0 0.0
        %964 = vmatpush1.msra.mxu0 0.0
        %965 = vmatprep.subr.mxu0 0.0
        %966 = vmatpush1.msra.mxu0 0.0
        %967 = vmatprep.subr.mxu0 0.0
        %968 = vmatpush1.msra.mxu0 0.0
        %969 = vmatprep.subr.mxu0 0.0
        %970 = vmatpush1.msra.mxu0 0.0
        %971 = vmatprep.subr.mxu0 0.0
        %972 = vmatpush1.msra.mxu0 0.0
        %973 = vmatprep.subr.mxu0 0.0
        %974 = vmatpush1.msra.mxu0 0.0
        %975 = vmatprep.subr.mxu0 0.0
        %976 = vmatpush1.msra.mxu0 0.0
        %977 = vmatprep.subr.mxu0 0.0
        %978 = vmatpush1.msra.mxu0 0.0
        %979 = vmatprep.subr.mxu0 0.0
        %980 = vmatpush1.msra.mxu0 0.0
        %981 = vmatprep.subr.mxu0 0.0
        %982 = vmatpush1.msra.mxu0 %v946
        %983 = vmatprep.subr.mxu0 0.0
        %984 = vmatpush1.msra.mxu0 %v945
        %985 = vmatprep.subr.mxu0 0.0
        %986 = vmatpush2.msra.mxu0 0.0
        %987 = vmatprep.subr.mxu0 0.0
        %988 = vmatpush2.msra.mxu0 0.0
        %989 = vmatprep.subr.mxu0 0.0
        %990 = vmatpush2.msra.mxu0 0.0
        %991 = vmatprep.subr.mxu0 0.0
        %992 = vmatpush2.msra.mxu0 0.0
        %993 = vmatprep.subr.mxu0 0.0
        %994 = vmatpush2.msra.mxu0 0.0
        %995 = vmatprep.subr.mxu0 0.0
        %996 = vmatpush2.msra.mxu0 0.0
        %997 = vmatprep.subr.mxu0 0.0
        %998 = vmatpush2.msra.mxu0 0.0
        %999 = vmatprep.subr.mxu0 0.0
        %1000 = vmatpush2.msra.mxu0 0.0
        %1001 = vmatprep.subr.mxu0 0.0
        %1002 = vmatpush2.msra.mxu0 0.0
        %1003 = vmatprep.subr.mxu0 0.0
        %1004 = vmatpush2.msra.mxu0 0.0
        %1005 = vmatprep.subr.mxu0 0.0
        %1006 = vmatpush2.msra.mxu0 0.0
        %1007 = vmatprep.subr.mxu0 0.0
        %1008 = vmatpush2.msra.mxu0 0.0
        %1009 = vmatprep.subr.mxu0 0.0
        %1010 = vmatpush2.msra.mxu0 0.0
        %1011 = vmatprep.subr.mxu0 0.0
        %1012 = vmatpush2.msra.mxu0 0.0
        %1013 = vmatprep.subr.mxu0 0.0
        %1014 = vmatpush2.msra.mxu0 0.0
        %1015 = vmatprep.subr.mxu0 0.0
        %1016 = vmatpush2.msra.mxu0 0.0
        %1017 = vmatprep.mubr.f32.mxu0 0.0
        %1018 = vmatmul.mubr.f32.gmra.mxu0 %v948
        %v1019 = vpop.f32.mrf.mxu0
        %v1020 = vadd.f32 0.0, %v1019
        %v1021 = vpop.f32.mrf.mxu0
        %1022 = vmatprep.mubr.f32.mxu0 0.0
        %1023 = vmatmul.mubr.f32.gmra.mxu0 %v951
        %v1024 = vpop.f32.mrf.mxu0
        %v1025 = vadd.f32 0.0, %v1024
        %v1026 = vpop.f32.mrf.mxu0
        %1027 = vdwg.mxu0
        %v1028 = vadd.f32 %v477, %v1020
        %v1029 = vadd.f32 %v478, %v1025
        %v1030 = vld [vmem:[%s5] sm:$0x1]
        %v1031 = vld [vmem:[%s6] sm:$0x1]
        %1032 = vadd.xlane.f32.xlu0 %v1028
        %v1033 = vpop.xlane.xlu0 %1032
        %1034 = vadd.xlane.f32.xlu0 %v1029
        %v1035 = vpop.xlane.xlu0 %1034
        %v1036 = vrcp.pop 128.0
        %v1037 = vmul.f32 %v1033, %v1036
        %v1038 = vmul.f32 %v1035, %v1036
        %v1039 = vsub.f32 %v1028, %v1037
        %v1040 = vsub.f32 %v1029, %v1038
        %v1041 = vmul.f32 %v1039, %v1039
        %v1042 = vmul.f32 %v1040, %v1040
        %1043 = vadd.xlane.f32.xlu0 %v1041
        %v1044 = vpop.xlane.xlu0 %1043
        %1045 = vadd.xlane.f32.xlu0 %v1042
        %v1046 = vpop.xlane.xlu0 %1045
        %v1047 = vmul.f32 %v1044, %v1036
        %v1048 = vmul.f32 %v1046, %v1036
        %v1049 = vadd.f32 %v1047, 1e-05
        %v1050 = vadd.f32 %v1048, 1e-05
        %v1051 = vrsqrt.pop %v1049
        %v1052 = vrsqrt.pop %v1050
        %v1053 = vmul.f32 %v1039, %v1051
        %v1054 = vmul.f32 %v1040, %v1052
        %v1056 = vlaneseq
        %v1057 = vshrl.u32 %v1056, 7
        %v1058 = vsub.s32 0, %v1057
        %v1059 = vrot.slane %v1030, %v1058
        %v1061 = vmul.f32 %v1053, %v1059
        %v1062 = vmul.f32 %v1054, %v1059
        %v1064 = vlaneseq
        %v1065 = vshrl.u32 %v1064, 7
        %v1066 = vsub.s32 0, %v1065
        %v1067 = vrot.slane %v1031, %v1066
        %v1069 = vadd.f32 %v1061, %v1067
        %v1070 = vadd.f32 %v1062, %v1067
        %v1071 = vld [vmem:[%s7] sm:$0xff]
        %v1072 = vld [vmem:[%s7 + $0x8] sm:$0xff]
        %v1073 = vld [vmem:[%s7 + $0x10] sm:$0xff]
        %v1074 = vld [vmem:[%s7 + $0x18] sm:$0xff]
        %v1075 = vld [vmem:[%s7 + $0x20] sm:$0xff]
        %v1076 = vld [vmem:[%s7 + $0x28] sm:$0xff]
        %v1077 = vld [vmem:[%s7 + $0x30] sm:$0xff]
        %v1078 = vld [vmem:[%s7 + $0x38] sm:$0xff]
        %v1079 = vld [vmem:[%s7 + $0x40] sm:$0xff]
        %v1080 = vld [vmem:[%s7 + $0x48] sm:$0xff]
        %v1081 = vld [vmem:[%s7 + $0x50] sm:$0xff]
        %v1082 = vld [vmem:[%s7 + $0x58] sm:$0xff]
        %v1083 = vld [vmem:[%s7 + $0x60] sm:$0xff]
        %v1084 = vld [vmem:[%s7 + $0x68] sm:$0xff]
        %v1085 = vld [vmem:[%s7 + $0x70] sm:$0xff]
        %v1086 = vld [vmem:[%s7 + $0x78] sm:$0xff]
        %v1087 = vld [vmem:[%s7 + $0x80] sm:$0xff]
        %v1088 = vld [vmem:[%s7 + $0x88] sm:$0xff]
        %v1089 = vld [vmem:[%s7 + $0x90] sm:$0xff]
        %v1090 = vld [vmem:[%s7 + $0x98] sm:$0xff]
        %v1091 = vld [vmem:[%s7 + $0xa0] sm:$0xff]
        %v1092 = vld [vmem:[%s7 + $0xa8] sm:$0xff]
        %v1093 = vld [vmem:[%s7 + $0xb0] sm:$0xff]
        %v1094 = vld [vmem:[%s7 + $0xb8] sm:$0xff]
        %v1095 = vld [vmem:[%s7 + $0xc0] sm:$0xff]
        %v1096 = vld [vmem:[%s7 + $0xc8] sm:$0xff]
        %v1097 = vld [vmem:[%s7 + $0xd0] sm:$0xff]
        %v1098 = vld [vmem:[%s7 + $0xd8] sm:$0xff]
        %v1099 = vld [vmem:[%s7 + $0xe0] sm:$0xff]
        %v1100 = vld [vmem:[%s7 + $0xe8] sm:$0xff]
        %v1101 = vld [vmem:[%s7 + $0xf0] sm:$0xff]
        %v1102 = vld [vmem:[%s7 + $0xf8] sm:$0xff]
        %v1103 = vld [vmem:[%s8] sm:$0x3]
        %v1105 = vlaneseq
        %v1106 = vshrl.u32 %v1105, 7
        %v1107 = vsub.s32 0, %v1106
        %v1108 = vrot.slane %v1103, %v1107
        %v1109 = vlaneseq
        %v1110 = vshrl.u32 %v1109, 7
        %v1111 = vsub.s32 1, %v1110
        %v1112 = vrot.slane %v1103, %v1111
        %1115 = vmatprep.subr.mxu0 %v1102
        %1116 = vmatpush1.msra.mxu0 %v1101
        %1117 = vmatprep.subr.mxu0 %v1100
        %1118 = vmatpush1.msra.mxu0 %v1099
        %1119 = vmatprep.subr.mxu0 %v1098
        %1120 = vmatpush1.msra.mxu0 %v1097
        %1121 = vmatprep.subr.mxu0 %v1096
        %1122 = vmatpush1.msra.mxu0 %v1095
        %1123 = vmatprep.subr.mxu0 %v1094
        %1124 = vmatpush1.msra.mxu0 %v1093
        %1125 = vmatprep.subr.mxu0 %v1092
        %1126 = vmatpush1.msra.mxu0 %v1091
        %1127 = vmatprep.subr.mxu0 %v1090
        %1128 = vmatpush1.msra.mxu0 %v1089
        %1129 = vmatprep.subr.mxu0 %v1088
        %1130 = vmatpush1.msra.mxu0 %v1087
        %1131 = vmatprep.subr.mxu0 %v1086
        %1132 = vmatpush1.msra.mxu0 %v1085
        %1133 = vmatprep.subr.mxu0 %v1084
        %1134 = vmatpush1.msra.mxu0 %v1083
        %1135 = vmatprep.subr.mxu0 %v1082
        %1136 = vmatpush1.msra.mxu0 %v1081
        %1137 = vmatprep.subr.mxu0 %v1080
        %1138 = vmatpush1.msra.mxu0 %v1079
        %1139 = vmatprep.subr.mxu0 %v1078
        %1140 = vmatpush1.msra.mxu0 %v1077
        %1141 = vmatprep.subr.mxu0 %v1076
        %1142 = vmatpush1.msra.mxu0 %v1075
        %1143 = vmatprep.subr.mxu0 %v1074
        %1144 = vmatpush1.msra.mxu0 %v1073
        %1145 = vmatprep.subr.mxu0 %v1072
        %1146 = vmatpush1.msra.mxu0 %v1071
        %1147 = vmatprep.subr.mxu0 0.0
        %1148 = vmatpush2.msra.mxu0 0.0
        %1149 = vmatprep.subr.mxu0 0.0
        %1150 = vmatpush2.msra.mxu0 0.0
        %1151 = vmatprep.subr.mxu0 0.0
        %1152 = vmatpush2.msra.mxu0 0.0
        %1153 = vmatprep.subr.mxu0 0.0
        %1154 = vmatpush2.msra.mxu0 0.0
        %1155 = vmatprep.subr.mxu0 0.0
        %1156 = vmatpush2.msra.mxu0 0.0
        %1157 = vmatprep.subr.mxu0 0.0
        %1158 = vmatpush2.msra.mxu0 0.0
        %1159 = vmatprep.subr.mxu0 0.0
        %1160 = vmatpush2.msra.mxu0 0.0
        %1161 = vmatprep.subr.mxu0 0.0
        %1162 = vmatpush2.msra.mxu0 0.0
        %1163 = vmatprep.subr.mxu0 0.0
        %1164 = vmatpush2.msra.mxu0 0.0
        %1165 = vmatprep.subr.mxu0 0.0
        %1166 = vmatpush2.msra.mxu0 0.0
        %1167 = vmatprep.subr.mxu0 0.0
        %1168 = vmatpush2.msra.mxu0 0.0
        %1169 = vmatprep.subr.mxu0 0.0
        %1170 = vmatpush2.msra.mxu0 0.0
        %1171 = vmatprep.subr.mxu0 0.0
        %1172 = vmatpush2.msra.mxu0 0.0
        %1173 = vmatprep.subr.mxu0 0.0
        %1174 = vmatpush2.msra.mxu0 0.0
        %1175 = vmatprep.subr.mxu0 0.0
        %1176 = vmatpush2.msra.mxu0 0.0
        %1177 = vmatprep.subr.mxu0 0.0
        %1178 = vmatpush2.msra.mxu0 0.0
        %1179 = vmatprep.mubr.f32.mxu0 0.0
        %1180 = vmatmul.mubr.f32.gmra.mxu0 %v1069
        %v1181 = vpop.f32.mrf.mxu0
        %v1182 = vadd.f32 %v1108, %v1181
        %v1183 = vpop.f32.mrf.mxu0
        %v1184 = vadd.f32 %v1112, %v1183
        %1185 = vmatprep.mubr.f32.mxu0 0.0
        %1186 = vmatmul.mubr.f32.gmra.mxu0 %v1070
        %v1187 = vpop.f32.mrf.mxu0
        %v1188 = vadd.f32 %v1108, %v1187
        %v1189 = vpop.f32.mrf.mxu0
        %v1190 = vadd.f32 %v1112, %v1189
        %1191 = vdwg.mxu0
        %v1192 = vmax.f32 %v1182, 0.0
        %v1193 = vmax.f32 %v1184, 0.0
        %v1194 = vmax.f32 %v1188, 0.0
        %v1195 = vmax.f32 %v1190, 0.0
        %v1196 = vld [vmem:[%s9] sm:$0xff]
        %v1197 = vld [vmem:[%s9 + $0x8] sm:$0xff]
        %v1198 = vld [vmem:[%s9 + $0x10] sm:$0xff]
        %v1199 = vld [vmem:[%s9 + $0x18] sm:$0xff]
        %v1200 = vld [vmem:[%s9 + $0x20] sm:$0xff]
        %v1201 = vld [vmem:[%s9 + $0x28] sm:$0xff]
        %v1202 = vld [vmem:[%s9 + $0x30] sm:$0xff]
        %v1203 = vld [vmem:[%s9 + $0x38] sm:$0xff]
        %v1204 = vld [vmem:[%s9 + $0x40] sm:$0xff]
        %v1205 = vld [vmem:[%s9 + $0x48] sm:$0xff]
        %v1206 = vld [vmem:[%s9 + $0x50] sm:$0xff]
        %v1207 = vld [vmem:[%s9 + $0x58] sm:$0xff]
        %v1208 = vld [vmem:[%s9 + $0x60] sm:$0xff]
        %v1209 = vld [vmem:[%s9 + $0x68] sm:$0xff]
        %v1210 = vld [vmem:[%s9 + $0x70] sm:$0xff]
        %v1211 = vld [vmem:[%s9 + $0x78] sm:$0xff]
        %v1212 = vld [vmem:[%s9 + $0x80] sm:$0xff]
        %v1213 = vld [vmem:[%s9 + $0x88] sm:$0xff]
        %v1214 = vld [vmem:[%s9 + $0x90] sm:$0xff]
        %v1215 = vld [vmem:[%s9 + $0x98] sm:$0xff]
        %v1216 = vld [vmem:[%s9 + $0xa0] sm:$0xff]
        %v1217 = vld [vmem:[%s9 + $0xa8] sm:$0xff]
        %v1218 = vld [vmem:[%s9 + $0xb0] sm:$0xff]
        %v1219 = vld [vmem:[%s9 + $0xb8] sm:$0xff]
        %v1220 = vld [vmem:[%s9 + $0xc0] sm:$0xff]
        %v1221 = vld [vmem:[%s9 + $0xc8] sm:$0xff]
        %v1222 = vld [vmem:[%s9 + $0xd0] sm:$0xff]
        %v1223 = vld [vmem:[%s9 + $0xd8] sm:$0xff]
        %v1224 = vld [vmem:[%s9 + $0xe0] sm:$0xff]
        %v1225 = vld [vmem:[%s9 + $0xe8] sm:$0xff]
        %v1226 = vld [vmem:[%s9 + $0xf0] sm:$0xff]
        %v1227 = vld [vmem:[%s9 + $0xf8] sm:$0xff]
        %v1228 = vld [vmem:[%s10] sm:$0x1]
        %v1230 = vlaneseq
        %v1231 = vshrl.u32 %v1230, 7
        %v1232 = vsub.s32 0, %v1231
        %v1233 = vrot.slane %v1228, %v1232
        %1235 = vmatprep.subr.mxu0 0.0
        %1236 = vmatpush1.msra.mxu0 %v1211
        %1237 = vmatprep.subr.mxu0 0.0
        %1238 = vmatpush1.msra.mxu0 %v1210
        %1239 = vmatprep.subr.mxu0 0.0
        %1240 = vmatpush1.msra.mxu0 %v1209
        %1241 = vmatprep.subr.mxu0 0.0
        %1242 = vmatpush1.msra.mxu0 %v1208
        %1243 = vmatprep.subr.mxu0 0.0
        %1244 = vmatpush1.msra.mxu0 %v1207
        %1245 = vmatprep.subr.mxu0 0.0
        %1246 = vmatpush1.msra.mxu0 %v1206
        %1247 = vmatprep.subr.mxu0 0.0
        %1248 = vmatpush1.msra.mxu0 %v1205
        %1249 = vmatprep.subr.mxu0 0.0
        %1250 = vmatpush1.msra.mxu0 %v1204
        %1251 = vmatprep.subr.mxu0 0.0
        %1252 = vmatpush1.msra.mxu0 %v1203
        %1253 = vmatprep.subr.mxu0 0.0
        %1254 = vmatpush1.msra.mxu0 %v1202
        %1255 = vmatprep.subr.mxu0 0.0
        %1256 = vmatpush1.msra.mxu0 %v1201
        %1257 = vmatprep.subr.mxu0 0.0
        %1258 = vmatpush1.msra.mxu0 %v1200
        %1259 = vmatprep.subr.mxu0 0.0
        %1260 = vmatpush1.msra.mxu0 %v1199
        %1261 = vmatprep.subr.mxu0 0.0
        %1262 = vmatpush1.msra.mxu0 %v1198
        %1263 = vmatprep.subr.mxu0 0.0
        %1264 = vmatpush1.msra.mxu0 %v1197
        %1265 = vmatprep.subr.mxu0 0.0
        %1266 = vmatpush1.msra.mxu0 %v1196
        %1267 = vmatprep.subr.mxu0 0.0
        %1268 = vmatpush2.msra.mxu0 %v1227
        %1269 = vmatprep.subr.mxu0 0.0
        %1270 = vmatpush2.msra.mxu0 %v1226
        %1271 = vmatprep.subr.mxu0 0.0
        %1272 = vmatpush2.msra.mxu0 %v1225
        %1273 = vmatprep.subr.mxu0 0.0
        %1274 = vmatpush2.msra.mxu0 %v1224
        %1275 = vmatprep.subr.mxu0 0.0
        %1276 = vmatpush2.msra.mxu0 %v1223
        %1277 = vmatprep.subr.mxu0 0.0
        %1278 = vmatpush2.msra.mxu0 %v1222
        %1279 = vmatprep.subr.mxu0 0.0
        %1280 = vmatpush2.msra.mxu0 %v1221
        %1281 = vmatprep.subr.mxu0 0.0
        %1282 = vmatpush2.msra.mxu0 %v1220
        %1283 = vmatprep.subr.mxu0 0.0
        %1284 = vmatpush2.msra.mxu0 %v1219
        %1285 = vmatprep.subr.mxu0 0.0
        %1286 = vmatpush2.msra.mxu0 %v1218
        %1287 = vmatprep.subr.mxu0 0.0
        %1288 = vmatpush2.msra.mxu0 %v1217
        %1289 = vmatprep.subr.mxu0 0.0
        %1290 = vmatpush2.msra.mxu0 %v1216
        %1291 = vmatprep.subr.mxu0 0.0
        %1292 = vmatpush2.msra.mxu0 %v1215
        %1293 = vmatprep.subr.mxu0 0.0
        %1294 = vmatpush2.msra.mxu0 %v1214
        %1295 = vmatprep.subr.mxu0 0.0
        %1296 = vmatpush2.msra.mxu0 %v1213
        %1297 = vmatprep.subr.mxu0 0.0
        %1298 = vmatpush2.msra.mxu0 %v1212
        %1299 = vmatprep.mubr.f32.mxu0 %v1193
        %1300 = vmatmul.mubr.f32.gmra.mxu0 %v1192
        %v1301 = vpop.f32.mrf.mxu0
        %v1302 = vadd.f32 %v1233, %v1301
        %v1303 = vpop.f32.mrf.mxu0
        %1304 = vmatprep.mubr.f32.mxu0 %v1195
        %1305 = vmatmul.mubr.f32.gmra.mxu0 %v1194
        %v1306 = vpop.f32.mrf.mxu0
        %v1307 = vadd.f32 %v1233, %v1306
        %v1308 = vpop.f32.mrf.mxu0
        %1309 = vdwg.mxu0
        %v1310 = vadd.f32 %v1069, %v1302
        %v1311 = vadd.f32 %v1070, %v1307
        %v1312 = vld [vmem:[%s11] sm:$0x1]
        %v1313 = vld [vmem:[%s12] sm:$0x1]
        %1314 = vadd.xlane.f32.xlu0 %v1310
        %v1315 = vpop.xlane.xlu0 %1314
        %1316 = vadd.xlane.f32.xlu0 %v1311
        %v1317 = vpop.xlane.xlu0 %1316
        %v1318 = vmul.f32 %v1315, %v1036
        %v1319 = vmul.f32 %v1317, %v1036
        %v1320 = vsub.f32 %v1310, %v1318
        %v1321 = vsub.f32 %v1311, %v1319
        %v1322 = vmul.f32 %v1320, %v1320
        %v1323 = vmul.f32 %v1321, %v1321
        %1324 = vadd.xlane.f32.xlu0 %v1322
        %v1325 = vpop.xlane.xlu0 %1324
        %1326 = vadd.xlane.f32.xlu0 %v1323
        %v1327 = vpop.xlane.xlu0 %1326
        %v1328 = vmul.f32 %v1325, %v1036
        %v1329 = vmul.f32 %v1327, %v1036
        %v1330 = vadd.f32 %v1328, 1e-05
        %v1331 = vadd.f32 %v1329, 1e-05
        %v1332 = vrsqrt.pop %v1330
        %v1333 = vrsqrt.pop %v1331
        %v1334 = vmul.f32 %v1320, %v1332
        %v1335 = vmul.f32 %v1321, %v1333
        %v1337 = vlaneseq
        %v1338 = vshrl.u32 %v1337, 7
        %v1339 = vsub.s32 0, %v1338
        %v1340 = vrot.slane %v1312, %v1339
        %v1342 = vmul.f32 %v1334, %v1340
        %v1343 = vmul.f32 %v1335, %v1340
        %v1345 = vlaneseq
        %v1346 = vshrl.u32 %v1345, 7
        %v1347 = vsub.s32 0, %v1346
        %v1348 = vrot.slane %v1313, %v1347
        %v1350 = vadd.f32 %v1342, %v1348
        %v1351 = vadd.f32 %v1343, %v1348
        %1352 = vst [vmem:[%s464] sm:$0xff] %v1350
        %1353 = vst [vmem:[%s464 + $0x8] sm:$0xff] %v1351
        %1354 = vst.msk [vmem:[%s471] sm:$0xff] %vm752, %v861
        %1355 = vst.msk [vmem:[%s471 + $0x8] sm:$0xff] %vm752, %v863
        %s1356 = sand.u32 %s318, 1
        %s1357 = scalar_lea.sflag [#allocation3], %s1356
        %s1358 = sand.u32 %s318, 1
        %s1359 = smul.addr %s1358, 16
        %s1360 = scalar_lea.vmem [#allocation2], %s1359
        %s1361 = sand.u32 %s344, 1
        %s1362 = scalar_lea.sflag [#allocation5], %s1361
        %s1363 = sand.u32 %s344, 1
        %s1364 = smul.addr %s1363, 16
        %s1365 = scalar_lea.vmem [#allocation4], %s1364
        // Predicated region
        $region73: #{encoder_forward.3} parent=71 // pred_check
          %p1366 = pneg %p328
        $region74: #{encoder_forward.3} parent=71 // pred_check_branch
          %1368 = sbr.rel (%p1366) target = $region76
        $region75: #{encoder_forward.3} parent=71 // pred_region
          %s1370 = ssub.s32 256, 256
          %1371 = vsyncadd %s1357, %s1370
          %s1372 = smul.addr %s32, 2
          %s1373 = smul.addr %s1372, 128
          %s1374 = scalar_lea.hbm %s13, %s1373
          %s1375 = sshll.u32 %s1360, 4
          %s1376 = int_to_ptr.vmem [resolvable:$true] %s1375
          %1381 = dma.vmem_to_hbm [thread:$0]  %s1376, 256, %s1374, %s1357, 128, 128, 8
        $region76: #{encoder_forward.3} parent=71 // pred_fallthru
          _
        // Predicated region
        $region77: #{encoder_forward.3} parent=71 // pred_check
          %p1382 = pneg %p354
        $region78: #{encoder_forward.3} parent=71 // pred_check_branch
          %1384 = sbr.rel (%p1382) target = $region80
        $region79: #{encoder_forward.3} parent=71 // pred_region
          %s1386 = ssub.s32 256, 256
          %1387 = vsyncadd %s1362, %s1386
          %s1388 = smul.addr %s32, 2
          %s1389 = smul.addr %s1388, 128
          %s1390 = scalar_lea.hbm %s14, %s1389
          %s1391 = sshll.u32 %s1365, 4
          %s1392 = int_to_ptr.vmem [resolvable:$true] %s1391
          %1397 = dma.vmem_to_hbm [thread:$0]  %s1392, 256, %s1390, %s1362, 128, 128, 8
        $region80: #{encoder_forward.3} parent=71 // pred_fallthru
          _
      $region72: #{encoder_forward.3} parent=5 // pred_fallthru
        _
      %p1398 = scmp.le.s32.totalorder 2, %s27
      // Predicated region
      $region81: #{encoder_forward.3} parent=5 // pred_check
        %p1399 = pneg %p1398
      $region82: #{encoder_forward.3} parent=5 // pred_check_branch
        %1401 = sbr.rel (%p1399) target = $region84
      $region83: #{encoder_forward.3} parent=5 // pred_region
        %s1402 = ssub.s32 %s27, 2
        // Predicated region
        $region85: #{encoder_forward.3} parent=83 // pred_check
          %p1403 = pneg %p334
        $region86: #{encoder_forward.3} parent=83 // pred_check_branch
          %1405 = sbr.rel (%p1403) target = $region88
        $region87: #{encoder_forward.3} parent=83 // pred_region
          %s1406 = sand.u32 %s319, 1
          %s1407 = scalar_lea.sflag [#allocation3], %s1406
          %s1408 = sand.u32 %s319, 1
          %s1409 = smul.addr %s1408, 16
          %s1410 = scalar_lea.vmem [#allocation2], %s1409
          %1411 = dma.done %s1407, 256
        $region88: #{encoder_forward.3} parent=83 // pred_fallthru
          _
        // Predicated region
        $region89: #{encoder_forward.3} parent=83 // pred_check
          %p1412 = pneg %p360
        $region90: #{encoder_forward.3} parent=83 // pred_check_branch
          %1414 = sbr.rel (%p1412) target = $region92
        $region91: #{encoder_forward.3} parent=83 // pred_region
          %s1415 = sand.u32 %s345, 1
          %s1416 = scalar_lea.sflag [#allocation5], %s1415
          %s1417 = sand.u32 %s345, 1
          %s1418 = smul.addr %s1417, 16
          %s1419 = scalar_lea.vmem [#allocation4], %s1418
          %1420 = dma.done %s1416, 256
        $region92: #{encoder_forward.3} parent=83 // pred_fallthru
          _
      $region84: #{encoder_forward.3} parent=5 // pred_fallthru
        _
    $region6: #{encoder_forward.3} parent=1 // loop_footer
      %s31 = sadd.s32 1, %s27
    $region7: #{encoder_forward.3} parent=1 // loop_footer_branch
      %26 = sbr.rel target = $region3
    $region8: #{encoder_forward.3} parent=1 // loop_exit
      _
    %1421 = vsyncpa [#allocation3], 1
    %s1422 = scalar_lea.sflag [#allocation3], 1
    %1423 = vsyncpa %s1422, 1
    %1424 = vsyncpa [#allocation5], 1
    %s1425 = scalar_lea.sflag [#allocation5], 1
    %1426 = vsyncpa %s1425, 1

</llo_original>
